<compile_context>
chip_gen: v7x
topology: tpu7x:2x2x1
jax: 0.10.0
libtpu: 0.0.40
codegen_flags: <defaults>
</compile_context>

<pallas_src>
import jax
import jax.numpy as jnp
import numpy as np
from jax import lax
from jax.experimental import pallas as pl
from jax.experimental.pallas import tpu as pltpu

_LN_EPS = 1e-5          # torch.nn.LayerNorm default
_NEG_SLOPE = 0.01       # F.leaky_relu default
_DIMS = (512, 384, 256, 128)


def _round_up(x, m):
    return ((x + m - 1) // m) * m


# -----------------------------------------------------------------------------
# Fused kernel: 4 residual stages of both Q branches + both heads.
# -----------------------------------------------------------------------------
def _stage(x, w, b, g, t):
    """leaky_relu(LayerNorm(x @ W + b)) with pre-folded W = Wl + Wres, b = bl + bres."""
    h = jnp.dot(x, w, preferred_element_type=jnp.float32) + b
    # One-pass statistics: the two reductions are independent -> better XLU overlap.
    mean = jnp.mean(h, axis=-1, keepdims=True)
    msq = jnp.mean(h * h, axis=-1, keepdims=True)
    var = msq - mean * mean                                   # biased, like torch
    y = (h - mean) * lax.rsqrt(var + _LN_EPS) * g + t
    return jnp.where(y > 0, y, _NEG_SLOPE * y)


def _critic_kernel(sa_ref, *refs):
    o_ref = refs[-1]
    wh_ref, bh_ref = refs[-3], refs[-2]
    stage_refs = refs[:-3]                # 4 stages x (w, b, gamma, beta), stacked [2,...]

    x1 = sa_ref[...]
    x2 = x1
    for s in range(4):
        w_ref, b_ref, g_ref, t_ref = stage_refs[4 * s: 4 * s + 4]
        # Independent branches back-to-back -> scheduler interleaves MXU/XLU/VPU.
        x1 = _stage(x1, w_ref[0], b_ref[0], g_ref[0], t_ref[0])
        x2 = _stage(x2, w_ref[1], b_ref[1], g_ref[1], t_ref[1])

    # Heads: wh_ref[0] = [w_head_q1 | 0], wh_ref[1] = [0 | w_head_q2]  (each [128, 2]).
    o_ref[...] = (jnp.dot(x1, wh_ref[0], preferred_element_type=jnp.float32)
                  + jnp.dot(x2, wh_ref[1], preferred_element_type=jnp.float32)
                  + bh_ref[...])


# -----------------------------------------------------------------------------
# Parameter initialization (deterministic, PyTorch-like Linear init) + prep
# -----------------------------------------------------------------------------
def _init_linear(key, din, dout):
    k1, k2 = jax.random.split(key)
    bound = 1.0 / np.sqrt(din)
    w = jax.random.uniform(k1, (din, dout), minval=-bound, maxval=bound,
                           dtype=jnp.float32)
    b = jax.random.uniform(k2, (1, dout), minval=-bound, maxval=bound,
                           dtype=jnp.float32)
    return w, b


def init_critic_params(key, state_dim, action_dim):
    """Raw (unfolded) parameters mirroring the PyTorch module."""
    sa_dim = state_dim + action_dim
    dims = [sa_dim, *_DIMS]

    def make_branch(key):
        stages = []
        for i in range(4):
            key, k_l, k_r = jax.random.split(key, 3)
            wl, bl = _init_linear(k_l, dims[i], dims[i + 1])        # main linear
            wr, br = _init_linear(k_r, dims[i], dims[i + 1])        # residual linear
            gamma = jnp.ones((1, dims[i + 1]), jnp.float32)         # LayerNorm weight
            beta = jnp.zeros((1, dims[i + 1]), jnp.float32)         # LayerNorm bias
            stages.append((wl, bl, wr, br, gamma, beta))
        key, k_h = jax.random.split(key)
        w_head, b_head = _init_linear(k_h, dims[-1], 1)
        return {"stages": stages, "head": (w_head, b_head)}

    k1, k2 = jax.random.split(key)
    return {"q1": make_branch(k1), "q2": make_branch(k2)}


def prepare_critic_params(raw):
    """Fold Wl+Wres / bl+bres, stack q1/q2, zero-pad first-stage input to 128 lanes."""
    sa_dim = raw["q1"]["stages"][0][0].shape[0]
    sa_pad = _round_up(sa_dim, 128)

    stages = []
    for i in range(4):
        ws, bs, gs, ts = [], [], [], []
        for name in ("q1", "q2"):
            wl, bl, wr, brb, g, t = raw[name]["stages"][i]
            w = wl + wr                      # exact fold: x@Wl + x@Wres = x@(Wl+Wres)
            b = bl + brb
            if i == 0:
                w = jnp.pad(w, ((0, sa_pad - w.shape[0]), (0, 0)))  # zero rows: exact
            ws.append(w); bs.append(b); gs.append(g); ts.append(t)
        stages.append((jnp.stack(ws), jnp.stack(bs), jnp.stack(gs), jnp.stack(ts)))

    wh1, bh1 = raw["q1"]["head"]
    wh2, bh2 = raw["q2"]["head"]
    d_last = wh1.shape[0]
    wh = jnp.zeros((2, d_last, 2), jnp.float32)
    wh = wh.at[0, :, 0].set(wh1[:, 0]).at[1, :, 1].set(wh2[:, 0])
    bh = jnp.concatenate([bh1, bh2], axis=1)          # [1, 2]
    return {"stages": stages, "head": (wh, bh)}


# -----------------------------------------------------------------------------
# Forward pass (single fused pallas_call)
# -----------------------------------------------------------------------------
@jax.jit
def critic_forward(prep, state, action):
    batch = state.shape[0]
    sa = jnp.concatenate([state, action], axis=1).astype(jnp.float32)

    sa_pad = prep["stages"][0][0].shape[1]            # padded input width (128)
    batch_pad = _round_up(batch, 8)
    tile_b = min(batch_pad, 128)
    batch_pad = _round_up(batch_pad, tile_b)

    sa = jnp.pad(sa, ((0, batch_pad - batch), (0, sa_pad - sa.shape[1])))

    flat_inputs = [sa]
    in_specs = [pl.BlockSpec((tile_b, sa_pad), lambda i: (i, 0))]
    for (w, b, g, t) in prep["stages"]:
        for arr in (w, b, g, t):
            flat_inputs.append(arr)
            # Whole-array block, constant index map -> weights stay resident in VMEM.
            in_specs.append(pl.BlockSpec(arr.shape, lambda i, _nd=arr.ndim: (0,) * _nd))
    wh, bh = prep["head"]
    flat_inputs += [wh, bh]
    in_specs += [pl.BlockSpec(wh.shape, lambda i: (0, 0, 0)),
                 pl.BlockSpec(bh.shape, lambda i: (0, 0))]

    out = pl.pallas_call(
        _critic_kernel,
        grid=(batch_pad // tile_b,),
        in_specs=in_specs,
        out_specs=pl.BlockSpec((tile_b, 2), lambda i: (i, 0)),
        out_shape=jax.ShapeDtypeStruct((batch_pad, 2), jnp.float32),
        compiler_params=pltpu.CompilerParams(
            dimension_semantics=("parallel",),        # shard batch tiles across TCs
            vmem_limit_bytes=32 * 1024 * 1024),       # above the 16 MiB v5e default
    )(*flat_inputs)

    return out[:batch, 0:1], out[:batch, 1:2]         # (q1, q2)


# -----------------------------------------------------------------------------
# Pure-JAX reference (uses the UNFOLDED params -> also validates the folding)
# -----------------------------------------------------------------------------
def _ref_forward(raw, state, action):
    sa = jnp.concatenate([state, action], axis=1).astype(jnp.float32)

    def branch(x, br):
        for (wl, bl, wr, brb, gamma, beta) in br["stages"]:
            h = x @ wl + bl + x @ wr + brb
            mean = jnp.mean(h, axis=-1, keepdims=True)
            var = jnp.mean((h - mean) ** 2, axis=-1, keepdims=True)
            y = (h - mean) / jnp.sqrt(var + _LN_EPS) * gamma + beta
            x = jnp.where(y > 0, y, _NEG_SLOPE * y)
        w_head, b_head = br["head"]
        return x @ w_head + b_head

    return branch(sa, raw["q1"]), branch(sa, raw["q2"])


if __name__ == "__main__":
    state_dim, action_dim, batch = 17, 6, 2

    key = jax.random.PRNGKey(0)
    k_params, k_state, k_action = jax.random.split(key, 3)

    raw_params = init_critic_params(k_params, state_dim, action_dim)
    prep_params = prepare_critic_params(raw_params)

    state = jax.random.normal(k_state, (batch, state_dim), jnp.float32)
    action = jax.random.normal(k_action, (batch, action_dim), jnp.float32)

    q1, q2 = critic_forward(prep_params, state, action)
    jax.block_until_ready((q1, q2))

    q1_ref, q2_ref = _ref_forward(raw_params, state, action)
    np.testing.assert_allclose(np.asarray(q1), np.asarray(q1_ref), rtol=1e-3, atol=1e-3)
    np.testing.assert_allclose(np.asarray(q2), np.asarray(q2_ref), rtol=1e-3, atol=1e-3)
    assert q1.shape == (batch, 1) and q2.shape == (batch, 1)

    print("KERNEL_OK")
</pallas_src>

<mosaic_0001>
module attributes {stable_mosaic.version = 11 : i64} {
  func.func @_critic_kernel(%arg0: i32, %arg1: memref<8x128xf32, #tpu.memory_space<vmem>>, %arg2: memref<2x128x512xf32, #tpu.memory_space<vmem>>, %arg3: memref<2x1x512xf32, #tpu.memory_space<vmem>>, %arg4: memref<2x1x512xf32, #tpu.memory_space<vmem>>, %arg5: memref<2x1x512xf32, #tpu.memory_space<vmem>>, %arg6: memref<2x512x384xf32, #tpu.memory_space<vmem>>, %arg7: memref<2x1x384xf32, #tpu.memory_space<vmem>>, %arg8: memref<2x1x384xf32, #tpu.memory_space<vmem>>, %arg9: memref<2x1x384xf32, #tpu.memory_space<vmem>>, %arg10: memref<2x384x256xf32, #tpu.memory_space<vmem>>, %arg11: memref<2x1x256xf32, #tpu.memory_space<vmem>>, %arg12: memref<2x1x256xf32, #tpu.memory_space<vmem>>, %arg13: memref<2x1x256xf32, #tpu.memory_space<vmem>>, %arg14: memref<2x256x128xf32, #tpu.memory_space<vmem>>, %arg15: memref<2x1x128xf32, #tpu.memory_space<vmem>>, %arg16: memref<2x1x128xf32, #tpu.memory_space<vmem>>, %arg17: memref<2x1x128xf32, #tpu.memory_space<vmem>>, %arg18: memref<2x128x2xf32, #tpu.memory_space<vmem>>, %arg19: memref<1x2xf32, #tpu.memory_space<vmem>>, %arg20: memref<8x2xf32, #tpu.memory_space<vmem>>) attributes {dimension_semantics = [#tpu.dimension_semantics<parallel>], iteration_bounds = array<i64: 1>, scalar_prefetch = 0 : i64, scratch_operands = 0 : i64, tpu.core_type = #tpu.core_type<tc>, window_params = [{transform_indices = @transform_0, window_bounds = array<i64: 8, 128>}, {pipeline_mode = #tpu.pipeline_mode<synchronous>, transform_indices = @transform_1, window_bounds = array<i64: 2, 128, 512>}, {pipeline_mode = #tpu.pipeline_mode<synchronous>, transform_indices = @transform_2, window_bounds = array<i64: 2, 1, 512>}, {pipeline_mode = #tpu.pipeline_mode<synchronous>, transform_indices = @transform_3, window_bounds = array<i64: 2, 1, 512>}, {pipeline_mode = #tpu.pipeline_mode<synchronous>, transform_indices = @transform_4, window_bounds = array<i64: 2, 1, 512>}, {pipeline_mode = #tpu.pipeline_mode<synchronous>, transform_indices = @transform_5, window_bounds = array<i64: 2, 512, 384>}, {pipeline_mode = #tpu.pipeline_mode<synchronous>, transform_indices = @transform_6, window_bounds = array<i64: 2, 1, 384>}, {pipeline_mode = #tpu.pipeline_mode<synchronous>, transform_indices = @transform_7, window_bounds = array<i64: 2, 1, 384>}, {pipeline_mode = #tpu.pipeline_mode<synchronous>, transform_indices = @transform_8, window_bounds = array<i64: 2, 1, 384>}, {pipeline_mode = #tpu.pipeline_mode<synchronous>, transform_indices = @transform_9, window_bounds = array<i64: 2, 384, 256>}, {pipeline_mode = #tpu.pipeline_mode<synchronous>, transform_indices = @transform_10, window_bounds = array<i64: 2, 1, 256>}, {pipeline_mode = #tpu.pipeline_mode<synchronous>, transform_indices = @transform_11, window_bounds = array<i64: 2, 1, 256>}, {pipeline_mode = #tpu.pipeline_mode<synchronous>, transform_indices = @transform_12, window_bounds = array<i64: 2, 1, 256>}, {pipeline_mode = #tpu.pipeline_mode<synchronous>, transform_indices = @transform_13, window_bounds = array<i64: 2, 256, 128>}, {pipeline_mode = #tpu.pipeline_mode<synchronous>, transform_indices = @transform_14, window_bounds = array<i64: 2, 1, 128>}, {pipeline_mode = #tpu.pipeline_mode<synchronous>, transform_indices = @transform_15, window_bounds = array<i64: 2, 1, 128>}, {pipeline_mode = #tpu.pipeline_mode<synchronous>, transform_indices = @transform_16, window_bounds = array<i64: 2, 1, 128>}, {pipeline_mode = #tpu.pipeline_mode<synchronous>, transform_indices = @transform_17, window_bounds = array<i64: 2, 128, 2>}, {pipeline_mode = #tpu.pipeline_mode<synchronous>, transform_indices = @transform_18, window_bounds = array<i64: 1, 2>}, {transform_indices = @transform_19, window_bounds = array<i64: 8, 2>}]} {
    %c0 = arith.constant 0 : index
    %c0_0 = arith.constant 0 : index
    %0 = vector.load %arg1[%c0, %c0_0] : memref<8x128xf32, #tpu.memory_space<vmem>>, vector<8x128xf32>
    %c0_1 = arith.constant 0 : index
    %c0_2 = arith.constant 0 : index
    %c0_3 = arith.constant 0 : index
    %1 = vector.load %arg2[%c0_1, %c0_2, %c0_3] : memref<2x128x512xf32, #tpu.memory_space<vmem>>, vector<1x128x512xf32>
    %2 = vector.shape_cast %1 : vector<1x128x512xf32> to vector<128x512xf32>
    %c0_4 = arith.constant 0 : index
    %c0_5 = arith.constant 0 : index
    %c0_6 = arith.constant 0 : index
    %3 = vector.load %arg3[%c0_4, %c0_5, %c0_6] : memref<2x1x512xf32, #tpu.memory_space<vmem>>, vector<1x1x512xf32>
    %4 = vector.shape_cast %3 : vector<1x1x512xf32> to vector<1x512xf32>
    %c0_7 = arith.constant 0 : index
    %c0_8 = arith.constant 0 : index
    %c0_9 = arith.constant 0 : index
    %5 = vector.load %arg4[%c0_7, %c0_8, %c0_9] : memref<2x1x512xf32, #tpu.memory_space<vmem>>, vector<1x1x512xf32>
    %6 = vector.shape_cast %5 : vector<1x1x512xf32> to vector<1x512xf32>
    %c0_10 = arith.constant 0 : index
    %c0_11 = arith.constant 0 : index
    %c0_12 = arith.constant 0 : index
    %7 = vector.load %arg5[%c0_10, %c0_11, %c0_12] : memref<2x1x512xf32, #tpu.memory_space<vmem>>, vector<1x1x512xf32>
    %8 = vector.shape_cast %7 : vector<1x1x512xf32> to vector<1x512xf32>
    %cst = arith.constant dense<0.000000e+00> : vector<8x512xf32>
    %9 = tpu.matmul %0, %2, %cst {dimension_numbers = #tpu.dot_dimension_numbers<[1], [0], [0], [1], [0, 0, 1, 1], [], []>} : vector<8x128xf32>, vector<128x512xf32>, vector<8x512xf32> -> vector<8x512xf32>
    %10 = vector.broadcast %4 : vector<1x512xf32> to vector<8x512xf32>
    %11 = arith.addf %9, %10 : vector<8x512xf32>
    %cst_13 = arith.constant dense<0.000000e+00> : vector<8xf32>
    %12 = vector.multi_reduction <add>, %11, %cst_13 [1] : vector<8x512xf32> to vector<8xf32>
    %13 = vector.shape_cast %12 : vector<8xf32> to vector<8x1xf32>
    %cst_14 = arith.constant 5.120000e+02 : f32
    %14 = vector.broadcast %cst_14 : f32 to vector<8x1xf32>
    %15 = arith.divf %13, %14 : vector<8x1xf32>
    %16 = arith.mulf %11, %11 : vector<8x512xf32>
    %cst_15 = arith.constant dense<0.000000e+00> : vector<8xf32>
    %17 = vector.multi_reduction <add>, %16, %cst_15 [1] : vector<8x512xf32> to vector<8xf32>
    %18 = vector.shape_cast %17 : vector<8xf32> to vector<8x1xf32>
    %cst_16 = arith.constant 5.120000e+02 : f32
    %19 = vector.broadcast %cst_16 : f32 to vector<8x1xf32>
    %20 = arith.divf %18, %19 : vector<8x1xf32>
    %21 = arith.mulf %15, %15 : vector<8x1xf32>
    %22 = arith.subf %20, %21 : vector<8x1xf32>
    %23 = vector.broadcast %15 : vector<8x1xf32> to vector<8x512xf32>
    %24 = arith.subf %11, %23 : vector<8x512xf32>
    %cst_17 = arith.constant 9.99999974E-6 : f32
    %25 = vector.broadcast %cst_17 : f32 to vector<8x1xf32>
    %26 = arith.addf %22, %25 : vector<8x1xf32>
    %27 = math.rsqrt %26 : vector<8x1xf32>
    %28 = vector.broadcast %27 : vector<8x1xf32> to vector<8x512xf32>
    %29 = arith.mulf %24, %28 : vector<8x512xf32>
    %30 = vector.broadcast %6 : vector<1x512xf32> to vector<8x512xf32>
    %31 = arith.mulf %29, %30 : vector<8x512xf32>
    %32 = vector.broadcast %8 : vector<1x512xf32> to vector<8x512xf32>
    %33 = arith.addf %31, %32 : vector<8x512xf32>
    %cst_18 = arith.constant 0.000000e+00 : f32
    %34 = vector.broadcast %cst_18 : f32 to vector<8x512xf32>
    %35 = arith.cmpf ogt, %33, %34 : vector<8x512xf32>
    %cst_19 = arith.constant 0.00999999977 : f32
    %36 = vector.broadcast %cst_19 : f32 to vector<8x512xf32>
    %37 = arith.mulf %36, %33 : vector<8x512xf32>
    %38 = arith.select %35, %33, %37 : vector<8x512xi1>, vector<8x512xf32>
    %c1 = arith.constant 1 : index
    %c0_20 = arith.constant 0 : index
    %c0_21 = arith.constant 0 : index
    %39 = vector.load %arg2[%c1, %c0_20, %c0_21] : memref<2x128x512xf32, #tpu.memory_space<vmem>>, vector<1x128x512xf32>
    %40 = vector.shape_cast %39 : vector<1x128x512xf32> to vector<128x512xf32>
    %c1_22 = arith.constant 1 : index
    %c0_23 = arith.constant 0 : index
    %c0_24 = arith.constant 0 : index
    %41 = vector.load %arg3[%c1_22, %c0_23, %c0_24] : memref<2x1x512xf32, #tpu.memory_space<vmem>>, vector<1x1x512xf32>
    %42 = vector.shape_cast %41 : vector<1x1x512xf32> to vector<1x512xf32>
    %c1_25 = arith.constant 1 : index
    %c0_26 = arith.constant 0 : index
    %c0_27 = arith.constant 0 : index
    %43 = vector.load %arg4[%c1_25, %c0_26, %c0_27] : memref<2x1x512xf32, #tpu.memory_space<vmem>>, vector<1x1x512xf32>
    %44 = vector.shape_cast %43 : vector<1x1x512xf32> to vector<1x512xf32>
    %c1_28 = arith.constant 1 : index
    %c0_29 = arith.constant 0 : index
    %c0_30 = arith.constant 0 : index
    %45 = vector.load %arg5[%c1_28, %c0_29, %c0_30] : memref<2x1x512xf32, #tpu.memory_space<vmem>>, vector<1x1x512xf32>
    %46 = vector.shape_cast %45 : vector<1x1x512xf32> to vector<1x512xf32>
    %cst_31 = arith.constant dense<0.000000e+00> : vector<8x512xf32>
    %47 = tpu.matmul %0, %40, %cst_31 {dimension_numbers = #tpu.dot_dimension_numbers<[1], [0], [0], [1], [0, 0, 1, 1], [], []>} : vector<8x128xf32>, vector<128x512xf32>, vector<8x512xf32> -> vector<8x512xf32>
    %48 = vector.broadcast %42 : vector<1x512xf32> to vector<8x512xf32>
    %49 = arith.addf %47, %48 : vector<8x512xf32>
    %cst_32 = arith.constant dense<0.000000e+00> : vector<8xf32>
    %50 = vector.multi_reduction <add>, %49, %cst_32 [1] : vector<8x512xf32> to vector<8xf32>
    %51 = vector.shape_cast %50 : vector<8xf32> to vector<8x1xf32>
    %cst_33 = arith.constant 5.120000e+02 : f32
    %52 = vector.broadcast %cst_33 : f32 to vector<8x1xf32>
    %53 = arith.divf %51, %52 : vector<8x1xf32>
    %54 = arith.mulf %49, %49 : vector<8x512xf32>
    %cst_34 = arith.constant dense<0.000000e+00> : vector<8xf32>
    %55 = vector.multi_reduction <add>, %54, %cst_34 [1] : vector<8x512xf32> to vector<8xf32>
    %56 = vector.shape_cast %55 : vector<8xf32> to vector<8x1xf32>
    %cst_35 = arith.constant 5.120000e+02 : f32
    %57 = vector.broadcast %cst_35 : f32 to vector<8x1xf32>
    %58 = arith.divf %56, %57 : vector<8x1xf32>
    %59 = arith.mulf %53, %53 : vector<8x1xf32>
    %60 = arith.subf %58, %59 : vector<8x1xf32>
    %61 = vector.broadcast %53 : vector<8x1xf32> to vector<8x512xf32>
    %62 = arith.subf %49, %61 : vector<8x512xf32>
    %cst_36 = arith.constant 9.99999974E-6 : f32
    %63 = vector.broadcast %cst_36 : f32 to vector<8x1xf32>
    %64 = arith.addf %60, %63 : vector<8x1xf32>
    %65 = math.rsqrt %64 : vector<8x1xf32>
    %66 = vector.broadcast %65 : vector<8x1xf32> to vector<8x512xf32>
    %67 = arith.mulf %62, %66 : vector<8x512xf32>
    %68 = vector.broadcast %44 : vector<1x512xf32> to vector<8x512xf32>
    %69 = arith.mulf %67, %68 : vector<8x512xf32>
    %70 = vector.broadcast %46 : vector<1x512xf32> to vector<8x512xf32>
    %71 = arith.addf %69, %70 : vector<8x512xf32>
    %cst_37 = arith.constant 0.000000e+00 : f32
    %72 = vector.broadcast %cst_37 : f32 to vector<8x512xf32>
    %73 = arith.cmpf ogt, %71, %72 : vector<8x512xf32>
    %cst_38 = arith.constant 0.00999999977 : f32
    %74 = vector.broadcast %cst_38 : f32 to vector<8x512xf32>
    %75 = arith.mulf %74, %71 : vector<8x512xf32>
    %76 = arith.select %73, %71, %75 : vector<8x512xi1>, vector<8x512xf32>
    %c0_39 = arith.constant 0 : index
    %c0_40 = arith.constant 0 : index
    %c0_41 = arith.constant 0 : index
    %77 = vector.load %arg6[%c0_39, %c0_40, %c0_41] : memref<2x512x384xf32, #tpu.memory_space<vmem>>, vector<1x512x384xf32>
    %78 = vector.shape_cast %77 : vector<1x512x384xf32> to vector<512x384xf32>
    %c0_42 = arith.constant 0 : index
    %c0_43 = arith.constant 0 : index
    %c0_44 = arith.constant 0 : index
    %79 = vector.load %arg7[%c0_42, %c0_43, %c0_44] : memref<2x1x384xf32, #tpu.memory_space<vmem>>, vector<1x1x384xf32>
    %80 = vector.shape_cast %79 : vector<1x1x384xf32> to vector<1x384xf32>
    %c0_45 = arith.constant 0 : index
    %c0_46 = arith.constant 0 : index
    %c0_47 = arith.constant 0 : index
    %81 = vector.load %arg8[%c0_45, %c0_46, %c0_47] : memref<2x1x384xf32, #tpu.memory_space<vmem>>, vector<1x1x384xf32>
    %82 = vector.shape_cast %81 : vector<1x1x384xf32> to vector<1x384xf32>
    %c0_48 = arith.constant 0 : index
    %c0_49 = arith.constant 0 : index
    %c0_50 = arith.constant 0 : index
    %83 = vector.load %arg9[%c0_48, %c0_49, %c0_50] : memref<2x1x384xf32, #tpu.memory_space<vmem>>, vector<1x1x384xf32>
    %84 = vector.shape_cast %83 : vector<1x1x384xf32> to vector<1x384xf32>
    %cst_51 = arith.constant dense<0.000000e+00> : vector<8x384xf32>
    %85 = tpu.matmul %38, %78, %cst_51 {dimension_numbers = #tpu.dot_dimension_numbers<[1], [0], [0], [1], [0, 0, 1, 1], [], []>} : vector<8x512xf32>, vector<512x384xf32>, vector<8x384xf32> -> vector<8x384xf32>
    %86 = vector.broadcast %80 : vector<1x384xf32> to vector<8x384xf32>
    %87 = arith.addf %85, %86 : vector<8x384xf32>
    %cst_52 = arith.constant dense<0.000000e+00> : vector<8xf32>
    %88 = vector.multi_reduction <add>, %87, %cst_52 [1] : vector<8x384xf32> to vector<8xf32>
    %89 = vector.shape_cast %88 : vector<8xf32> to vector<8x1xf32>
    %cst_53 = arith.constant 3.840000e+02 : f32
    %90 = vector.broadcast %cst_53 : f32 to vector<8x1xf32>
    %91 = arith.divf %89, %90 : vector<8x1xf32>
    %92 = arith.mulf %87, %87 : vector<8x384xf32>
    %cst_54 = arith.constant dense<0.000000e+00> : vector<8xf32>
    %93 = vector.multi_reduction <add>, %92, %cst_54 [1] : vector<8x384xf32> to vector<8xf32>
    %94 = vector.shape_cast %93 : vector<8xf32> to vector<8x1xf32>
    %cst_55 = arith.constant 3.840000e+02 : f32
    %95 = vector.broadcast %cst_55 : f32 to vector<8x1xf32>
    %96 = arith.divf %94, %95 : vector<8x1xf32>
    %97 = arith.mulf %91, %91 : vector<8x1xf32>
    %98 = arith.subf %96, %97 : vector<8x1xf32>
    %99 = vector.broadcast %91 : vector<8x1xf32> to vector<8x384xf32>
    %100 = arith.subf %87, %99 : vector<8x384xf32>
    %cst_56 = arith.constant 9.99999974E-6 : f32
    %101 = vector.broadcast %cst_56 : f32 to vector<8x1xf32>
    %102 = arith.addf %98, %101 : vector<8x1xf32>
    %103 = math.rsqrt %102 : vector<8x1xf32>
    %104 = vector.broadcast %103 : vector<8x1xf32> to vector<8x384xf32>
    %105 = arith.mulf %100, %104 : vector<8x384xf32>
    %106 = vector.broadcast %82 : vector<1x384xf32> to vector<8x384xf32>
    %107 = arith.mulf %105, %106 : vector<8x384xf32>
    %108 = vector.broadcast %84 : vector<1x384xf32> to vector<8x384xf32>
    %109 = arith.addf %107, %108 : vector<8x384xf32>
    %cst_57 = arith.constant 0.000000e+00 : f32
    %110 = vector.broadcast %cst_57 : f32 to vector<8x384xf32>
    %111 = arith.cmpf ogt, %109, %110 : vector<8x384xf32>
    %cst_58 = arith.constant 0.00999999977 : f32
    %112 = vector.broadcast %cst_58 : f32 to vector<8x384xf32>
    %113 = arith.mulf %112, %109 : vector<8x384xf32>
    %114 = arith.select %111, %109, %113 : vector<8x384xi1>, vector<8x384xf32>
    %c1_59 = arith.constant 1 : index
    %c0_60 = arith.constant 0 : index
    %c0_61 = arith.constant 0 : index
    %115 = vector.load %arg6[%c1_59, %c0_60, %c0_61] : memref<2x512x384xf32, #tpu.memory_space<vmem>>, vector<1x512x384xf32>
    %116 = vector.shape_cast %115 : vector<1x512x384xf32> to vector<512x384xf32>
    %c1_62 = arith.constant 1 : index
    %c0_63 = arith.constant 0 : index
    %c0_64 = arith.constant 0 : index
    %117 = vector.load %arg7[%c1_62, %c0_63, %c0_64] : memref<2x1x384xf32, #tpu.memory_space<vmem>>, vector<1x1x384xf32>
    %118 = vector.shape_cast %117 : vector<1x1x384xf32> to vector<1x384xf32>
    %c1_65 = arith.constant 1 : index
    %c0_66 = arith.constant 0 : index
    %c0_67 = arith.constant 0 : index
    %119 = vector.load %arg8[%c1_65, %c0_66, %c0_67] : memref<2x1x384xf32, #tpu.memory_space<vmem>>, vector<1x1x384xf32>
    %120 = vector.shape_cast %119 : vector<1x1x384xf32> to vector<1x384xf32>
    %c1_68 = arith.constant 1 : index
    %c0_69 = arith.constant 0 : index
    %c0_70 = arith.constant 0 : index
    %121 = vector.load %arg9[%c1_68, %c0_69, %c0_70] : memref<2x1x384xf32, #tpu.memory_space<vmem>>, vector<1x1x384xf32>
    %122 = vector.shape_cast %121 : vector<1x1x384xf32> to vector<1x384xf32>
    %cst_71 = arith.constant dense<0.000000e+00> : vector<8x384xf32>
    %123 = tpu.matmul %76, %116, %cst_71 {dimension_numbers = #tpu.dot_dimension_numbers<[1], [0], [0], [1], [0, 0, 1, 1], [], []>} : vector<8x512xf32>, vector<512x384xf32>, vector<8x384xf32> -> vector<8x384xf32>
    %124 = vector.broadcast %118 : vector<1x384xf32> to vector<8x384xf32>
    %125 = arith.addf %123, %124 : vector<8x384xf32>
    %cst_72 = arith.constant dense<0.000000e+00> : vector<8xf32>
    %126 = vector.multi_reduction <add>, %125, %cst_72 [1] : vector<8x384xf32> to vector<8xf32>
    %127 = vector.shape_cast %126 : vector<8xf32> to vector<8x1xf32>
    %cst_73 = arith.constant 3.840000e+02 : f32
    %128 = vector.broadcast %cst_73 : f32 to vector<8x1xf32>
    %129 = arith.divf %127, %128 : vector<8x1xf32>
    %130 = arith.mulf %125, %125 : vector<8x384xf32>
    %cst_74 = arith.constant dense<0.000000e+00> : vector<8xf32>
    %131 = vector.multi_reduction <add>, %130, %cst_74 [1] : vector<8x384xf32> to vector<8xf32>
    %132 = vector.shape_cast %131 : vector<8xf32> to vector<8x1xf32>
    %cst_75 = arith.constant 3.840000e+02 : f32
    %133 = vector.broadcast %cst_75 : f32 to vector<8x1xf32>
    %134 = arith.divf %132, %133 : vector<8x1xf32>
    %135 = arith.mulf %129, %129 : vector<8x1xf32>
    %136 = arith.subf %134, %135 : vector<8x1xf32>
    %137 = vector.broadcast %129 : vector<8x1xf32> to vector<8x384xf32>
    %138 = arith.subf %125, %137 : vector<8x384xf32>
    %cst_76 = arith.constant 9.99999974E-6 : f32
    %139 = vector.broadcast %cst_76 : f32 to vector<8x1xf32>
    %140 = arith.addf %136, %139 : vector<8x1xf32>
    %141 = math.rsqrt %140 : vector<8x1xf32>
    %142 = vector.broadcast %141 : vector<8x1xf32> to vector<8x384xf32>
    %143 = arith.mulf %138, %142 : vector<8x384xf32>
    %144 = vector.broadcast %120 : vector<1x384xf32> to vector<8x384xf32>
    %145 = arith.mulf %143, %144 : vector<8x384xf32>
    %146 = vector.broadcast %122 : vector<1x384xf32> to vector<8x384xf32>
    %147 = arith.addf %145, %146 : vector<8x384xf32>
    %cst_77 = arith.constant 0.000000e+00 : f32
    %148 = vector.broadcast %cst_77 : f32 to vector<8x384xf32>
    %149 = arith.cmpf ogt, %147, %148 : vector<8x384xf32>
    %cst_78 = arith.constant 0.00999999977 : f32
    %150 = vector.broadcast %cst_78 : f32 to vector<8x384xf32>
    %151 = arith.mulf %150, %147 : vector<8x384xf32>
    %152 = arith.select %149, %147, %151 : vector<8x384xi1>, vector<8x384xf32>
    %c0_79 = arith.constant 0 : index
    %c0_80 = arith.constant 0 : index
    %c0_81 = arith.constant 0 : index
    %153 = vector.load %arg10[%c0_79, %c0_80, %c0_81] : memref<2x384x256xf32, #tpu.memory_space<vmem>>, vector<1x384x256xf32>
    %154 = vector.shape_cast %153 : vector<1x384x256xf32> to vector<384x256xf32>
    %c0_82 = arith.constant 0 : index
    %c0_83 = arith.constant 0 : index
    %c0_84 = arith.constant 0 : index
    %155 = vector.load %arg11[%c0_82, %c0_83, %c0_84] : memref<2x1x256xf32, #tpu.memory_space<vmem>>, vector<1x1x256xf32>
    %156 = vector.shape_cast %155 : vector<1x1x256xf32> to vector<1x256xf32>
    %c0_85 = arith.constant 0 : index
    %c0_86 = arith.constant 0 : index
    %c0_87 = arith.constant 0 : index
    %157 = vector.load %arg12[%c0_85, %c0_86, %c0_87] : memref<2x1x256xf32, #tpu.memory_space<vmem>>, vector<1x1x256xf32>
    %158 = vector.shape_cast %157 : vector<1x1x256xf32> to vector<1x256xf32>
    %c0_88 = arith.constant 0 : index
    %c0_89 = arith.constant 0 : index
    %c0_90 = arith.constant 0 : index
    %159 = vector.load %arg13[%c0_88, %c0_89, %c0_90] : memref<2x1x256xf32, #tpu.memory_space<vmem>>, vector<1x1x256xf32>
    %160 = vector.shape_cast %159 : vector<1x1x256xf32> to vector<1x256xf32>
    %cst_91 = arith.constant dense<0.000000e+00> : vector<8x256xf32>
    %161 = tpu.matmul %114, %154, %cst_91 {dimension_numbers = #tpu.dot_dimension_numbers<[1], [0], [0], [1], [0, 0, 1, 1], [], []>} : vector<8x384xf32>, vector<384x256xf32>, vector<8x256xf32> -> vector<8x256xf32>
    %162 = vector.broadcast %156 : vector<1x256xf32> to vector<8x256xf32>
    %163 = arith.addf %161, %162 : vector<8x256xf32>
    %cst_92 = arith.constant dense<0.000000e+00> : vector<8xf32>
    %164 = vector.multi_reduction <add>, %163, %cst_92 [1] : vector<8x256xf32> to vector<8xf32>
    %165 = vector.shape_cast %164 : vector<8xf32> to vector<8x1xf32>
    %cst_93 = arith.constant 2.560000e+02 : f32
    %166 = vector.broadcast %cst_93 : f32 to vector<8x1xf32>
    %167 = arith.divf %165, %166 : vector<8x1xf32>
    %168 = arith.mulf %163, %163 : vector<8x256xf32>
    %cst_94 = arith.constant dense<0.000000e+00> : vector<8xf32>
    %169 = vector.multi_reduction <add>, %168, %cst_94 [1] : vector<8x256xf32> to vector<8xf32>
    %170 = vector.shape_cast %169 : vector<8xf32> to vector<8x1xf32>
    %cst_95 = arith.constant 2.560000e+02 : f32
    %171 = vector.broadcast %cst_95 : f32 to vector<8x1xf32>
    %172 = arith.divf %170, %171 : vector<8x1xf32>
    %173 = arith.mulf %167, %167 : vector<8x1xf32>
    %174 = arith.subf %172, %173 : vector<8x1xf32>
    %175 = vector.broadcast %167 : vector<8x1xf32> to vector<8x256xf32>
    %176 = arith.subf %163, %175 : vector<8x256xf32>
    %cst_96 = arith.constant 9.99999974E-6 : f32
    %177 = vector.broadcast %cst_96 : f32 to vector<8x1xf32>
    %178 = arith.addf %174, %177 : vector<8x1xf32>
    %179 = math.rsqrt %178 : vector<8x1xf32>
    %180 = vector.broadcast %179 : vector<8x1xf32> to vector<8x256xf32>
    %181 = arith.mulf %176, %180 : vector<8x256xf32>
    %182 = vector.broadcast %158 : vector<1x256xf32> to vector<8x256xf32>
    %183 = arith.mulf %181, %182 : vector<8x256xf32>
    %184 = vector.broadcast %160 : vector<1x256xf32> to vector<8x256xf32>
    %185 = arith.addf %183, %184 : vector<8x256xf32>
    %cst_97 = arith.constant 0.000000e+00 : f32
    %186 = vector.broadcast %cst_97 : f32 to vector<8x256xf32>
    %187 = arith.cmpf ogt, %185, %186 : vector<8x256xf32>
    %cst_98 = arith.constant 0.00999999977 : f32
    %188 = vector.broadcast %cst_98 : f32 to vector<8x256xf32>
    %189 = arith.mulf %188, %185 : vector<8x256xf32>
    %190 = arith.select %187, %185, %189 : vector<8x256xi1>, vector<8x256xf32>
    %c1_99 = arith.constant 1 : index
    %c0_100 = arith.constant 0 : index
    %c0_101 = arith.constant 0 : index
    %191 = vector.load %arg10[%c1_99, %c0_100, %c0_101] : memref<2x384x256xf32, #tpu.memory_space<vmem>>, vector<1x384x256xf32>
    %192 = vector.shape_cast %191 : vector<1x384x256xf32> to vector<384x256xf32>
    %c1_102 = arith.constant 1 : index
    %c0_103 = arith.constant 0 : index
    %c0_104 = arith.constant 0 : index
    %193 = vector.load %arg11[%c1_102, %c0_103, %c0_104] : memref<2x1x256xf32, #tpu.memory_space<vmem>>, vector<1x1x256xf32>
    %194 = vector.shape_cast %193 : vector<1x1x256xf32> to vector<1x256xf32>
    %c1_105 = arith.constant 1 : index
    %c0_106 = arith.constant 0 : index
    %c0_107 = arith.constant 0 : index
    %195 = vector.load %arg12[%c1_105, %c0_106, %c0_107] : memref<2x1x256xf32, #tpu.memory_space<vmem>>, vector<1x1x256xf32>
    %196 = vector.shape_cast %195 : vector<1x1x256xf32> to vector<1x256xf32>
    %c1_108 = arith.constant 1 : index
    %c0_109 = arith.constant 0 : index
    %c0_110 = arith.constant 0 : index
    %197 = vector.load %arg13[%c1_108, %c0_109, %c0_110] : memref<2x1x256xf32, #tpu.memory_space<vmem>>, vector<1x1x256xf32>
    %198 = vector.shape_cast %197 : vector<1x1x256xf32> to vector<1x256xf32>
    %cst_111 = arith.constant dense<0.000000e+00> : vector<8x256xf32>
    %199 = tpu.matmul %152, %192, %cst_111 {dimension_numbers = #tpu.dot_dimension_numbers<[1], [0], [0], [1], [0, 0, 1, 1], [], []>} : vector<8x384xf32>, vector<384x256xf32>, vector<8x256xf32> -> vector<8x256xf32>
    %200 = vector.broadcast %194 : vector<1x256xf32> to vector<8x256xf32>
    %201 = arith.addf %199, %200 : vector<8x256xf32>
    %cst_112 = arith.constant dense<0.000000e+00> : vector<8xf32>
    %202 = vector.multi_reduction <add>, %201, %cst_112 [1] : vector<8x256xf32> to vector<8xf32>
    %203 = vector.shape_cast %202 : vector<8xf32> to vector<8x1xf32>
    %cst_113 = arith.constant 2.560000e+02 : f32
    %204 = vector.broadcast %cst_113 : f32 to vector<8x1xf32>
    %205 = arith.divf %203, %204 : vector<8x1xf32>
    %206 = arith.mulf %201, %201 : vector<8x256xf32>
    %cst_114 = arith.constant dense<0.000000e+00> : vector<8xf32>
    %207 = vector.multi_reduction <add>, %206, %cst_114 [1] : vector<8x256xf32> to vector<8xf32>
    %208 = vector.shape_cast %207 : vector<8xf32> to vector<8x1xf32>
    %cst_115 = arith.constant 2.560000e+02 : f32
    %209 = vector.broadcast %cst_115 : f32 to vector<8x1xf32>
    %210 = arith.divf %208, %209 : vector<8x1xf32>
    %211 = arith.mulf %205, %205 : vector<8x1xf32>
    %212 = arith.subf %210, %211 : vector<8x1xf32>
    %213 = vector.broadcast %205 : vector<8x1xf32> to vector<8x256xf32>
    %214 = arith.subf %201, %213 : vector<8x256xf32>
    %cst_116 = arith.constant 9.99999974E-6 : f32
    %215 = vector.broadcast %cst_116 : f32 to vector<8x1xf32>
    %216 = arith.addf %212, %215 : vector<8x1xf32>
    %217 = math.rsqrt %216 : vector<8x1xf32>
    %218 = vector.broadcast %217 : vector<8x1xf32> to vector<8x256xf32>
    %219 = arith.mulf %214, %218 : vector<8x256xf32>
    %220 = vector.broadcast %196 : vector<1x256xf32> to vector<8x256xf32>
    %221 = arith.mulf %219, %220 : vector<8x256xf32>
    %222 = vector.broadcast %198 : vector<1x256xf32> to vector<8x256xf32>
    %223 = arith.addf %221, %222 : vector<8x256xf32>
    %cst_117 = arith.constant 0.000000e+00 : f32
    %224 = vector.broadcast %cst_117 : f32 to vector<8x256xf32>
    %225 = arith.cmpf ogt, %223, %224 : vector<8x256xf32>
    %cst_118 = arith.constant 0.00999999977 : f32
    %226 = vector.broadcast %cst_118 : f32 to vector<8x256xf32>
    %227 = arith.mulf %226, %223 : vector<8x256xf32>
    %228 = arith.select %225, %223, %227 : vector<8x256xi1>, vector<8x256xf32>
    %c0_119 = arith.constant 0 : index
    %c0_120 = arith.constant 0 : index
    %c0_121 = arith.constant 0 : index
    %229 = vector.load %arg14[%c0_119, %c0_120, %c0_121] : memref<2x256x128xf32, #tpu.memory_space<vmem>>, vector<1x256x128xf32>
    %230 = vector.shape_cast %229 : vector<1x256x128xf32> to vector<256x128xf32>
    %c0_122 = arith.constant 0 : index
    %c0_123 = arith.constant 0 : index
    %c0_124 = arith.constant 0 : index
    %231 = vector.load %arg15[%c0_122, %c0_123, %c0_124] : memref<2x1x128xf32, #tpu.memory_space<vmem>>, vector<1x1x128xf32>
    %232 = vector.shape_cast %231 : vector<1x1x128xf32> to vector<1x128xf32>
    %c0_125 = arith.constant 0 : index
    %c0_126 = arith.constant 0 : index
    %c0_127 = arith.constant 0 : index
    %233 = vector.load %arg16[%c0_125, %c0_126, %c0_127] : memref<2x1x128xf32, #tpu.memory_space<vmem>>, vector<1x1x128xf32>
    %234 = vector.shape_cast %233 : vector<1x1x128xf32> to vector<1x128xf32>
    %c0_128 = arith.constant 0 : index
    %c0_129 = arith.constant 0 : index
    %c0_130 = arith.constant 0 : index
    %235 = vector.load %arg17[%c0_128, %c0_129, %c0_130] : memref<2x1x128xf32, #tpu.memory_space<vmem>>, vector<1x1x128xf32>
    %236 = vector.shape_cast %235 : vector<1x1x128xf32> to vector<1x128xf32>
    %cst_131 = arith.constant dense<0.000000e+00> : vector<8x128xf32>
    %237 = tpu.matmul %190, %230, %cst_131 {dimension_numbers = #tpu.dot_dimension_numbers<[1], [0], [0], [1], [0, 0, 1, 1], [], []>} : vector<8x256xf32>, vector<256x128xf32>, vector<8x128xf32> -> vector<8x128xf32>
    %238 = vector.broadcast %232 : vector<1x128xf32> to vector<8x128xf32>
    %239 = arith.addf %237, %238 : vector<8x128xf32>
    %cst_132 = arith.constant dense<0.000000e+00> : vector<8xf32>
    %240 = vector.multi_reduction <add>, %239, %cst_132 [1] : vector<8x128xf32> to vector<8xf32>
    %241 = vector.shape_cast %240 : vector<8xf32> to vector<8x1xf32>
    %cst_133 = arith.constant 1.280000e+02 : f32
    %242 = vector.broadcast %cst_133 : f32 to vector<8x1xf32>
    %243 = arith.divf %241, %242 : vector<8x1xf32>
    %244 = arith.mulf %239, %239 : vector<8x128xf32>
    %cst_134 = arith.constant dense<0.000000e+00> : vector<8xf32>
    %245 = vector.multi_reduction <add>, %244, %cst_134 [1] : vector<8x128xf32> to vector<8xf32>
    %246 = vector.shape_cast %245 : vector<8xf32> to vector<8x1xf32>
    %cst_135 = arith.constant 1.280000e+02 : f32
    %247 = vector.broadcast %cst_135 : f32 to vector<8x1xf32>
    %248 = arith.divf %246, %247 : vector<8x1xf32>
    %249 = arith.mulf %243, %243 : vector<8x1xf32>
    %250 = arith.subf %248, %249 : vector<8x1xf32>
    %251 = vector.broadcast %243 : vector<8x1xf32> to vector<8x128xf32>
    %252 = arith.subf %239, %251 : vector<8x128xf32>
    %cst_136 = arith.constant 9.99999974E-6 : f32
    %253 = vector.broadcast %cst_136 : f32 to vector<8x1xf32>
    %254 = arith.addf %250, %253 : vector<8x1xf32>
    %255 = math.rsqrt %254 : vector<8x1xf32>
    %256 = vector.broadcast %255 : vector<8x1xf32> to vector<8x128xf32>
    %257 = arith.mulf %252, %256 : vector<8x128xf32>
    %258 = vector.broadcast %234 : vector<1x128xf32> to vector<8x128xf32>
    %259 = arith.mulf %257, %258 : vector<8x128xf32>
    %260 = vector.broadcast %236 : vector<1x128xf32> to vector<8x128xf32>
    %261 = arith.addf %259, %260 : vector<8x128xf32>
    %cst_137 = arith.constant 0.000000e+00 : f32
    %262 = vector.broadcast %cst_137 : f32 to vector<8x128xf32>
    %263 = arith.cmpf ogt, %261, %262 : vector<8x128xf32>
    %cst_138 = arith.constant 0.00999999977 : f32
    %264 = vector.broadcast %cst_138 : f32 to vector<8x128xf32>
    %265 = arith.mulf %264, %261 : vector<8x128xf32>
    %266 = arith.select %263, %261, %265 : vector<8x128xi1>, vector<8x128xf32>
    %c1_139 = arith.constant 1 : index
    %c0_140 = arith.constant 0 : index
    %c0_141 = arith.constant 0 : index
    %267 = vector.load %arg14[%c1_139, %c0_140, %c0_141] : memref<2x256x128xf32, #tpu.memory_space<vmem>>, vector<1x256x128xf32>
    %268 = vector.shape_cast %267 : vector<1x256x128xf32> to vector<256x128xf32>
    %c1_142 = arith.constant 1 : index
    %c0_143 = arith.constant 0 : index
    %c0_144 = arith.constant 0 : index
    %269 = vector.load %arg15[%c1_142, %c0_143, %c0_144] : memref<2x1x128xf32, #tpu.memory_space<vmem>>, vector<1x1x128xf32>
    %270 = vector.shape_cast %269 : vector<1x1x128xf32> to vector<1x128xf32>
    %c1_145 = arith.constant 1 : index
    %c0_146 = arith.constant 0 : index
    %c0_147 = arith.constant 0 : index
    %271 = vector.load %arg16[%c1_145, %c0_146, %c0_147] : memref<2x1x128xf32, #tpu.memory_space<vmem>>, vector<1x1x128xf32>
    %272 = vector.shape_cast %271 : vector<1x1x128xf32> to vector<1x128xf32>
    %c1_148 = arith.constant 1 : index
    %c0_149 = arith.constant 0 : index
    %c0_150 = arith.constant 0 : index
    %273 = vector.load %arg17[%c1_148, %c0_149, %c0_150] : memref<2x1x128xf32, #tpu.memory_space<vmem>>, vector<1x1x128xf32>
    %274 = vector.shape_cast %273 : vector<1x1x128xf32> to vector<1x128xf32>
    %cst_151 = arith.constant dense<0.000000e+00> : vector<8x128xf32>
    %275 = tpu.matmul %228, %268, %cst_151 {dimension_numbers = #tpu.dot_dimension_numbers<[1], [0], [0], [1], [0, 0, 1, 1], [], []>} : vector<8x256xf32>, vector<256x128xf32>, vector<8x128xf32> -> vector<8x128xf32>
    %276 = vector.broadcast %270 : vector<1x128xf32> to vector<8x128xf32>
    %277 = arith.addf %275, %276 : vector<8x128xf32>
    %cst_152 = arith.constant dense<0.000000e+00> : vector<8xf32>
    %278 = vector.multi_reduction <add>, %277, %cst_152 [1] : vector<8x128xf32> to vector<8xf32>
    %279 = vector.shape_cast %278 : vector<8xf32> to vector<8x1xf32>
    %cst_153 = arith.constant 1.280000e+02 : f32
    %280 = vector.broadcast %cst_153 : f32 to vector<8x1xf32>
    %281 = arith.divf %279, %280 : vector<8x1xf32>
    %282 = arith.mulf %277, %277 : vector<8x128xf32>
    %cst_154 = arith.constant dense<0.000000e+00> : vector<8xf32>
    %283 = vector.multi_reduction <add>, %282, %cst_154 [1] : vector<8x128xf32> to vector<8xf32>
    %284 = vector.shape_cast %283 : vector<8xf32> to vector<8x1xf32>
    %cst_155 = arith.constant 1.280000e+02 : f32
    %285 = vector.broadcast %cst_155 : f32 to vector<8x1xf32>
    %286 = arith.divf %284, %285 : vector<8x1xf32>
    %287 = arith.mulf %281, %281 : vector<8x1xf32>
    %288 = arith.subf %286, %287 : vector<8x1xf32>
    %289 = vector.broadcast %281 : vector<8x1xf32> to vector<8x128xf32>
    %290 = arith.subf %277, %289 : vector<8x128xf32>
    %cst_156 = arith.constant 9.99999974E-6 : f32
    %291 = vector.broadcast %cst_156 : f32 to vector<8x1xf32>
    %292 = arith.addf %288, %291 : vector<8x1xf32>
    %293 = math.rsqrt %292 : vector<8x1xf32>
    %294 = vector.broadcast %293 : vector<8x1xf32> to vector<8x128xf32>
    %295 = arith.mulf %290, %294 : vector<8x128xf32>
    %296 = vector.broadcast %272 : vector<1x128xf32> to vector<8x128xf32>
    %297 = arith.mulf %295, %296 : vector<8x128xf32>
    %298 = vector.broadcast %274 : vector<1x128xf32> to vector<8x128xf32>
    %299 = arith.addf %297, %298 : vector<8x128xf32>
    %cst_157 = arith.constant 0.000000e+00 : f32
    %300 = vector.broadcast %cst_157 : f32 to vector<8x128xf32>
    %301 = arith.cmpf ogt, %299, %300 : vector<8x128xf32>
    %cst_158 = arith.constant 0.00999999977 : f32
    %302 = vector.broadcast %cst_158 : f32 to vector<8x128xf32>
    %303 = arith.mulf %302, %299 : vector<8x128xf32>
    %304 = arith.select %301, %299, %303 : vector<8x128xi1>, vector<8x128xf32>
    %c0_159 = arith.constant 0 : index
    %c0_160 = arith.constant 0 : index
    %c0_161 = arith.constant 0 : index
    %305 = vector.load %arg18[%c0_159, %c0_160, %c0_161] : memref<2x128x2xf32, #tpu.memory_space<vmem>>, vector<1x128x2xf32>
    %306 = vector.shape_cast %305 : vector<1x128x2xf32> to vector<128x2xf32>
    %cst_162 = arith.constant dense<0.000000e+00> : vector<8x2xf32>
    %307 = tpu.matmul %266, %306, %cst_162 {dimension_numbers = #tpu.dot_dimension_numbers<[1], [0], [0], [1], [0, 0, 1, 1], [], []>} : vector<8x128xf32>, vector<128x2xf32>, vector<8x2xf32> -> vector<8x2xf32>
    %c1_163 = arith.constant 1 : index
    %c0_164 = arith.constant 0 : index
    %c0_165 = arith.constant 0 : index
    %308 = vector.load %arg18[%c1_163, %c0_164, %c0_165] : memref<2x128x2xf32, #tpu.memory_space<vmem>>, vector<1x128x2xf32>
    %309 = vector.shape_cast %308 : vector<1x128x2xf32> to vector<128x2xf32>
    %cst_166 = arith.constant dense<0.000000e+00> : vector<8x2xf32>
    %310 = tpu.matmul %304, %309, %cst_166 {dimension_numbers = #tpu.dot_dimension_numbers<[1], [0], [0], [1], [0, 0, 1, 1], [], []>} : vector<8x128xf32>, vector<128x2xf32>, vector<8x2xf32> -> vector<8x2xf32>
    %311 = arith.addf %307, %310 : vector<8x2xf32>
    %c0_167 = arith.constant 0 : index
    %c0_168 = arith.constant 0 : index
    %312 = vector.load %arg19[%c0_167, %c0_168] : memref<1x2xf32, #tpu.memory_space<vmem>>, vector<1x2xf32>
    %313 = vector.broadcast %312 : vector<1x2xf32> to vector<8x2xf32>
    %314 = arith.addf %311, %313 : vector<8x2xf32>
    %c0_169 = arith.constant 0 : index
    %c0_170 = arith.constant 0 : index
    %315 = vector.load %arg20[%c0_169, %c0_170] : memref<8x2xf32, #tpu.memory_space<vmem>>, vector<8x2xf32>
    tpu.vector_store %arg20[%c0_169, %c0_170], %314 {strides = array<i32>} : memref<8x2xf32, #tpu.memory_space<vmem>>, vector<8x2xf32>,
    return
  }
  func.func @transform_0(%arg0: i32) -> (i32, i32) {
    %c0_i32 = arith.constant 0 : i32
    %c0_i32_0 = arith.constant 0 : i32
    return %arg0, %c0_i32 : i32, i32
  }
  func.func @transform_1(%arg0: i32) -> (i32, i32, i32) {
    %c0_i32 = arith.constant 0 : i32
    %c0_i32_0 = arith.constant 0 : i32
    %c0_i32_1 = arith.constant 0 : i32
    %c0_i32_2 = arith.constant 0 : i32
    return %c0_i32, %c0_i32_0, %c0_i32_1 : i32, i32, i32
  }
  func.func @transform_2(%arg0: i32) -> (i32, i32, i32) {
    %c0_i32 = arith.constant 0 : i32
    %c0_i32_0 = arith.constant 0 : i32
    %c0_i32_1 = arith.constant 0 : i32
    %c0_i32_2 = arith.constant 0 : i32
    return %c0_i32, %c0_i32_0, %c0_i32_1 : i32, i32, i32
  }
  func.func @transform_3(%arg0: i32) -> (i32, i32, i32) {
    %c0_i32 = arith.constant 0 : i32
    %c0_i32_0 = arith.constant 0 : i32
    %c0_i32_1 = arith.constant 0 : i32
    %c0_i32_2 = arith.constant 0 : i32
    return %c0_i32, %c0_i32_0, %c0_i32_1 : i32, i32, i32
  }
  func.func @transform_4(%arg0: i32) -> (i32, i32, i32) {
    %c0_i32 = arith.constant 0 : i32
    %c0_i32_0 = arith.constant 0 : i32
    %c0_i32_1 = arith.constant 0 : i32
    %c0_i32_2 = arith.constant 0 : i32
    return %c0_i32, %c0_i32_0, %c0_i32_1 : i32, i32, i32
  }
  func.func @transform_5(%arg0: i32) -> (i32, i32, i32) {
    %c0_i32 = arith.constant 0 : i32
    %c0_i32_0 = arith.constant 0 : i32
    %c0_i32_1 = arith.constant 0 : i32
    %c0_i32_2 = arith.constant 0 : i32
    return %c0_i32, %c0_i32_0, %c0_i32_1 : i32, i32, i32
  }
  func.func @transform_6(%arg0: i32) -> (i32, i32, i32) {
    %c0_i32 = arith.constant 0 : i32
    %c0_i32_0 = arith.constant 0 : i32
    %c0_i32_1 = arith.constant 0 : i32
    %c0_i32_2 = arith.constant 0 : i32
    return %c0_i32, %c0_i32_0, %c0_i32_1 : i32, i32, i32
  }
  func.func @transform_7(%arg0: i32) -> (i32, i32, i32) {
    %c0_i32 = arith.constant 0 : i32
    %c0_i32_0 = arith.constant 0 : i32
    %c0_i32_1 = arith.constant 0 : i32
    %c0_i32_2 = arith.constant 0 : i32
    return %c0_i32, %c0_i32_0, %c0_i32_1 : i32, i32, i32
  }
  func.func @transform_8(%arg0: i32) -> (i32, i32, i32) {
    %c0_i32 = arith.constant 0 : i32
    %c0_i32_0 = arith.constant 0 : i32
    %c0_i32_1 = arith.constant 0 : i32
    %c0_i32_2 = arith.constant 0 : i32
    return %c0_i32, %c0_i32_0, %c0_i32_1 : i32, i32, i32
  }
  func.func @transform_9(%arg0: i32) -> (i32, i32, i32) {
    %c0_i32 = arith.constant 0 : i32
    %c0_i32_0 = arith.constant 0 : i32
    %c0_i32_1 = arith.constant 0 : i32
    %c0_i32_2 = arith.constant 0 : i32
    return %c0_i32, %c0_i32_0, %c0_i32_1 : i32, i32, i32
  }
  func.func @transform_10(%arg0: i32) -> (i32, i32, i32) {
    %c0_i32 = arith.constant 0 : i32
    %c0_i32_0 = arith.constant 0 : i32
    %c0_i32_1 = arith.constant 0 : i32
    %c0_i32_2 = arith.constant 0 : i32
    return %c0_i32, %c0_i32_0, %c0_i32_1 : i32, i32, i32
  }
  func.func @transform_11(%arg0: i32) -> (i32, i32, i32) {
    %c0_i32 = arith.constant 0 : i32
    %c0_i32_0 = arith.constant 0 : i32
    %c0_i32_1 = arith.constant 0 : i32
    %c0_i32_2 = arith.constant 0 : i32
    return %c0_i32, %c0_i32_0, %c0_i32_1 : i32, i32, i32
  }
  func.func @transform_12(%arg0: i32) -> (i32, i32, i32) {
    %c0_i32 = arith.constant 0 : i32
    %c0_i32_0 = arith.constant 0 : i32
    %c0_i32_1 = arith.constant 0 : i32
    %c0_i32_2 = arith.constant 0 : i32
    return %c0_i32, %c0_i32_0, %c0_i32_1 : i32, i32, i32
  }
  func.func @transform_13(%arg0: i32) -> (i32, i32, i32) {
    %c0_i32 = arith.constant 0 : i32
    %c0_i32_0 = arith.constant 0 : i32
    %c0_i32_1 = arith.constant 0 : i32
    %c0_i32_2 = arith.constant 0 : i32
    return %c0_i32, %c0_i32_0, %c0_i32_1 : i32, i32, i32
  }
  func.func @transform_14(%arg0: i32) -> (i32, i32, i32) {
    %c0_i32 = arith.constant 0 : i32
    %c0_i32_0 = arith.constant 0 : i32
    %c0_i32_1 = arith.constant 0 : i32
    %c0_i32_2 = arith.constant 0 : i32
    return %c0_i32, %c0_i32_0, %c0_i32_1 : i32, i32, i32
  }
  func.func @transform_15(%arg0: i32) -> (i32, i32, i32) {
    %c0_i32 = arith.constant 0 : i32
    %c0_i32_0 = arith.constant 0 : i32
    %c0_i32_1 = arith.constant 0 : i32
    %c0_i32_2 = arith.constant 0 : i32
    return %c0_i32, %c0_i32_0, %c0_i32_1 : i32, i32, i32
  }
  func.func @transform_16(%arg0: i32) -> (i32, i32, i32) {
    %c0_i32 = arith.constant 0 : i32
    %c0_i32_0 = arith.constant 0 : i32
    %c0_i32_1 = arith.constant 0 : i32
    %c0_i32_2 = arith.constant 0 : i32
    return %c0_i32, %c0_i32_0, %c0_i32_1 : i32, i32, i32
  }
  func.func @transform_17(%arg0: i32) -> (i32, i32, i32) {
    %c0_i32 = arith.constant 0 : i32
    %c0_i32_0 = arith.constant 0 : i32
    %c0_i32_1 = arith.constant 0 : i32
    %c0_i32_2 = arith.constant 0 : i32
    return %c0_i32, %c0_i32_0, %c0_i32_1 : i32, i32, i32
  }
  func.func @transform_18(%arg0: i32) -> (i32, i32) {
    %c0_i32 = arith.constant 0 : i32
    %c0_i32_0 = arith.constant 0 : i32
    %c0_i32_1 = arith.constant 0 : i32
    return %c0_i32, %c0_i32_0 : i32, i32
  }
  func.func @transform_19(%arg0: i32) -> (i32, i32) {
    %c0_i32 = arith.constant 0 : i32
    %c0_i32_0 = arith.constant 0 : i32
    return %arg0, %c0_i32 : i32, i32
  }
}

</mosaic_0001>

<llo_original>
// kernel: critic_forward.1
$region0: #{critic_forward.1}
  #allocation0 [shape = 'u32[]', space=smem, size = 0x4, offset = 0x4, fixed_abs, tag = 'smem constant byte address 0x4 - core index']
  #allocation1 [shape = 'u32[144,128]{1,0:T(1,128)}', space=vmem, size = 0x12000, scoped, tag = 'internal scratch']
  %s0 = inlined_call_operand.vmem [shape: f32[8,128], index: 0, kind: input, shape index: {}]
  %s1 = inlined_call_operand.hbm [shape: f32[2,128,512], index: 1, kind: input, shape index: {}]
  %s2 = inlined_call_operand.hbm [shape: f32[2,1,512], index: 2, kind: input, shape index: {}]
  %s3 = inlined_call_operand.hbm [shape: f32[2,1,512], index: 3, kind: input, shape index: {}]
  %s4 = inlined_call_operand.hbm [shape: f32[2,1,512], index: 4, kind: input, shape index: {}]
  %s5 = inlined_call_operand.hbm [shape: f32[2,512,384], index: 5, kind: input, shape index: {}]
  %s6 = inlined_call_operand.hbm [shape: f32[2,1,384], index: 6, kind: input, shape index: {}]
  %s7 = inlined_call_operand.hbm [shape: f32[2,1,384], index: 7, kind: input, shape index: {}]
  %s8 = inlined_call_operand.hbm [shape: f32[2,1,384], index: 8, kind: input, shape index: {}]
  %s9 = inlined_call_operand.hbm [shape: f32[2,384,256], index: 9, kind: input, shape index: {}]
  %s10 = inlined_call_operand.hbm [shape: f32[2,1,256], index: 10, kind: input, shape index: {}]
  %s11 = inlined_call_operand.hbm [shape: f32[2,1,256], index: 11, kind: input, shape index: {}]
  %s12 = inlined_call_operand.hbm [shape: f32[2,1,256], index: 12, kind: input, shape index: {}]
  %s13 = inlined_call_operand.hbm [shape: f32[2,256,128], index: 13, kind: input, shape index: {}]
  %s14 = inlined_call_operand.hbm [shape: f32[2,1,128], index: 14, kind: input, shape index: {}]
  %s15 = inlined_call_operand.hbm [shape: f32[2,1,128], index: 15, kind: input, shape index: {}]
  %s16 = inlined_call_operand.hbm [shape: f32[2,1,128], index: 16, kind: input, shape index: {}]
  %s17 = inlined_call_operand.vmem [shape: f32[2,128,2], index: 17, kind: input, shape index: {}]
  %s18 = inlined_call_operand.hbm [shape: f32[1,2], index: 18, kind: input, shape index: {}]
  %s19 = inlined_call_operand.vmem [shape: f32[8,2], index: 19, kind: output, shape index: {}]
  %s20 = sld [smem:[#allocation0]]
  $region154: #{critic_forward.1} parent=0
    _
  %s22 = ssub.s32 1, %s20
  %s23 = scalar_select 0, %s22, %s20
  $region1: #{critic_forward.1} parent=0
    #allocation2 [shape = 'u8[524288]{0}', space=vmem, size = 0x80000, scoped, tag = 'input window, operand 1, single buffered']
    #allocation3 [shape = 's32[1]{0}', space=sflag, size = 0x4, scoped, tag = 'scoped memory for critic_forward.1']
    #allocation4 [shape = 'u8[4096]{0}', space=vmem, size = 0x1000, scoped, tag = 'input window, operand 2, single buffered']
    #allocation5 [shape = 's32[1]{0}', space=sflag, size = 0x4, scoped, tag = 'scoped memory for critic_forward.1']
    #allocation6 [shape = 'u8[4096]{0}', space=vmem, size = 0x1000, scoped, tag = 'input window, operand 3, single buffered']
    #allocation7 [shape = 'u8[4096]{0}', space=vmem, size = 0x1000, scoped, tag = 'input window, operand 4, single buffered']
    #allocation8 [shape = 's32[1]{0}', space=sflag, size = 0x4, scoped, tag = 'scoped memory for critic_forward.1']
    #allocation9 [shape = 'u8[1572864]{0}', space=vmem, size = 0x180000, scoped, tag = 'input window, operand 5, single buffered']
    #allocation10 [shape = 'u8[3072]{0}', space=vmem, size = 0xc00, scoped, tag = 'input window, operand 6, single buffered']
    #allocation11 [shape = 's32[1]{0}', space=sflag, size = 0x4, scoped, tag = 'scoped memory for critic_forward.1']
    #allocation12 [shape = 'u8[3072]{0}', space=vmem, size = 0xc00, scoped, tag = 'input window, operand 7, single buffered']
    #allocation13 [shape = 'u8[3072]{0}', space=vmem, size = 0xc00, scoped, tag = 'input window, operand 8, single buffered']
    #allocation14 [shape = 's32[1]{0}', space=sflag, size = 0x4, scoped, tag = 'scoped memory for critic_forward.1']
    #allocation15 [shape = 'u8[786432]{0}', space=vmem, size = 0xc0000, scoped, tag = 'input window, operand 9, single buffered']
    #allocation16 [shape = 'u8[2048]{0}', space=vmem, size = 0x800, scoped, tag = 'input window, operand 10, single buffered']
    #allocation17 [shape = 's32[1]{0}', space=sflag, size = 0x4, scoped, tag = 'scoped memory for critic_forward.1']
    #allocation18 [shape = 'u8[2048]{0}', space=vmem, size = 0x800, scoped, tag = 'input window, operand 11, single buffered']
    #allocation19 [shape = 'u8[2048]{0}', space=vmem, size = 0x800, scoped, tag = 'input window, operand 12, single buffered']
    #allocation20 [shape = 's32[1]{0}', space=sflag, size = 0x4, scoped, tag = 'scoped memory for critic_forward.1']
    #allocation21 [shape = 'u8[262144]{0}', space=vmem, size = 0x40000, scoped, tag = 'input window, operand 13, single buffered']
    #allocation22 [shape = 'u8[1024]{0}', space=vmem, size = 0x400, scoped, tag = 'input window, operand 14, single buffered']
    #allocation23 [shape = 's32[1]{0}', space=sflag, size = 0x4, scoped, tag = 'scoped memory for critic_forward.1']
    #allocation24 [shape = 'u8[1024]{0}', space=vmem, size = 0x400, scoped, tag = 'input window, operand 15, single buffered']
    #allocation25 [shape = 'u8[1024]{0}', space=vmem, size = 0x400, scoped, tag = 'input window, operand 16, single buffered']
    #allocation26 [shape = 's32[1]{0}', space=sflag, size = 0x4, scoped, tag = 'scoped memory for critic_forward.1']
    #allocation27 [shape = 'u8[512]{0}', space=vmem, size = 0x400, scoped, tag = 'input window, operand 18, single buffered']
    %24 = vsyncpa [#allocation3], 0
    %25 = vsyncpa [#allocation5], 0
    %26 = vsyncpa [#allocation8], 0
    %27 = vsyncpa [#allocation11], 0
    %28 = vsyncpa [#allocation14], 0
    %29 = vsyncpa [#allocation17], 0
    %30 = vsyncpa [#allocation20], 0
    %31 = vsyncpa [#allocation23], 0
    %32 = vsyncpa [#allocation26], 0
    // Predicated region
    $region2: #{critic_forward.1} parent=1 // pred_check
      _
    $region3: #{critic_forward.1} parent=1 // pred_check_branch
      %34 = sbr.rel (0) target = $region5
    $region4: #{critic_forward.1} parent=1 // pred_region
      _
    $region5: #{critic_forward.1} parent=1 // pred_fallthru
      _
    // Predicated region
    $region6: #{critic_forward.1} parent=1 // pred_check
      _
    $region7: #{critic_forward.1} parent=1 // pred_check_branch
      %36 = sbr.rel (0) target = $region9
    $region8: #{critic_forward.1} parent=1 // pred_region
      %s38 = ssub.s32 16384, 16384
      %39 = vsyncadd [#allocation3], %s38
      %s40 = sshll.u32 [#allocation2], 4
      %s41 = int_to_ptr.vmem [resolvable:$true] %s40
      %46 = dma.hbm_to_vmem [thread:$0]  %s1, 16384, %s41, [#allocation3], 512, 512, 32
    $region9: #{critic_forward.1} parent=1 // pred_fallthru
      _
    // Predicated region
    $region10: #{critic_forward.1} parent=1 // pred_check
      _
    $region11: #{critic_forward.1} parent=1 // pred_check_branch
      %48 = sbr.rel (0) target = $region13
    $region12: #{critic_forward.1} parent=1 // pred_region
      %s50 = ssub.s32 128, 128
      %51 = vsyncadd [#allocation5], %s50
      %s52 = sshll.u32 [#allocation4], 4
      %s53 = int_to_ptr.vmem [resolvable:$true] %s52
      %58 = dma.hbm_to_vmem [thread:$0]  %s2, 128, %s53, [#allocation5], 64, 64, 4
    $region13: #{critic_forward.1} parent=1 // pred_fallthru
      _
    // Predicated region
    $region14: #{critic_forward.1} parent=1 // pred_check
      _
    $region15: #{critic_forward.1} parent=1 // pred_check_branch
      %60 = sbr.rel (0) target = $region17
    $region16: #{critic_forward.1} parent=1 // pred_region
      %s62 = ssub.s32 128, 128
      %63 = vsyncadd [#allocation5], %s62
      %s64 = sshll.u32 [#allocation6], 4
      %s65 = int_to_ptr.vmem [resolvable:$true] %s64
      %70 = dma.hbm_to_vmem [thread:$0]  %s3, 128, %s65, [#allocation5], 64, 64, 4
    $region17: #{critic_forward.1} parent=1 // pred_fallthru
      _
    // Predicated region
    $region18: #{critic_forward.1} parent=1 // pred_check
      _
    $region19: #{critic_forward.1} parent=1 // pred_check_branch
      %72 = sbr.rel (0) target = $region21
    $region20: #{critic_forward.1} parent=1 // pred_region
      %s74 = ssub.s32 128, 128
      %75 = vsyncadd [#allocation8], %s74
      %s76 = sshll.u32 [#allocation7], 4
      %s77 = int_to_ptr.vmem [resolvable:$true] %s76
      %82 = dma.hbm_to_vmem [thread:$0]  %s4, 128, %s77, [#allocation8], 64, 64, 4
    $region21: #{critic_forward.1} parent=1 // pred_fallthru
      _
    // Predicated region
    $region22: #{critic_forward.1} parent=1 // pred_check
      _
    $region23: #{critic_forward.1} parent=1 // pred_check_branch
      %84 = sbr.rel (0) target = $region25
    $region24: #{critic_forward.1} parent=1 // pred_region
      %s86 = ssub.s32 49152, 49152
      %87 = vsyncadd [#allocation8], %s86
      %s88 = sshll.u32 [#allocation9], 4
      %s89 = int_to_ptr.vmem [resolvable:$true] %s88
      %94 = dma.hbm_to_vmem [thread:$0]  %s5, 49152, %s89, [#allocation8], 384, 384, 24
    $region25: #{critic_forward.1} parent=1 // pred_fallthru
      _
    // Predicated region
    $region26: #{critic_forward.1} parent=1 // pred_check
      _
    $region27: #{critic_forward.1} parent=1 // pred_check_branch
      %96 = sbr.rel (0) target = $region29
    $region28: #{critic_forward.1} parent=1 // pred_region
      %s98 = ssub.s32 96, 96
      %99 = vsyncadd [#allocation11], %s98
      %s100 = sshll.u32 [#allocation10], 4
      %s101 = int_to_ptr.vmem [resolvable:$true] %s100
      %106 = dma.hbm_to_vmem [thread:$0]  %s6, 96, %s101, [#allocation11], 48, 48, 3
    $region29: #{critic_forward.1} parent=1 // pred_fallthru
      _
    // Predicated region
    $region30: #{critic_forward.1} parent=1 // pred_check
      _
    $region31: #{critic_forward.1} parent=1 // pred_check_branch
      %108 = sbr.rel (0) target = $region33
    $region32: #{critic_forward.1} parent=1 // pred_region
      %s110 = ssub.s32 96, 96
      %111 = vsyncadd [#allocation11], %s110
      %s112 = sshll.u32 [#allocation12], 4
      %s113 = int_to_ptr.vmem [resolvable:$true] %s112
      %118 = dma.hbm_to_vmem [thread:$0]  %s7, 96, %s113, [#allocation11], 48, 48, 3
    $region33: #{critic_forward.1} parent=1 // pred_fallthru
      _
    // Predicated region
    $region34: #{critic_forward.1} parent=1 // pred_check
      _
    $region35: #{critic_forward.1} parent=1 // pred_check_branch
      %120 = sbr.rel (0) target = $region37
    $region36: #{critic_forward.1} parent=1 // pred_region
      %s122 = ssub.s32 96, 96
      %123 = vsyncadd [#allocation14], %s122
      %s124 = sshll.u32 [#allocation13], 4
      %s125 = int_to_ptr.vmem [resolvable:$true] %s124
      %130 = dma.hbm_to_vmem [thread:$0]  %s8, 96, %s125, [#allocation14], 48, 48, 3
    $region37: #{critic_forward.1} parent=1 // pred_fallthru
      _
    // Predicated region
    $region38: #{critic_forward.1} parent=1 // pred_check
      _
    $region39: #{critic_forward.1} parent=1 // pred_check_branch
      %132 = sbr.rel (0) target = $region41
    $region40: #{critic_forward.1} parent=1 // pred_region
      %s134 = ssub.s32 24576, 24576
      %135 = vsyncadd [#allocation14], %s134
      %s136 = sshll.u32 [#allocation15], 4
      %s137 = int_to_ptr.vmem [resolvable:$true] %s136
      %142 = dma.hbm_to_vmem [thread:$0]  %s9, 24576, %s137, [#allocation14], 256, 256, 16
    $region41: #{critic_forward.1} parent=1 // pred_fallthru
      _
    // Predicated region
    $region42: #{critic_forward.1} parent=1 // pred_check
      _
    $region43: #{critic_forward.1} parent=1 // pred_check_branch
      %144 = sbr.rel (0) target = $region45
    $region44: #{critic_forward.1} parent=1 // pred_region
      %s146 = ssub.s32 64, 64
      %147 = vsyncadd [#allocation17], %s146
      %s148 = sshll.u32 [#allocation16], 4
      %s149 = int_to_ptr.vmem [resolvable:$true] %s148
      %154 = dma.hbm_to_vmem [thread:$0]  %s10, 64, %s149, [#allocation17], 32, 32, 2
    $region45: #{critic_forward.1} parent=1 // pred_fallthru
      _
    // Predicated region
    $region46: #{critic_forward.1} parent=1 // pred_check
      _
    $region47: #{critic_forward.1} parent=1 // pred_check_branch
      %156 = sbr.rel (0) target = $region49
    $region48: #{critic_forward.1} parent=1 // pred_region
      %s158 = ssub.s32 64, 64
      %159 = vsyncadd [#allocation17], %s158
      %s160 = sshll.u32 [#allocation18], 4
      %s161 = int_to_ptr.vmem [resolvable:$true] %s160
      %166 = dma.hbm_to_vmem [thread:$0]  %s11, 64, %s161, [#allocation17], 32, 32, 2
    $region49: #{critic_forward.1} parent=1 // pred_fallthru
      _
    // Predicated region
    $region50: #{critic_forward.1} parent=1 // pred_check
      _
    $region51: #{critic_forward.1} parent=1 // pred_check_branch
      %168 = sbr.rel (0) target = $region53
    $region52: #{critic_forward.1} parent=1 // pred_region
      %s170 = ssub.s32 64, 64
      %171 = vsyncadd [#allocation20], %s170
      %s172 = sshll.u32 [#allocation19], 4
      %s173 = int_to_ptr.vmem [resolvable:$true] %s172
      %178 = dma.hbm_to_vmem [thread:$0]  %s12, 64, %s173, [#allocation20], 32, 32, 2
    $region53: #{critic_forward.1} parent=1 // pred_fallthru
      _
    // Predicated region
    $region54: #{critic_forward.1} parent=1 // pred_check
      _
    $region55: #{critic_forward.1} parent=1 // pred_check_branch
      %180 = sbr.rel (0) target = $region57
    $region56: #{critic_forward.1} parent=1 // pred_region
      %s182 = ssub.s32 8192, 8192
      %183 = vsyncadd [#allocation20], %s182
      %s184 = sshll.u32 [#allocation21], 4
      %s185 = int_to_ptr.vmem [resolvable:$true] %s184
      %190 = dma.hbm_to_vmem [thread:$0]  %s13, 8192, %s185, [#allocation20], 128, 128, 8
    $region57: #{critic_forward.1} parent=1 // pred_fallthru
      _
    // Predicated region
    $region58: #{critic_forward.1} parent=1 // pred_check
      _
    $region59: #{critic_forward.1} parent=1 // pred_check_branch
      %192 = sbr.rel (0) target = $region61
    $region60: #{critic_forward.1} parent=1 // pred_region
      %s194 = ssub.s32 32, 32
      %195 = vsyncadd [#allocation23], %s194
      %s196 = sshll.u32 [#allocation22], 4
      %s197 = int_to_ptr.vmem [resolvable:$true] %s196
      %202 = dma.hbm_to_vmem [thread:$0]  %s14, 32, %s197, [#allocation23], 16, 16, 1
    $region61: #{critic_forward.1} parent=1 // pred_fallthru
      _
    // Predicated region
    $region62: #{critic_forward.1} parent=1 // pred_check
      _
    $region63: #{critic_forward.1} parent=1 // pred_check_branch
      %204 = sbr.rel (0) target = $region65
    $region64: #{critic_forward.1} parent=1 // pred_region
      %s206 = ssub.s32 32, 32
      %207 = vsyncadd [#allocation23], %s206
      %s208 = sshll.u32 [#allocation24], 4
      %s209 = int_to_ptr.vmem [resolvable:$true] %s208
      %214 = dma.hbm_to_vmem [thread:$0]  %s15, 32, %s209, [#allocation23], 16, 16, 1
    $region65: #{critic_forward.1} parent=1 // pred_fallthru
      _
    // Predicated region
    $region66: #{critic_forward.1} parent=1 // pred_check
      _
    $region67: #{critic_forward.1} parent=1 // pred_check_branch
      %216 = sbr.rel (0) target = $region69
    $region68: #{critic_forward.1} parent=1 // pred_region
      %s218 = ssub.s32 32, 32
      %219 = vsyncadd [#allocation26], %s218
      %s220 = sshll.u32 [#allocation25], 4
      %s221 = int_to_ptr.vmem [resolvable:$true] %s220
      %226 = dma.hbm_to_vmem [thread:$0]  %s16, 32, %s221, [#allocation26], 16, 16, 1
    $region69: #{critic_forward.1} parent=1 // pred_fallthru
      _
    // Predicated region
    $region70: #{critic_forward.1} parent=1 // pred_check
      _
    $region71: #{critic_forward.1} parent=1 // pred_check_branch
      %228 = sbr.rel (0) target = $region73
    $region72: #{critic_forward.1} parent=1 // pred_region
      _
    $region73: #{critic_forward.1} parent=1 // pred_fallthru
      _
    // Predicated region
    $region74: #{critic_forward.1} parent=1 // pred_check
      _
    $region75: #{critic_forward.1} parent=1 // pred_check_branch
      %230 = sbr.rel (0) target = $region77
    $region76: #{critic_forward.1} parent=1 // pred_region
      %s232 = ssub.s32 16, 16
      %233 = vsyncadd [#allocation26], %s232
      %s235 = sshll.u32 [#allocation27], 4
      %s236 = int_to_ptr.vmem [resolvable:$true] %s235
      %238 = dma.hbm_to_vmem [thread:$0]  %s18, 16, %s236, [#allocation26]
    $region77: #{critic_forward.1} parent=1 // pred_fallthru
      _
    // Predicated region
    $region78: #{critic_forward.1} parent=1 // pred_check
      _
    $region79: #{critic_forward.1} parent=1 // pred_check_branch
      %240 = sbr.rel (0) target = $region81
    $region80: #{critic_forward.1} parent=1 // pred_region
      %241 = dma.done [#allocation3], 16384
    $region81: #{critic_forward.1} parent=1 // pred_fallthru
      _
    // Predicated region
    $region82: #{critic_forward.1} parent=1 // pred_check
      _
    $region83: #{critic_forward.1} parent=1 // pred_check_branch
      %243 = sbr.rel (0) target = $region85
    $region84: #{critic_forward.1} parent=1 // pred_region
      %244 = dma.done [#allocation5], 128
    $region85: #{critic_forward.1} parent=1 // pred_fallthru
      _
    // Predicated region
    $region86: #{critic_forward.1} parent=1 // pred_check
      _
    $region87: #{critic_forward.1} parent=1 // pred_check_branch
      %246 = sbr.rel (0) target = $region89
    $region88: #{critic_forward.1} parent=1 // pred_region
      %247 = dma.done [#allocation5], 128
    $region89: #{critic_forward.1} parent=1 // pred_fallthru
      _
    // Predicated region
    $region90: #{critic_forward.1} parent=1 // pred_check
      _
    $region91: #{critic_forward.1} parent=1 // pred_check_branch
      %249 = sbr.rel (0) target = $region93
    $region92: #{critic_forward.1} parent=1 // pred_region
      %250 = dma.done [#allocation8], 128
    $region93: #{critic_forward.1} parent=1 // pred_fallthru
      _
    // Predicated region
    $region94: #{critic_forward.1} parent=1 // pred_check
      _
    $region95: #{critic_forward.1} parent=1 // pred_check_branch
      %252 = sbr.rel (0) target = $region97
    $region96: #{critic_forward.1} parent=1 // pred_region
      %253 = dma.done [#allocation8], 49152
    $region97: #{critic_forward.1} parent=1 // pred_fallthru
      _
    // Predicated region
    $region98: #{critic_forward.1} parent=1 // pred_check
      _
    $region99: #{critic_forward.1} parent=1 // pred_check_branch
      %255 = sbr.rel (0) target = $region101
    $region100: #{critic_forward.1} parent=1 // pred_region
      %256 = dma.done [#allocation11], 96
    $region101: #{critic_forward.1} parent=1 // pred_fallthru
      _
    // Predicated region
    $region102: #{critic_forward.1} parent=1 // pred_check
      _
    $region103: #{critic_forward.1} parent=1 // pred_check_branch
      %258 = sbr.rel (0) target = $region105
    $region104: #{critic_forward.1} parent=1 // pred_region
      %259 = dma.done [#allocation11], 96
    $region105: #{critic_forward.1} parent=1 // pred_fallthru
      _
    // Predicated region
    $region106: #{critic_forward.1} parent=1 // pred_check
      _
    $region107: #{critic_forward.1} parent=1 // pred_check_branch
      %261 = sbr.rel (0) target = $region109
    $region108: #{critic_forward.1} parent=1 // pred_region
      %262 = dma.done [#allocation14], 96
    $region109: #{critic_forward.1} parent=1 // pred_fallthru
      _
    // Predicated region
    $region110: #{critic_forward.1} parent=1 // pred_check
      _
    $region111: #{critic_forward.1} parent=1 // pred_check_branch
      %264 = sbr.rel (0) target = $region113
    $region112: #{critic_forward.1} parent=1 // pred_region
      %265 = dma.done [#allocation14], 24576
    $region113: #{critic_forward.1} parent=1 // pred_fallthru
      _
    // Predicated region
    $region114: #{critic_forward.1} parent=1 // pred_check
      _
    $region115: #{critic_forward.1} parent=1 // pred_check_branch
      %267 = sbr.rel (0) target = $region117
    $region116: #{critic_forward.1} parent=1 // pred_region
      %268 = dma.done [#allocation17], 64
    $region117: #{critic_forward.1} parent=1 // pred_fallthru
      _
    // Predicated region
    $region118: #{critic_forward.1} parent=1 // pred_check
      _
    $region119: #{critic_forward.1} parent=1 // pred_check_branch
      %270 = sbr.rel (0) target = $region121
    $region120: #{critic_forward.1} parent=1 // pred_region
      %271 = dma.done [#allocation17], 64
    $region121: #{critic_forward.1} parent=1 // pred_fallthru
      _
    // Predicated region
    $region122: #{critic_forward.1} parent=1 // pred_check
      _
    $region123: #{critic_forward.1} parent=1 // pred_check_branch
      %273 = sbr.rel (0) target = $region125
    $region124: #{critic_forward.1} parent=1 // pred_region
      %274 = dma.done [#allocation20], 64
    $region125: #{critic_forward.1} parent=1 // pred_fallthru
      _
    // Predicated region
    $region126: #{critic_forward.1} parent=1 // pred_check
      _
    $region127: #{critic_forward.1} parent=1 // pred_check_branch
      %276 = sbr.rel (0) target = $region129
    $region128: #{critic_forward.1} parent=1 // pred_region
      %277 = dma.done [#allocation20], 8192
    $region129: #{critic_forward.1} parent=1 // pred_fallthru
      _
    // Predicated region
    $region130: #{critic_forward.1} parent=1 // pred_check
      _
    $region131: #{critic_forward.1} parent=1 // pred_check_branch
      %279 = sbr.rel (0) target = $region133
    $region132: #{critic_forward.1} parent=1 // pred_region
      %280 = dma.done [#allocation23], 32
    $region133: #{critic_forward.1} parent=1 // pred_fallthru
      _
    // Predicated region
    $region134: #{critic_forward.1} parent=1 // pred_check
      _
    $region135: #{critic_forward.1} parent=1 // pred_check_branch
      %282 = sbr.rel (0) target = $region137
    $region136: #{critic_forward.1} parent=1 // pred_region
      %283 = dma.done [#allocation23], 32
    $region137: #{critic_forward.1} parent=1 // pred_fallthru
      _
    // Predicated region
    $region138: #{critic_forward.1} parent=1 // pred_check
      _
    $region139: #{critic_forward.1} parent=1 // pred_check_branch
      %285 = sbr.rel (0) target = $region141
    $region140: #{critic_forward.1} parent=1 // pred_region
      %286 = dma.done [#allocation26], 32
    $region141: #{critic_forward.1} parent=1 // pred_fallthru
      _
    // Predicated region
    $region142: #{critic_forward.1} parent=1 // pred_check
      _
    $region143: #{critic_forward.1} parent=1 // pred_check_branch
      %288 = sbr.rel (0) target = $region145
    $region144: #{critic_forward.1} parent=1 // pred_region
      %289 = dma.done [#allocation26], 16
    $region145: #{critic_forward.1} parent=1 // pred_fallthru
      _
    %v290 = vld [vmem:[%s0] sm:$0xff]
    %v291 = vld [vmem:[#allocation2] sm:$0xff]
    %v292 = vld [vmem:[#allocation2 + $0x8] sm:$0xff]
    %v293 = vld [vmem:[#allocation2 + $0x10] sm:$0xff]
    %v294 = vld [vmem:[#allocation2 + $0x18] sm:$0xff]
    %v295 = vld [vmem:[#allocation2 + $0x20] sm:$0xff]
    %v296 = vld [vmem:[#allocation2 + $0x28] sm:$0xff]
    %v297 = vld [vmem:[#allocation2 + $0x30] sm:$0xff]
    %v298 = vld [vmem:[#allocation2 + $0x38] sm:$0xff]
    %v299 = vld [vmem:[#allocation2 + $0x40] sm:$0xff]
    %v300 = vld [vmem:[#allocation2 + $0x48] sm:$0xff]
    %v301 = vld [vmem:[#allocation2 + $0x50] sm:$0xff]
    %v302 = vld [vmem:[#allocation2 + $0x58] sm:$0xff]
    %v303 = vld [vmem:[#allocation2 + $0x60] sm:$0xff]
    %v304 = vld [vmem:[#allocation2 + $0x68] sm:$0xff]
    %v305 = vld [vmem:[#allocation2 + $0x70] sm:$0xff]
    %v306 = vld [vmem:[#allocation2 + $0x78] sm:$0xff]
    %v307 = vld [vmem:[#allocation2 + $0x80] sm:$0xff]
    %v308 = vld [vmem:[#allocation2 + $0x88] sm:$0xff]
    %v309 = vld [vmem:[#allocation2 + $0x90] sm:$0xff]
    %v310 = vld [vmem:[#allocation2 + $0x98] sm:$0xff]
    %v311 = vld [vmem:[#allocation2 + $0xa0] sm:$0xff]
    %v312 = vld [vmem:[#allocation2 + $0xa8] sm:$0xff]
    %v313 = vld [vmem:[#allocation2 + $0xb0] sm:$0xff]
    %v314 = vld [vmem:[#allocation2 + $0xb8] sm:$0xff]
    %v315 = vld [vmem:[#allocation2 + $0xc0] sm:$0xff]
    %v316 = vld [vmem:[#allocation2 + $0xc8] sm:$0xff]
    %v317 = vld [vmem:[#allocation2 + $0xd0] sm:$0xff]
    %v318 = vld [vmem:[#allocation2 + $0xd8] sm:$0xff]
    %v319 = vld [vmem:[#allocation2 + $0xe0] sm:$0xff]
    %v320 = vld [vmem:[#allocation2 + $0xe8] sm:$0xff]
    %v321 = vld [vmem:[#allocation2 + $0xf0] sm:$0xff]
    %v322 = vld [vmem:[#allocation2 + $0xf8] sm:$0xff]
    %v323 = vld [vmem:[#allocation2 + $0x100] sm:$0xff]
    %v324 = vld [vmem:[#allocation2 + $0x108] sm:$0xff]
    %v325 = vld [vmem:[#allocation2 + $0x110] sm:$0xff]
    %v326 = vld [vmem:[#allocation2 + $0x118] sm:$0xff]
    %v327 = vld [vmem:[#allocation2 + $0x120] sm:$0xff]
    %v328 = vld [vmem:[#allocation2 + $0x128] sm:$0xff]
    %v329 = vld [vmem:[#allocation2 + $0x130] sm:$0xff]
    %v330 = vld [vmem:[#allocation2 + $0x138] sm:$0xff]
    %v331 = vld [vmem:[#allocation2 + $0x140] sm:$0xff]
    %v332 = vld [vmem:[#allocation2 + $0x148] sm:$0xff]
    %v333 = vld [vmem:[#allocation2 + $0x150] sm:$0xff]
    %v334 = vld [vmem:[#allocation2 + $0x158] sm:$0xff]
    %v335 = vld [vmem:[#allocation2 + $0x160] sm:$0xff]
    %v336 = vld [vmem:[#allocation2 + $0x168] sm:$0xff]
    %v337 = vld [vmem:[#allocation2 + $0x170] sm:$0xff]
    %v338 = vld [vmem:[#allocation2 + $0x178] sm:$0xff]
    %v339 = vld [vmem:[#allocation2 + $0x180] sm:$0xff]
    %v340 = vld [vmem:[#allocation2 + $0x188] sm:$0xff]
    %v341 = vld [vmem:[#allocation2 + $0x190] sm:$0xff]
    %v342 = vld [vmem:[#allocation2 + $0x198] sm:$0xff]
    %v343 = vld [vmem:[#allocation2 + $0x1a0] sm:$0xff]
    %v344 = vld [vmem:[#allocation2 + $0x1a8] sm:$0xff]
    %v345 = vld [vmem:[#allocation2 + $0x1b0] sm:$0xff]
    %v346 = vld [vmem:[#allocation2 + $0x1b8] sm:$0xff]
    %v347 = vld [vmem:[#allocation2 + $0x1c0] sm:$0xff]
    %v348 = vld [vmem:[#allocation2 + $0x1c8] sm:$0xff]
    %v349 = vld [vmem:[#allocation2 + $0x1d0] sm:$0xff]
    %v350 = vld [vmem:[#allocation2 + $0x1d8] sm:$0xff]
    %v351 = vld [vmem:[#allocation2 + $0x1e0] sm:$0xff]
    %v352 = vld [vmem:[#allocation2 + $0x1e8] sm:$0xff]
    %v353 = vld [vmem:[#allocation2 + $0x1f0] sm:$0xff]
    %v354 = vld [vmem:[#allocation2 + $0x1f8] sm:$0xff]
    %v355 = vld [vmem:[#allocation4] sm:$0xf]
    %v356 = vld [vmem:[#allocation6] sm:$0xf]
    %v357 = vld [vmem:[#allocation7] sm:$0xf]
    %v359 = vlaneseq
    %v360 = vshrl.u32 %v359, 7
    %v361 = vsub.s32 0, %v360
    %v362 = vrot.slane %v355, %v361
    %v363 = vlaneseq
    %v364 = vshrl.u32 %v363, 7
    %v365 = vsub.s32 1, %v364
    %v366 = vrot.slane %v355, %v365
    %v367 = vlaneseq
    %v368 = vshrl.u32 %v367, 7
    %v369 = vsub.s32 2, %v368
    %v370 = vrot.slane %v355, %v369
    %v371 = vlaneseq
    %v372 = vshrl.u32 %v371, 7
    %v373 = vsub.s32 3, %v372
    %v374 = vrot.slane %v355, %v373
    %379 = vmatprep.subr.mxu0 %v292
    %380 = vmatpush1.msra.mxu0 %v291
    %381 = vmatprep.subr.mxu0 %v296
    %382 = vmatpush1.msra.mxu0 %v295
    %383 = vmatprep.subr.mxu0 %v300
    %384 = vmatpush1.msra.mxu0 %v299
    %385 = vmatprep.subr.mxu0 %v304
    %386 = vmatpush1.msra.mxu0 %v303
    %387 = vmatprep.subr.mxu0 %v308
    %388 = vmatpush1.msra.mxu0 %v307
    %389 = vmatprep.subr.mxu0 %v312
    %390 = vmatpush1.msra.mxu0 %v311
    %391 = vmatprep.subr.mxu0 %v316
    %392 = vmatpush1.msra.mxu0 %v315
    %393 = vmatprep.subr.mxu0 %v320
    %394 = vmatpush1.msra.mxu0 %v319
    %395 = vmatprep.subr.mxu0 %v324
    %396 = vmatpush1.msra.mxu0 %v323
    %397 = vmatprep.subr.mxu0 %v328
    %398 = vmatpush1.msra.mxu0 %v327
    %399 = vmatprep.subr.mxu0 %v332
    %400 = vmatpush1.msra.mxu0 %v331
    %401 = vmatprep.subr.mxu0 %v336
    %402 = vmatpush1.msra.mxu0 %v335
    %403 = vmatprep.subr.mxu0 %v340
    %404 = vmatpush1.msra.mxu0 %v339
    %405 = vmatprep.subr.mxu0 %v344
    %406 = vmatpush1.msra.mxu0 %v343
    %407 = vmatprep.subr.mxu0 %v348
    %408 = vmatpush1.msra.mxu0 %v347
    %409 = vmatprep.subr.mxu0 %v352
    %410 = vmatpush1.msra.mxu0 %v351
    %411 = vmatprep.subr.mxu0 0.0
    %412 = vmatpush1.msra.mxu0 0.0
    %413 = vmatprep.subr.mxu0 0.0
    %414 = vmatpush1.msra.mxu0 0.0
    %415 = vmatprep.subr.mxu0 0.0
    %416 = vmatpush1.msra.mxu0 0.0
    %417 = vmatprep.subr.mxu0 0.0
    %418 = vmatpush1.msra.mxu0 0.0
    %419 = vmatprep.subr.mxu0 0.0
    %420 = vmatpush1.msra.mxu0 0.0
    %421 = vmatprep.subr.mxu0 0.0
    %422 = vmatpush1.msra.mxu0 0.0
    %423 = vmatprep.subr.mxu0 0.0
    %424 = vmatpush1.msra.mxu0 0.0
    %425 = vmatprep.subr.mxu0 0.0
    %426 = vmatpush1.msra.mxu0 0.0
    %427 = vmatprep.subr.mxu0 0.0
    %428 = vmatpush1.msra.mxu0 0.0
    %429 = vmatprep.subr.mxu0 0.0
    %430 = vmatpush1.msra.mxu0 0.0
    %431 = vmatprep.subr.mxu0 0.0
    %432 = vmatpush1.msra.mxu0 0.0
    %433 = vmatprep.subr.mxu0 0.0
    %434 = vmatpush1.msra.mxu0 0.0
    %435 = vmatprep.subr.mxu0 0.0
    %436 = vmatpush1.msra.mxu0 0.0
    %437 = vmatprep.subr.mxu0 0.0
    %438 = vmatpush1.msra.mxu0 0.0
    %439 = vmatprep.subr.mxu0 0.0
    %440 = vmatpush1.msra.mxu0 0.0
    %441 = vmatprep.subr.mxu0 0.0
    %442 = vmatpush1.msra.mxu0 0.0
    %443 = vmatprep.mubr.f32.mxu0 0.0
    %444 = vmatmul.mubr.f32.gmra.mrb[0].mxu0 %v290
    %v445 = vpop.f32.mrb[0].mxu0
    %v446 = vadd.f32 %v362, %v445
    %v447 = vpop.f32.mrb[0].mxu0
    %v448 = vadd.f32 %v366, %v447
    %449 = vdwg.mxu0
    %450 = vmatprep.subr.mxu0 %v294
    %451 = vmatpush1.msra.mxu0 %v293
    %452 = vmatprep.subr.mxu0 %v298
    %453 = vmatpush1.msra.mxu0 %v297
    %454 = vmatprep.subr.mxu0 %v302
    %455 = vmatpush1.msra.mxu0 %v301
    %456 = vmatprep.subr.mxu0 %v306
    %457 = vmatpush1.msra.mxu0 %v305
    %458 = vmatprep.subr.mxu0 %v310
    %459 = vmatpush1.msra.mxu0 %v309
    %460 = vmatprep.subr.mxu0 %v314
    %461 = vmatpush1.msra.mxu0 %v313
    %462 = vmatprep.subr.mxu0 %v318
    %463 = vmatpush1.msra.mxu0 %v317
    %464 = vmatprep.subr.mxu0 %v322
    %465 = vmatpush1.msra.mxu0 %v321
    %466 = vmatprep.subr.mxu0 %v326
    %467 = vmatpush1.msra.mxu0 %v325
    %468 = vmatprep.subr.mxu0 %v330
    %469 = vmatpush1.msra.mxu0 %v329
    %470 = vmatprep.subr.mxu0 %v334
    %471 = vmatpush1.msra.mxu0 %v333
    %472 = vmatprep.subr.mxu0 %v338
    %473 = vmatpush1.msra.mxu0 %v337
    %474 = vmatprep.subr.mxu0 %v342
    %475 = vmatpush1.msra.mxu0 %v341
    %476 = vmatprep.subr.mxu0 %v346
    %477 = vmatpush1.msra.mxu0 %v345
    %478 = vmatprep.subr.mxu0 %v350
    %479 = vmatpush1.msra.mxu0 %v349
    %480 = vmatprep.subr.mxu0 %v354
    %481 = vmatpush1.msra.mxu0 %v353
    %482 = vmatprep.subr.mxu0 0.0
    %483 = vmatpush1.msra.mxu0 0.0
    %484 = vmatprep.subr.mxu0 0.0
    %485 = vmatpush1.msra.mxu0 0.0
    %486 = vmatprep.subr.mxu0 0.0
    %487 = vmatpush1.msra.mxu0 0.0
    %488 = vmatprep.subr.mxu0 0.0
    %489 = vmatpush1.msra.mxu0 0.0
    %490 = vmatprep.subr.mxu0 0.0
    %491 = vmatpush1.msra.mxu0 0.0
    %492 = vmatprep.subr.mxu0 0.0
    %493 = vmatpush1.msra.mxu0 0.0
    %494 = vmatprep.subr.mxu0 0.0
    %495 = vmatpush1.msra.mxu0 0.0
    %496 = vmatprep.subr.mxu0 0.0
    %497 = vmatpush1.msra.mxu0 0.0
    %498 = vmatprep.subr.mxu0 0.0
    %499 = vmatpush1.msra.mxu0 0.0
    %500 = vmatprep.subr.mxu0 0.0
    %501 = vmatpush1.msra.mxu0 0.0
    %502 = vmatprep.subr.mxu0 0.0
    %503 = vmatpush1.msra.mxu0 0.0
    %504 = vmatprep.subr.mxu0 0.0
    %505 = vmatpush1.msra.mxu0 0.0
    %506 = vmatprep.subr.mxu0 0.0
    %507 = vmatpush1.msra.mxu0 0.0
    %508 = vmatprep.subr.mxu0 0.0
    %509 = vmatpush1.msra.mxu0 0.0
    %510 = vmatprep.subr.mxu0 0.0
    %511 = vmatpush1.msra.mxu0 0.0
    %512 = vmatprep.subr.mxu0 0.0
    %513 = vmatpush1.msra.mxu0 0.0
    %514 = vmatprep.mubr.f32.mxu0 0.0
    %515 = vmatmul.mubr.f32.gmra.mrb[0].mxu0 %v290
    %v516 = vpop.f32.mrb[0].mxu0
    %v517 = vadd.f32 %v370, %v516
    %v518 = vpop.f32.mrb[0].mxu0
    %v519 = vadd.f32 %v374, %v518
    %520 = vdwg.mxu0
    %v521 = vadd.f32 %v446, %v448
    %v522 = vadd.f32 %v521, %v517
    %v523 = vadd.f32 %v522, %v519
    %524 = vadd.xlane.f32.xlu0 %v523
    %v525 = vpop.xlane.xlu0 %524
    %v526 = vrcp.pop 512.0
    %v527 = vmul.f32 %v525, %v526
    %v528 = vmul.f32 %v446, %v446
    %v529 = vmul.f32 %v448, %v448
    %v530 = vmul.f32 %v517, %v517
    %v531 = vmul.f32 %v519, %v519
    %v532 = vadd.f32 %v528, %v529
    %v533 = vadd.f32 %v532, %v530
    %v534 = vadd.f32 %v533, %v531
    %535 = vadd.xlane.f32.xlu0 %v534
    %v536 = vpop.xlane.xlu0 %535
    %v537 = vmul.f32 %v536, %v526
    %v538 = vmul.f32 %v527, %v527
    %v539 = vsub.f32 %v537, %v538
    %v540 = vsub.f32 %v446, %v527
    %v541 = vsub.f32 %v448, %v527
    %v542 = vsub.f32 %v517, %v527
    %v543 = vsub.f32 %v519, %v527
    %v544 = vadd.f32 %v539, 1e-05
    %v545 = vrsqrt.pop %v544
    %v546 = vmul.f32 %v540, %v545
    %v547 = vmul.f32 %v541, %v545
    %v548 = vmul.f32 %v542, %v545
    %v549 = vmul.f32 %v543, %v545
    %v551 = vlaneseq
    %v552 = vshrl.u32 %v551, 7
    %v553 = vsub.s32 0, %v552
    %v554 = vrot.slane %v356, %v553
    %v555 = vlaneseq
    %v556 = vshrl.u32 %v555, 7
    %v557 = vsub.s32 1, %v556
    %v558 = vrot.slane %v356, %v557
    %v559 = vlaneseq
    %v560 = vshrl.u32 %v559, 7
    %v561 = vsub.s32 2, %v560
    %v562 = vrot.slane %v356, %v561
    %v563 = vlaneseq
    %v564 = vshrl.u32 %v563, 7
    %v565 = vsub.s32 3, %v564
    %v566 = vrot.slane %v356, %v565
    %v571 = vmul.f32 %v546, %v554
    %v572 = vmul.f32 %v547, %v558
    %v573 = vmul.f32 %v548, %v562
    %v574 = vmul.f32 %v549, %v566
    %v576 = vlaneseq
    %v577 = vshrl.u32 %v576, 7
    %v578 = vsub.s32 0, %v577
    %v579 = vrot.slane %v357, %v578
    %v580 = vlaneseq
    %v581 = vshrl.u32 %v580, 7
    %v582 = vsub.s32 1, %v581
    %v583 = vrot.slane %v357, %v582
    %v584 = vlaneseq
    %v585 = vshrl.u32 %v584, 7
    %v586 = vsub.s32 2, %v585
    %v587 = vrot.slane %v357, %v586
    %v588 = vlaneseq
    %v589 = vshrl.u32 %v588, 7
    %v590 = vsub.s32 3, %v589
    %v591 = vrot.slane %v357, %v590
    %v596 = vadd.f32 %v571, %v579
    %v597 = vadd.f32 %v572, %v583
    %v598 = vadd.f32 %v573, %v587
    %v599 = vadd.f32 %v574, %v591
    %vm600 = vcmp.gt.f32.partialorder %v596, 0.0
    %vm601 = vcmp.gt.f32.partialorder %v597, 0.0
    %vm602 = vcmp.gt.f32.partialorder %v598, 0.0
    %vm603 = vcmp.gt.f32.partialorder %v599, 0.0
    %v604 = vmul.f32 %v596, 0.01
    %v605 = vmul.f32 %v597, 0.01
    %v606 = vmul.f32 %v598, 0.01
    %v607 = vmul.f32 %v599, 0.01
    %v608 = vsel %vm600, %v596, %v604
    %v609 = vsel %vm601, %v597, %v605
    %v610 = vsel %vm602, %v598, %v606
    %v611 = vsel %vm603, %v599, %v607
    %s612 = scalar_lea.vmem [#allocation2], 512
    %v613 = vld [vmem:[%s612] sm:$0xff]
    %v614 = vld [vmem:[%s612 + $0x8] sm:$0xff]
    %v615 = vld [vmem:[%s612 + $0x10] sm:$0xff]
    %v616 = vld [vmem:[%s612 + $0x18] sm:$0xff]
    %v617 = vld [vmem:[%s612 + $0x20] sm:$0xff]
    %v618 = vld [vmem:[%s612 + $0x28] sm:$0xff]
    %v619 = vld [vmem:[%s612 + $0x30] sm:$0xff]
    %v620 = vld [vmem:[%s612 + $0x38] sm:$0xff]
    %v621 = vld [vmem:[%s612 + $0x40] sm:$0xff]
    %v622 = vld [vmem:[%s612 + $0x48] sm:$0xff]
    %v623 = vld [vmem:[%s612 + $0x50] sm:$0xff]
    %v624 = vld [vmem:[%s612 + $0x58] sm:$0xff]
    %v625 = vld [vmem:[%s612 + $0x60] sm:$0xff]
    %v626 = vld [vmem:[%s612 + $0x68] sm:$0xff]
    %v627 = vld [vmem:[%s612 + $0x70] sm:$0xff]
    %v628 = vld [vmem:[%s612 + $0x78] sm:$0xff]
    %v629 = vld [vmem:[%s612 + $0x80] sm:$0xff]
    %v630 = vld [vmem:[%s612 + $0x88] sm:$0xff]
    %v631 = vld [vmem:[%s612 + $0x90] sm:$0xff]
    %v632 = vld [vmem:[%s612 + $0x98] sm:$0xff]
    %v633 = vld [vmem:[%s612 + $0xa0] sm:$0xff]
    %v634 = vld [vmem:[%s612 + $0xa8] sm:$0xff]
    %v635 = vld [vmem:[%s612 + $0xb0] sm:$0xff]
    %v636 = vld [vmem:[%s612 + $0xb8] sm:$0xff]
    %v637 = vld [vmem:[%s612 + $0xc0] sm:$0xff]
    %v638 = vld [vmem:[%s612 + $0xc8] sm:$0xff]
    %v639 = vld [vmem:[%s612 + $0xd0] sm:$0xff]
    %v640 = vld [vmem:[%s612 + $0xd8] sm:$0xff]
    %v641 = vld [vmem:[%s612 + $0xe0] sm:$0xff]
    %v642 = vld [vmem:[%s612 + $0xe8] sm:$0xff]
    %v643 = vld [vmem:[%s612 + $0xf0] sm:$0xff]
    %v644 = vld [vmem:[%s612 + $0xf8] sm:$0xff]
    %v645 = vld [vmem:[%s612 + $0x100] sm:$0xff]
    %v646 = vld [vmem:[%s612 + $0x108] sm:$0xff]
    %v647 = vld [vmem:[%s612 + $0x110] sm:$0xff]
    %v648 = vld [vmem:[%s612 + $0x118] sm:$0xff]
    %v649 = vld [vmem:[%s612 + $0x120] sm:$0xff]
    %v650 = vld [vmem:[%s612 + $0x128] sm:$0xff]
    %v651 = vld [vmem:[%s612 + $0x130] sm:$0xff]
    %v652 = vld [vmem:[%s612 + $0x138] sm:$0xff]
    %v653 = vld [vmem:[%s612 + $0x140] sm:$0xff]
    %v654 = vld [vmem:[%s612 + $0x148] sm:$0xff]
    %v655 = vld [vmem:[%s612 + $0x150] sm:$0xff]
    %v656 = vld [vmem:[%s612 + $0x158] sm:$0xff]
    %v657 = vld [vmem:[%s612 + $0x160] sm:$0xff]
    %v658 = vld [vmem:[%s612 + $0x168] sm:$0xff]
    %v659 = vld [vmem:[%s612 + $0x170] sm:$0xff]
    %v660 = vld [vmem:[%s612 + $0x178] sm:$0xff]
    %v661 = vld [vmem:[%s612 + $0x180] sm:$0xff]
    %v662 = vld [vmem:[%s612 + $0x188] sm:$0xff]
    %v663 = vld [vmem:[%s612 + $0x190] sm:$0xff]
    %v664 = vld [vmem:[%s612 + $0x198] sm:$0xff]
    %v665 = vld [vmem:[%s612 + $0x1a0] sm:$0xff]
    %v666 = vld [vmem:[%s612 + $0x1a8] sm:$0xff]
    %v667 = vld [vmem:[%s612 + $0x1b0] sm:$0xff]
    %v668 = vld [vmem:[%s612 + $0x1b8] sm:$0xff]
    %v669 = vld [vmem:[%s612 + $0x1c0] sm:$0xff]
    %v670 = vld [vmem:[%s612 + $0x1c8] sm:$0xff]
    %v671 = vld [vmem:[%s612 + $0x1d0] sm:$0xff]
    %v672 = vld [vmem:[%s612 + $0x1d8] sm:$0xff]
    %v673 = vld [vmem:[%s612 + $0x1e0] sm:$0xff]
    %v674 = vld [vmem:[%s612 + $0x1e8] sm:$0xff]
    %v675 = vld [vmem:[%s612 + $0x1f0] sm:$0xff]
    %v676 = vld [vmem:[%s612 + $0x1f8] sm:$0xff]
    %s677 = scalar_lea.vmem [#allocation4], 4
    %v678 = vld [vmem:[%s677] sm:$0xf]
    %s679 = scalar_lea.vmem [#allocation6], 4
    %v680 = vld [vmem:[%s679] sm:$0xf]
    %s681 = scalar_lea.vmem [#allocation7], 4
    %v682 = vld [vmem:[%s681] sm:$0xf]
    %v684 = vlaneseq
    %v685 = vshrl.u32 %v684, 7
    %v686 = vsub.s32 0, %v685
    %v687 = vrot.slane %v678, %v686
    %v688 = vlaneseq
    %v689 = vshrl.u32 %v688, 7
    %v690 = vsub.s32 1, %v689
    %v691 = vrot.slane %v678, %v690
    %v692 = vlaneseq
    %v693 = vshrl.u32 %v692, 7
    %v694 = vsub.s32 2, %v693
    %v695 = vrot.slane %v678, %v694
    %v696 = vlaneseq
    %v697 = vshrl.u32 %v696, 7
    %v698 = vsub.s32 3, %v697
    %v699 = vrot.slane %v678, %v698
    %704 = vmatprep.subr.mxu0 %v614
    %705 = vmatpush1.msra.mxu0 %v613
    %706 = vmatprep.subr.mxu0 %v618
    %707 = vmatpush1.msra.mxu0 %v617
    %708 = vmatprep.subr.mxu0 %v622
    %709 = vmatpush1.msra.mxu0 %v621
    %710 = vmatprep.subr.mxu0 %v626
    %711 = vmatpush1.msra.mxu0 %v625
    %712 = vmatprep.subr.mxu0 %v630
    %713 = vmatpush1.msra.mxu0 %v629
    %714 = vmatprep.subr.mxu0 %v634
    %715 = vmatpush1.msra.mxu0 %v633
    %716 = vmatprep.subr.mxu0 %v638
    %717 = vmatpush1.msra.mxu0 %v637
    %718 = vmatprep.subr.mxu0 %v642
    %719 = vmatpush1.msra.mxu0 %v641
    %720 = vmatprep.subr.mxu0 %v646
    %721 = vmatpush1.msra.mxu0 %v645
    %722 = vmatprep.subr.mxu0 %v650
    %723 = vmatpush1.msra.mxu0 %v649
    %724 = vmatprep.subr.mxu0 %v654
    %725 = vmatpush1.msra.mxu0 %v653
    %726 = vmatprep.subr.mxu0 %v658
    %727 = vmatpush1.msra.mxu0 %v657
    %728 = vmatprep.subr.mxu0 %v662
    %729 = vmatpush1.msra.mxu0 %v661
    %730 = vmatprep.subr.mxu0 %v666
    %731 = vmatpush1.msra.mxu0 %v665
    %732 = vmatprep.subr.mxu0 %v670
    %733 = vmatpush1.msra.mxu0 %v669
    %734 = vmatprep.subr.mxu0 %v674
    %735 = vmatpush1.msra.mxu0 %v673
    %736 = vmatprep.subr.mxu0 0.0
    %737 = vmatpush1.msra.mxu0 0.0
    %738 = vmatprep.subr.mxu0 0.0
    %739 = vmatpush1.msra.mxu0 0.0
    %740 = vmatprep.subr.mxu0 0.0
    %741 = vmatpush1.msra.mxu0 0.0
    %742 = vmatprep.subr.mxu0 0.0
    %743 = vmatpush1.msra.mxu0 0.0
    %744 = vmatprep.subr.mxu0 0.0
    %745 = vmatpush1.msra.mxu0 0.0
    %746 = vmatprep.subr.mxu0 0.0
    %747 = vmatpush1.msra.mxu0 0.0
    %748 = vmatprep.subr.mxu0 0.0
    %749 = vmatpush1.msra.mxu0 0.0
    %750 = vmatprep.subr.mxu0 0.0
    %751 = vmatpush1.msra.mxu0 0.0
    %752 = vmatprep.subr.mxu0 0.0
    %753 = vmatpush1.msra.mxu0 0.0
    %754 = vmatprep.subr.mxu0 0.0
    %755 = vmatpush1.msra.mxu0 0.0
    %756 = vmatprep.subr.mxu0 0.0
    %757 = vmatpush1.msra.mxu0 0.0
    %758 = vmatprep.subr.mxu0 0.0
    %759 = vmatpush1.msra.mxu0 0.0
    %760 = vmatprep.subr.mxu0 0.0
    %761 = vmatpush1.msra.mxu0 0.0
    %762 = vmatprep.subr.mxu0 0.0
    %763 = vmatpush1.msra.mxu0 0.0
    %764 = vmatprep.subr.mxu0 0.0
    %765 = vmatpush1.msra.mxu0 0.0
    %766 = vmatprep.subr.mxu0 0.0
    %767 = vmatpush1.msra.mxu0 0.0
    %768 = vmatprep.mubr.f32.mxu0 0.0
    %769 = vmatmul.mubr.f32.gmra.mrb[0].mxu0 %v290
    %v770 = vpop.f32.mrb[0].mxu0
    %v771 = vadd.f32 %v687, %v770
    %v772 = vpop.f32.mrb[0].mxu0
    %v773 = vadd.f32 %v691, %v772
    %774 = vdwg.mxu0
    %775 = vmatprep.subr.mxu0 %v616
    %776 = vmatpush1.msra.mxu0 %v615
    %777 = vmatprep.subr.mxu0 %v620
    %778 = vmatpush1.msra.mxu0 %v619
    %779 = vmatprep.subr.mxu0 %v624
    %780 = vmatpush1.msra.mxu0 %v623
    %781 = vmatprep.subr.mxu0 %v628
    %782 = vmatpush1.msra.mxu0 %v627
    %783 = vmatprep.subr.mxu0 %v632
    %784 = vmatpush1.msra.mxu0 %v631
    %785 = vmatprep.subr.mxu0 %v636
    %786 = vmatpush1.msra.mxu0 %v635
    %787 = vmatprep.subr.mxu0 %v640
    %788 = vmatpush1.msra.mxu0 %v639
    %789 = vmatprep.subr.mxu0 %v644
    %790 = vmatpush1.msra.mxu0 %v643
    %791 = vmatprep.subr.mxu0 %v648
    %792 = vmatpush1.msra.mxu0 %v647
    %793 = vmatprep.subr.mxu0 %v652
    %794 = vmatpush1.msra.mxu0 %v651
    %795 = vmatprep.subr.mxu0 %v656
    %796 = vmatpush1.msra.mxu0 %v655
    %797 = vmatprep.subr.mxu0 %v660
    %798 = vmatpush1.msra.mxu0 %v659
    %799 = vmatprep.subr.mxu0 %v664
    %800 = vmatpush1.msra.mxu0 %v663
    %801 = vmatprep.subr.mxu0 %v668
    %802 = vmatpush1.msra.mxu0 %v667
    %803 = vmatprep.subr.mxu0 %v672
    %804 = vmatpush1.msra.mxu0 %v671
    %805 = vmatprep.subr.mxu0 %v676
    %806 = vmatpush1.msra.mxu0 %v675
    %807 = vmatprep.subr.mxu0 0.0
    %808 = vmatpush1.msra.mxu0 0.0
    %809 = vmatprep.subr.mxu0 0.0
    %810 = vmatpush1.msra.mxu0 0.0
    %811 = vmatprep.subr.mxu0 0.0
    %812 = vmatpush1.msra.mxu0 0.0
    %813 = vmatprep.subr.mxu0 0.0
    %814 = vmatpush1.msra.mxu0 0.0
    %815 = vmatprep.subr.mxu0 0.0
    %816 = vmatpush1.msra.mxu0 0.0
    %817 = vmatprep.subr.mxu0 0.0
    %818 = vmatpush1.msra.mxu0 0.0
    %819 = vmatprep.subr.mxu0 0.0
    %820 = vmatpush1.msra.mxu0 0.0
    %821 = vmatprep.subr.mxu0 0.0
    %822 = vmatpush1.msra.mxu0 0.0
    %823 = vmatprep.subr.mxu0 0.0
    %824 = vmatpush1.msra.mxu0 0.0
    %825 = vmatprep.subr.mxu0 0.0
    %826 = vmatpush1.msra.mxu0 0.0
    %827 = vmatprep.subr.mxu0 0.0
    %828 = vmatpush1.msra.mxu0 0.0
    %829 = vmatprep.subr.mxu0 0.0
    %830 = vmatpush1.msra.mxu0 0.0
    %831 = vmatprep.subr.mxu0 0.0
    %832 = vmatpush1.msra.mxu0 0.0
    %833 = vmatprep.subr.mxu0 0.0
    %834 = vmatpush1.msra.mxu0 0.0
    %835 = vmatprep.subr.mxu0 0.0
    %836 = vmatpush1.msra.mxu0 0.0
    %837 = vmatprep.subr.mxu0 0.0
    %838 = vmatpush1.msra.mxu0 0.0
    %839 = vmatprep.mubr.f32.mxu0 0.0
    %840 = vmatmul.mubr.f32.gmra.mrb[0].mxu0 %v290
    %v841 = vpop.f32.mrb[0].mxu0
    %v842 = vadd.f32 %v695, %v841
    %v843 = vpop.f32.mrb[0].mxu0
    %v844 = vadd.f32 %v699, %v843
    %845 = vdwg.mxu0
    %v846 = vadd.f32 %v771, %v773
    %v847 = vadd.f32 %v846, %v842
    %v848 = vadd.f32 %v847, %v844
    %849 = vadd.xlane.f32.xlu0 %v848
    %v850 = vpop.xlane.xlu0 %849
    %v851 = vmul.f32 %v850, %v526
    %v852 = vmul.f32 %v771, %v771
    %v853 = vmul.f32 %v773, %v773
    %v854 = vmul.f32 %v842, %v842
    %v855 = vmul.f32 %v844, %v844
    %v856 = vadd.f32 %v852, %v853
    %v857 = vadd.f32 %v856, %v854
    %v858 = vadd.f32 %v857, %v855
    %859 = vadd.xlane.f32.xlu0 %v858
    %v860 = vpop.xlane.xlu0 %859
    %v861 = vmul.f32 %v860, %v526
    %v862 = vmul.f32 %v851, %v851
    %v863 = vsub.f32 %v861, %v862
    %v864 = vsub.f32 %v771, %v851
    %v865 = vsub.f32 %v773, %v851
    %v866 = vsub.f32 %v842, %v851
    %v867 = vsub.f32 %v844, %v851
    %v868 = vadd.f32 %v863, 1e-05
    %v869 = vrsqrt.pop %v868
    %v870 = vmul.f32 %v864, %v869
    %v871 = vmul.f32 %v865, %v869
    %v872 = vmul.f32 %v866, %v869
    %v873 = vmul.f32 %v867, %v869
    %v875 = vlaneseq
    %v876 = vshrl.u32 %v875, 7
    %v877 = vsub.s32 0, %v876
    %v878 = vrot.slane %v680, %v877
    %v879 = vlaneseq
    %v880 = vshrl.u32 %v879, 7
    %v881 = vsub.s32 1, %v880
    %v882 = vrot.slane %v680, %v881
    %v883 = vlaneseq
    %v884 = vshrl.u32 %v883, 7
    %v885 = vsub.s32 2, %v884
    %v886 = vrot.slane %v680, %v885
    %v887 = vlaneseq
    %v888 = vshrl.u32 %v887, 7
    %v889 = vsub.s32 3, %v888
    %v890 = vrot.slane %v680, %v889
    %v895 = vmul.f32 %v870, %v878
    %v896 = vmul.f32 %v871, %v882
    %v897 = vmul.f32 %v872, %v886
    %v898 = vmul.f32 %v873, %v890
    %v900 = vlaneseq
    %v901 = vshrl.u32 %v900, 7
    %v902 = vsub.s32 0, %v901
    %v903 = vrot.slane %v682, %v902
    %v904 = vlaneseq
    %v905 = vshrl.u32 %v904, 7
    %v906 = vsub.s32 1, %v905
    %v907 = vrot.slane %v682, %v906
    %v908 = vlaneseq
    %v909 = vshrl.u32 %v908, 7
    %v910 = vsub.s32 2, %v909
    %v911 = vrot.slane %v682, %v910
    %v912 = vlaneseq
    %v913 = vshrl.u32 %v912, 7
    %v914 = vsub.s32 3, %v913
    %v915 = vrot.slane %v682, %v914
    %v920 = vadd.f32 %v895, %v903
    %v921 = vadd.f32 %v896, %v907
    %v922 = vadd.f32 %v897, %v911
    %v923 = vadd.f32 %v898, %v915
    %vm924 = vcmp.gt.f32.partialorder %v920, 0.0
    %vm925 = vcmp.gt.f32.partialorder %v921, 0.0
    %vm926 = vcmp.gt.f32.partialorder %v922, 0.0
    %vm927 = vcmp.gt.f32.partialorder %v923, 0.0
    %v928 = vmul.f32 %v920, 0.01
    %v929 = vmul.f32 %v921, 0.01
    %v930 = vmul.f32 %v922, 0.01
    %v931 = vmul.f32 %v923, 0.01
    %v932 = vsel %vm924, %v920, %v928
    %v933 = vsel %vm925, %v921, %v929
    %v934 = vsel %vm926, %v922, %v930
    %v935 = vsel %vm927, %v923, %v931
    %v936 = vld [vmem:[#allocation9] sm:$0xff]
    %v937 = vld [vmem:[#allocation9 + $0x8] sm:$0xff]
    %v938 = vld [vmem:[#allocation9 + $0x10] sm:$0xff]
    %v939 = vld [vmem:[#allocation9 + $0x18] sm:$0xff]
    %v940 = vld [vmem:[#allocation9 + $0x20] sm:$0xff]
    %v941 = vld [vmem:[#allocation9 + $0x28] sm:$0xff]
    %v942 = vld [vmem:[#allocation9 + $0x30] sm:$0xff]
    %v943 = vld [vmem:[#allocation9 + $0x38] sm:$0xff]
    %v944 = vld [vmem:[#allocation9 + $0x40] sm:$0xff]
    %v945 = vld [vmem:[#allocation9 + $0x48] sm:$0xff]
    %v946 = vld [vmem:[#allocation9 + $0x50] sm:$0xff]
    %v947 = vld [vmem:[#allocation9 + $0x58] sm:$0xff]
    %v948 = vld [vmem:[#allocation9 + $0x60] sm:$0xff]
    %v949 = vld [vmem:[#allocation9 + $0x68] sm:$0xff]
    %v950 = vld [vmem:[#allocation9 + $0x70] sm:$0xff]
    %v951 = vld [vmem:[#allocation9 + $0x78] sm:$0xff]
    %v952 = vld [vmem:[#allocation9 + $0x80] sm:$0xff]
    %v953 = vld [vmem:[#allocation9 + $0x88] sm:$0xff]
    %v954 = vld [vmem:[#allocation9 + $0x90] sm:$0xff]
    %v955 = vld [vmem:[#allocation9 + $0x98] sm:$0xff]
    %v956 = vld [vmem:[#allocation9 + $0xa0] sm:$0xff]
    %v957 = vld [vmem:[#allocation9 + $0xa8] sm:$0xff]
    %v958 = vld [vmem:[#allocation9 + $0xb0] sm:$0xff]
    %v959 = vld [vmem:[#allocation9 + $0xb8] sm:$0xff]
    %v960 = vld [vmem:[#allocation9 + $0xc0] sm:$0xff]
    %v961 = vld [vmem:[#allocation9 + $0xc8] sm:$0xff]
    %v962 = vld [vmem:[#allocation9 + $0xd0] sm:$0xff]
    %v963 = vld [vmem:[#allocation9 + $0xd8] sm:$0xff]
    %v964 = vld [vmem:[#allocation9 + $0xe0] sm:$0xff]
    %v965 = vld [vmem:[#allocation9 + $0xe8] sm:$0xff]
    %v966 = vld [vmem:[#allocation9 + $0xf0] sm:$0xff]
    %v967 = vld [vmem:[#allocation9 + $0xf8] sm:$0xff]
    %v968 = vld [vmem:[#allocation9 + $0x100] sm:$0xff]
    %v969 = vld [vmem:[#allocation9 + $0x108] sm:$0xff]
    %v970 = vld [vmem:[#allocation9 + $0x110] sm:$0xff]
    %v971 = vld [vmem:[#allocation9 + $0x118] sm:$0xff]
    %v972 = vld [vmem:[#allocation9 + $0x120] sm:$0xff]
    %v973 = vld [vmem:[#allocation9 + $0x128] sm:$0xff]
    %v974 = vld [vmem:[#allocation9 + $0x130] sm:$0xff]
    %v975 = vld [vmem:[#allocation9 + $0x138] sm:$0xff]
    %v976 = vld [vmem:[#allocation9 + $0x140] sm:$0xff]
    %v977 = vld [vmem:[#allocation9 + $0x148] sm:$0xff]
    %v978 = vld [vmem:[#allocation9 + $0x150] sm:$0xff]
    %v979 = vld [vmem:[#allocation9 + $0x158] sm:$0xff]
    %v980 = vld [vmem:[#allocation9 + $0x160] sm:$0xff]
    %v981 = vld [vmem:[#allocation9 + $0x168] sm:$0xff]
    %v982 = vld [vmem:[#allocation9 + $0x170] sm:$0xff]
    %v983 = vld [vmem:[#allocation9 + $0x178] sm:$0xff]
    %v984 = vld [vmem:[#allocation9 + $0x180] sm:$0xff]
    %v985 = vld [vmem:[#allocation9 + $0x188] sm:$0xff]
    %v986 = vld [vmem:[#allocation9 + $0x190] sm:$0xff]
    %v987 = vld [vmem:[#allocation9 + $0x198] sm:$0xff]
    %v988 = vld [vmem:[#allocation9 + $0x1a0] sm:$0xff]
    %v989 = vld [vmem:[#allocation9 + $0x1a8] sm:$0xff]
    %v990 = vld [vmem:[#allocation9 + $0x1b0] sm:$0xff]
    %v991 = vld [vmem:[#allocation9 + $0x1b8] sm:$0xff]
    %v992 = vld [vmem:[#allocation9 + $0x1c0] sm:$0xff]
    %v993 = vld [vmem:[#allocation9 + $0x1c8] sm:$0xff]
    %v994 = vld [vmem:[#allocation9 + $0x1d0] sm:$0xff]
    %v995 = vld [vmem:[#allocation9 + $0x1d8] sm:$0xff]
    %v996 = vld [vmem:[#allocation9 + $0x1e0] sm:$0xff]
    %v997 = vld [vmem:[#allocation9 + $0x1e8] sm:$0xff]
    %v998 = vld [vmem:[#allocation9 + $0x1f0] sm:$0xff]
    %v999 = vld [vmem:[#allocation9 + $0x1f8] sm:$0xff]
    %v1000 = vld [vmem:[#allocation9 + $0x200] sm:$0xff]
    %v1001 = vld [vmem:[#allocation9 + $0x208] sm:$0xff]
    %v1002 = vld [vmem:[#allocation9 + $0x210] sm:$0xff]
    %v1003 = vld [vmem:[#allocation9 + $0x218] sm:$0xff]
    %v1004 = vld [vmem:[#allocation9 + $0x220] sm:$0xff]
    %v1005 = vld [vmem:[#allocation9 + $0x228] sm:$0xff]
    %v1006 = vld [vmem:[#allocation9 + $0x230] sm:$0xff]
    %v1007 = vld [vmem:[#allocation9 + $0x238] sm:$0xff]
    %v1008 = vld [vmem:[#allocation9 + $0x240] sm:$0xff]
    %v1009 = vld [vmem:[#allocation9 + $0x248] sm:$0xff]
    %v1010 = vld [vmem:[#allocation9 + $0x250] sm:$0xff]
    %v1011 = vld [vmem:[#allocation9 + $0x258] sm:$0xff]
    %v1012 = vld [vmem:[#allocation9 + $0x260] sm:$0xff]
    %v1013 = vld [vmem:[#allocation9 + $0x268] sm:$0xff]
    %v1014 = vld [vmem:[#allocation9 + $0x270] sm:$0xff]
    %v1015 = vld [vmem:[#allocation9 + $0x278] sm:$0xff]
    %v1016 = vld [vmem:[#allocation9 + $0x280] sm:$0xff]
    %v1017 = vld [vmem:[#allocation9 + $0x288] sm:$0xff]
    %v1018 = vld [vmem:[#allocation9 + $0x290] sm:$0xff]
    %v1019 = vld [vmem:[#allocation9 + $0x298] sm:$0xff]
    %v1020 = vld [vmem:[#allocation9 + $0x2a0] sm:$0xff]
    %v1021 = vld [vmem:[#allocation9 + $0x2a8] sm:$0xff]
    %v1022 = vld [vmem:[#allocation9 + $0x2b0] sm:$0xff]
    %v1023 = vld [vmem:[#allocation9 + $0x2b8] sm:$0xff]
    %v1024 = vld [vmem:[#allocation9 + $0x2c0] sm:$0xff]
    %v1025 = vld [vmem:[#allocation9 + $0x2c8] sm:$0xff]
    %v1026 = vld [vmem:[#allocation9 + $0x2d0] sm:$0xff]
    %v1027 = vld [vmem:[#allocation9 + $0x2d8] sm:$0xff]
    %v1028 = vld [vmem:[#allocation9 + $0x2e0] sm:$0xff]
    %v1029 = vld [vmem:[#allocation9 + $0x2e8] sm:$0xff]
    %v1030 = vld [vmem:[#allocation9 + $0x2f0] sm:$0xff]
    %v1031 = vld [vmem:[#allocation9 + $0x2f8] sm:$0xff]
    %v1032 = vld [vmem:[#allocation9 + $0x300] sm:$0xff]
    %v1033 = vld [vmem:[#allocation9 + $0x308] sm:$0xff]
    %v1034 = vld [vmem:[#allocation9 + $0x310] sm:$0xff]
    %v1035 = vld [vmem:[#allocation9 + $0x318] sm:$0xff]
    %v1036 = vld [vmem:[#allocation9 + $0x320] sm:$0xff]
    %v1037 = vld [vmem:[#allocation9 + $0x328] sm:$0xff]
    %v1038 = vld [vmem:[#allocation9 + $0x330] sm:$0xff]
    %v1039 = vld [vmem:[#allocation9 + $0x338] sm:$0xff]
    %v1040 = vld [vmem:[#allocation9 + $0x340] sm:$0xff]
    %v1041 = vld [vmem:[#allocation9 + $0x348] sm:$0xff]
    %v1042 = vld [vmem:[#allocation9 + $0x350] sm:$0xff]
    %v1043 = vld [vmem:[#allocation9 + $0x358] sm:$0xff]
    %v1044 = vld [vmem:[#allocation9 + $0x360] sm:$0xff]
    %v1045 = vld [vmem:[#allocation9 + $0x368] sm:$0xff]
    %v1046 = vld [vmem:[#allocation9 + $0x370] sm:$0xff]
    %v1047 = vld [vmem:[#allocation9 + $0x378] sm:$0xff]
    %v1048 = vld [vmem:[#allocation9 + $0x380] sm:$0xff]
    %v1049 = vld [vmem:[#allocation9 + $0x388] sm:$0xff]
    %v1050 = vld [vmem:[#allocation9 + $0x390] sm:$0xff]
    %v1051 = vld [vmem:[#allocation9 + $0x398] sm:$0xff]
    %v1052 = vld [vmem:[#allocation9 + $0x3a0] sm:$0xff]
    %v1053 = vld [vmem:[#allocation9 + $0x3a8] sm:$0xff]
    %v1054 = vld [vmem:[#allocation9 + $0x3b0] sm:$0xff]
    %v1055 = vld [vmem:[#allocation9 + $0x3b8] sm:$0xff]
    %v1056 = vld [vmem:[#allocation9 + $0x3c0] sm:$0xff]
    %v1057 = vld [vmem:[#allocation9 + $0x3c8] sm:$0xff]
    %v1058 = vld [vmem:[#allocation9 + $0x3d0] sm:$0xff]
    %v1059 = vld [vmem:[#allocation9 + $0x3d8] sm:$0xff]
    %v1060 = vld [vmem:[#allocation9 + $0x3e0] sm:$0xff]
    %v1061 = vld [vmem:[#allocation9 + $0x3e8] sm:$0xff]
    %v1062 = vld [vmem:[#allocation9 + $0x3f0] sm:$0xff]
    %v1063 = vld [vmem:[#allocation9 + $0x3f8] sm:$0xff]
    %v1064 = vld [vmem:[#allocation9 + $0x400] sm:$0xff]
    %v1065 = vld [vmem:[#allocation9 + $0x408] sm:$0xff]
    %v1066 = vld [vmem:[#allocation9 + $0x410] sm:$0xff]
    %v1067 = vld [vmem:[#allocation9 + $0x418] sm:$0xff]
    %v1068 = vld [vmem:[#allocation9 + $0x420] sm:$0xff]
    %v1069 = vld [vmem:[#allocation9 + $0x428] sm:$0xff]
    %v1070 = vld [vmem:[#allocation9 + $0x430] sm:$0xff]
    %v1071 = vld [vmem:[#allocation9 + $0x438] sm:$0xff]
    %v1072 = vld [vmem:[#allocation9 + $0x440] sm:$0xff]
    %v1073 = vld [vmem:[#allocation9 + $0x448] sm:$0xff]
    %v1074 = vld [vmem:[#allocation9 + $0x450] sm:$0xff]
    %v1075 = vld [vmem:[#allocation9 + $0x458] sm:$0xff]
    %v1076 = vld [vmem:[#allocation9 + $0x460] sm:$0xff]
    %v1077 = vld [vmem:[#allocation9 + $0x468] sm:$0xff]
    %v1078 = vld [vmem:[#allocation9 + $0x470] sm:$0xff]
    %v1079 = vld [vmem:[#allocation9 + $0x478] sm:$0xff]
    %v1080 = vld [vmem:[#allocation9 + $0x480] sm:$0xff]
    %v1081 = vld [vmem:[#allocation9 + $0x488] sm:$0xff]
    %v1082 = vld [vmem:[#allocation9 + $0x490] sm:$0xff]
    %v1083 = vld [vmem:[#allocation9 + $0x498] sm:$0xff]
    %v1084 = vld [vmem:[#allocation9 + $0x4a0] sm:$0xff]
    %v1085 = vld [vmem:[#allocation9 + $0x4a8] sm:$0xff]
    %v1086 = vld [vmem:[#allocation9 + $0x4b0] sm:$0xff]
    %v1087 = vld [vmem:[#allocation9 + $0x4b8] sm:$0xff]
    %v1088 = vld [vmem:[#allocation9 + $0x4c0] sm:$0xff]
    %v1089 = vld [vmem:[#allocation9 + $0x4c8] sm:$0xff]
    %v1090 = vld [vmem:[#allocation9 + $0x4d0] sm:$0xff]
    %v1091 = vld [vmem:[#allocation9 + $0x4d8] sm:$0xff]
    %v1092 = vld [vmem:[#allocation9 + $0x4e0] sm:$0xff]
    %v1093 = vld [vmem:[#allocation9 + $0x4e8] sm:$0xff]
    %v1094 = vld [vmem:[#allocation9 + $0x4f0] sm:$0xff]
    %v1095 = vld [vmem:[#allocation9 + $0x4f8] sm:$0xff]
    %v1096 = vld [vmem:[#allocation9 + $0x500] sm:$0xff]
    %v1097 = vld [vmem:[#allocation9 + $0x508] sm:$0xff]
    %v1098 = vld [vmem:[#allocation9 + $0x510] sm:$0xff]
    %v1099 = vld [vmem:[#allocation9 + $0x518] sm:$0xff]
    %v1100 = vld [vmem:[#allocation9 + $0x520] sm:$0xff]
    %v1101 = vld [vmem:[#allocation9 + $0x528] sm:$0xff]
    %v1102 = vld [vmem:[#allocation9 + $0x530] sm:$0xff]
    %v1103 = vld [vmem:[#allocation9 + $0x538] sm:$0xff]
    %v1104 = vld [vmem:[#allocation9 + $0x540] sm:$0xff]
    %v1105 = vld [vmem:[#allocation9 + $0x548] sm:$0xff]
    %v1106 = vld [vmem:[#allocation9 + $0x550] sm:$0xff]
    %v1107 = vld [vmem:[#allocation9 + $0x558] sm:$0xff]
    %v1108 = vld [vmem:[#allocation9 + $0x560] sm:$0xff]
    %v1109 = vld [vmem:[#allocation9 + $0x568] sm:$0xff]
    %v1110 = vld [vmem:[#allocation9 + $0x570] sm:$0xff]
    %v1111 = vld [vmem:[#allocation9 + $0x578] sm:$0xff]
    %v1112 = vld [vmem:[#allocation9 + $0x580] sm:$0xff]
    %v1113 = vld [vmem:[#allocation9 + $0x588] sm:$0xff]
    %v1114 = vld [vmem:[#allocation9 + $0x590] sm:$0xff]
    %v1115 = vld [vmem:[#allocation9 + $0x598] sm:$0xff]
    %v1116 = vld [vmem:[#allocation9 + $0x5a0] sm:$0xff]
    %v1117 = vld [vmem:[#allocation9 + $0x5a8] sm:$0xff]
    %v1118 = vld [vmem:[#allocation9 + $0x5b0] sm:$0xff]
    %v1119 = vld [vmem:[#allocation9 + $0x5b8] sm:$0xff]
    %v1120 = vld [vmem:[#allocation9 + $0x5c0] sm:$0xff]
    %v1121 = vld [vmem:[#allocation9 + $0x5c8] sm:$0xff]
    %v1122 = vld [vmem:[#allocation9 + $0x5d0] sm:$0xff]
    %v1123 = vld [vmem:[#allocation9 + $0x5d8] sm:$0xff]
    %v1124 = vld [vmem:[#allocation9 + $0x5e0] sm:$0xff]
    %v1125 = vld [vmem:[#allocation9 + $0x5e8] sm:$0xff]
    %v1126 = vld [vmem:[#allocation9 + $0x5f0] sm:$0xff]
    %v1127 = vld [vmem:[#allocation9 + $0x5f8] sm:$0xff]
    %v1128 = vld [vmem:[#allocation10] sm:$0x7]
    %v1129 = vld [vmem:[#allocation12] sm:$0x7]
    %v1130 = vld [vmem:[#allocation13] sm:$0x7]
    %v1132 = vlaneseq
    %v1133 = vshrl.u32 %v1132, 7
    %v1134 = vsub.s32 0, %v1133
    %v1135 = vrot.slane %v1128, %v1134
    %v1136 = vlaneseq
    %v1137 = vshrl.u32 %v1136, 7
    %v1138 = vsub.s32 1, %v1137
    %v1139 = vrot.slane %v1128, %v1138
    %v1140 = vlaneseq
    %v1141 = vshrl.u32 %v1140, 7
    %v1142 = vsub.s32 2, %v1141
    %v1143 = vrot.slane %v1128, %v1142
    %1147 = vmatprep.subr.mxu0 %v937
    %1148 = vmatpush1.msra.mxu0 %v936
    %1149 = vmatprep.subr.mxu0 %v940
    %1150 = vmatpush1.msra.mxu0 %v939
    %1151 = vmatprep.subr.mxu0 %v943
    %1152 = vmatpush1.msra.mxu0 %v942
    %1153 = vmatprep.subr.mxu0 %v946
    %1154 = vmatpush1.msra.mxu0 %v945
    %1155 = vmatprep.subr.mxu0 %v949
    %1156 = vmatpush1.msra.mxu0 %v948
    %1157 = vmatprep.subr.mxu0 %v952
    %1158 = vmatpush1.msra.mxu0 %v951
    %1159 = vmatprep.subr.mxu0 %v955
    %1160 = vmatpush1.msra.mxu0 %v954
    %1161 = vmatprep.subr.mxu0 %v958
    %1162 = vmatpush1.msra.mxu0 %v957
    %1163 = vmatprep.subr.mxu0 %v961
    %1164 = vmatpush1.msra.mxu0 %v960
    %1165 = vmatprep.subr.mxu0 %v964
    %1166 = vmatpush1.msra.mxu0 %v963
    %1167 = vmatprep.subr.mxu0 %v967
    %1168 = vmatpush1.msra.mxu0 %v966
    %1169 = vmatprep.subr.mxu0 %v970
    %1170 = vmatpush1.msra.mxu0 %v969
    %1171 = vmatprep.subr.mxu0 %v973
    %1172 = vmatpush1.msra.mxu0 %v972
    %1173 = vmatprep.subr.mxu0 %v976
    %1174 = vmatpush1.msra.mxu0 %v975
    %1175 = vmatprep.subr.mxu0 %v979
    %1176 = vmatpush1.msra.mxu0 %v978
    %1177 = vmatprep.subr.mxu0 %v982
    %1178 = vmatpush1.msra.mxu0 %v981
    %1179 = vmatprep.subr.mxu0 %v985
    %1180 = vmatpush1.msra.mxu0 %v984
    %1181 = vmatprep.subr.mxu0 %v988
    %1182 = vmatpush1.msra.mxu0 %v987
    %1183 = vmatprep.subr.mxu0 %v991
    %1184 = vmatpush1.msra.mxu0 %v990
    %1185 = vmatprep.subr.mxu0 %v994
    %1186 = vmatpush1.msra.mxu0 %v993
    %1187 = vmatprep.subr.mxu0 %v997
    %1188 = vmatpush1.msra.mxu0 %v996
    %1189 = vmatprep.subr.mxu0 %v1000
    %1190 = vmatpush1.msra.mxu0 %v999
    %1191 = vmatprep.subr.mxu0 %v1003
    %1192 = vmatpush1.msra.mxu0 %v1002
    %1193 = vmatprep.subr.mxu0 %v1006
    %1194 = vmatpush1.msra.mxu0 %v1005
    %1195 = vmatprep.subr.mxu0 %v1009
    %1196 = vmatpush1.msra.mxu0 %v1008
    %1197 = vmatprep.subr.mxu0 %v1012
    %1198 = vmatpush1.msra.mxu0 %v1011
    %1199 = vmatprep.subr.mxu0 %v1015
    %1200 = vmatpush1.msra.mxu0 %v1014
    %1201 = vmatprep.subr.mxu0 %v1018
    %1202 = vmatpush1.msra.mxu0 %v1017
    %1203 = vmatprep.subr.mxu0 %v1021
    %1204 = vmatpush1.msra.mxu0 %v1020
    %1205 = vmatprep.subr.mxu0 %v1024
    %1206 = vmatpush1.msra.mxu0 %v1023
    %1207 = vmatprep.subr.mxu0 %v1027
    %1208 = vmatpush1.msra.mxu0 %v1026
    %1209 = vmatprep.subr.mxu0 %v1030
    %1210 = vmatpush1.msra.mxu0 %v1029
    %1211 = vmatprep.mubr.f32.mxu0 %v609
    %1212 = vmatmul.mubr.f32.gmra.mrb[0].mxu0 %v608
    %v1213 = vpop.f32.mrb[0].mxu0
    %v1214 = vadd.f32 %v1135, %v1213
    %v1215 = vpop.f32.mrb[0].mxu0
    %v1216 = vadd.f32 %v1139, %v1215
    %1217 = vdwg.mxu0
    %1218 = vmatprep.subr.mxu0 %v1033
    %1219 = vmatpush1.msra.mxu0 %v1032
    %1220 = vmatprep.subr.mxu0 %v1036
    %1221 = vmatpush1.msra.mxu0 %v1035
    %1222 = vmatprep.subr.mxu0 %v1039
    %1223 = vmatpush1.msra.mxu0 %v1038
    %1224 = vmatprep.subr.mxu0 %v1042
    %1225 = vmatpush1.msra.mxu0 %v1041
    %1226 = vmatprep.subr.mxu0 %v1045
    %1227 = vmatpush1.msra.mxu0 %v1044
    %1228 = vmatprep.subr.mxu0 %v1048
    %1229 = vmatpush1.msra.mxu0 %v1047
    %1230 = vmatprep.subr.mxu0 %v1051
    %1231 = vmatpush1.msra.mxu0 %v1050
    %1232 = vmatprep.subr.mxu0 %v1054
    %1233 = vmatpush1.msra.mxu0 %v1053
    %1234 = vmatprep.subr.mxu0 %v1057
    %1235 = vmatpush1.msra.mxu0 %v1056
    %1236 = vmatprep.subr.mxu0 %v1060
    %1237 = vmatpush1.msra.mxu0 %v1059
    %1238 = vmatprep.subr.mxu0 %v1063
    %1239 = vmatpush1.msra.mxu0 %v1062
    %1240 = vmatprep.subr.mxu0 %v1066
    %1241 = vmatpush1.msra.mxu0 %v1065
    %1242 = vmatprep.subr.mxu0 %v1069
    %1243 = vmatpush1.msra.mxu0 %v1068
    %1244 = vmatprep.subr.mxu0 %v1072
    %1245 = vmatpush1.msra.mxu0 %v1071
    %1246 = vmatprep.subr.mxu0 %v1075
    %1247 = vmatpush1.msra.mxu0 %v1074
    %1248 = vmatprep.subr.mxu0 %v1078
    %1249 = vmatpush1.msra.mxu0 %v1077
    %1250 = vmatprep.subr.mxu0 %v1081
    %1251 = vmatpush1.msra.mxu0 %v1080
    %1252 = vmatprep.subr.mxu0 %v1084
    %1253 = vmatpush1.msra.mxu0 %v1083
    %1254 = vmatprep.subr.mxu0 %v1087
    %1255 = vmatpush1.msra.mxu0 %v1086
    %1256 = vmatprep.subr.mxu0 %v1090
    %1257 = vmatpush1.msra.mxu0 %v1089
    %1258 = vmatprep.subr.mxu0 %v1093
    %1259 = vmatpush1.msra.mxu0 %v1092
    %1260 = vmatprep.subr.mxu0 %v1096
    %1261 = vmatpush1.msra.mxu0 %v1095
    %1262 = vmatprep.subr.mxu0 %v1099
    %1263 = vmatpush1.msra.mxu0 %v1098
    %1264 = vmatprep.subr.mxu0 %v1102
    %1265 = vmatpush1.msra.mxu0 %v1101
    %1266 = vmatprep.subr.mxu0 %v1105
    %1267 = vmatpush1.msra.mxu0 %v1104
    %1268 = vmatprep.subr.mxu0 %v1108
    %1269 = vmatpush1.msra.mxu0 %v1107
    %1270 = vmatprep.subr.mxu0 %v1111
    %1271 = vmatpush1.msra.mxu0 %v1110
    %1272 = vmatprep.subr.mxu0 %v1114
    %1273 = vmatpush1.msra.mxu0 %v1113
    %1274 = vmatprep.subr.mxu0 %v1117
    %1275 = vmatpush1.msra.mxu0 %v1116
    %1276 = vmatprep.subr.mxu0 %v1120
    %1277 = vmatpush1.msra.mxu0 %v1119
    %1278 = vmatprep.subr.mxu0 %v1123
    %1279 = vmatpush1.msra.mxu0 %v1122
    %1280 = vmatprep.subr.mxu0 %v1126
    %1281 = vmatpush1.msra.mxu0 %v1125
    %1282 = vmatprep.mubr.f32.mxu0 %v611
    %1283 = vmatmul.mubr.f32.gmra.mrb[0].mxu0 %v610
    %v1284 = vpop.f32.mrb[0].mxu0
    %v1285 = vadd.f32 %v1214, %v1284
    %v1286 = vpop.f32.mrb[0].mxu0
    %v1287 = vadd.f32 %v1216, %v1286
    %1288 = vdwg.mxu0
    %1289 = vmatprep.subr.mxu0 0.0
    %1290 = vmatpush1.msra.mxu0 %v938
    %1291 = vmatprep.subr.mxu0 0.0
    %1292 = vmatpush1.msra.mxu0 %v941
    %1293 = vmatprep.subr.mxu0 0.0
    %1294 = vmatpush1.msra.mxu0 %v944
    %1295 = vmatprep.subr.mxu0 0.0
    %1296 = vmatpush1.msra.mxu0 %v947
    %1297 = vmatprep.subr.mxu0 0.0
    %1298 = vmatpush1.msra.mxu0 %v950
    %1299 = vmatprep.subr.mxu0 0.0
    %1300 = vmatpush1.msra.mxu0 %v953
    %1301 = vmatprep.subr.mxu0 0.0
    %1302 = vmatpush1.msra.mxu0 %v956
    %1303 = vmatprep.subr.mxu0 0.0
    %1304 = vmatpush1.msra.mxu0 %v959
    %1305 = vmatprep.subr.mxu0 0.0
    %1306 = vmatpush1.msra.mxu0 %v962
    %1307 = vmatprep.subr.mxu0 0.0
    %1308 = vmatpush1.msra.mxu0 %v965
    %1309 = vmatprep.subr.mxu0 0.0
    %1310 = vmatpush1.msra.mxu0 %v968
    %1311 = vmatprep.subr.mxu0 0.0
    %1312 = vmatpush1.msra.mxu0 %v971
    %1313 = vmatprep.subr.mxu0 0.0
    %1314 = vmatpush1.msra.mxu0 %v974
    %1315 = vmatprep.subr.mxu0 0.0
    %1316 = vmatpush1.msra.mxu0 %v977
    %1317 = vmatprep.subr.mxu0 0.0
    %1318 = vmatpush1.msra.mxu0 %v980
    %1319 = vmatprep.subr.mxu0 0.0
    %1320 = vmatpush1.msra.mxu0 %v983
    %1321 = vmatprep.subr.mxu0 0.0
    %1322 = vmatpush1.msra.mxu0 %v986
    %1323 = vmatprep.subr.mxu0 0.0
    %1324 = vmatpush1.msra.mxu0 %v989
    %1325 = vmatprep.subr.mxu0 0.0
    %1326 = vmatpush1.msra.mxu0 %v992
    %1327 = vmatprep.subr.mxu0 0.0
    %1328 = vmatpush1.msra.mxu0 %v995
    %1329 = vmatprep.subr.mxu0 0.0
    %1330 = vmatpush1.msra.mxu0 %v998
    %1331 = vmatprep.subr.mxu0 0.0
    %1332 = vmatpush1.msra.mxu0 %v1001
    %1333 = vmatprep.subr.mxu0 0.0
    %1334 = vmatpush1.msra.mxu0 %v1004
    %1335 = vmatprep.subr.mxu0 0.0
    %1336 = vmatpush1.msra.mxu0 %v1007
    %1337 = vmatprep.subr.mxu0 0.0
    %1338 = vmatpush1.msra.mxu0 %v1010
    %1339 = vmatprep.subr.mxu0 0.0
    %1340 = vmatpush1.msra.mxu0 %v1013
    %1341 = vmatprep.subr.mxu0 0.0
    %1342 = vmatpush1.msra.mxu0 %v1016
    %1343 = vmatprep.subr.mxu0 0.0
    %1344 = vmatpush1.msra.mxu0 %v1019
    %1345 = vmatprep.subr.mxu0 0.0
    %1346 = vmatpush1.msra.mxu0 %v1022
    %1347 = vmatprep.subr.mxu0 0.0
    %1348 = vmatpush1.msra.mxu0 %v1025
    %1349 = vmatprep.subr.mxu0 0.0
    %1350 = vmatpush1.msra.mxu0 %v1028
    %1351 = vmatprep.subr.mxu0 0.0
    %1352 = vmatpush1.msra.mxu0 %v1031
    %1353 = vmatprep.mubr.f32.mxu0 %v609
    %1354 = vmatmul.mubr.f32.gmra.mrb[0].mxu0 %v608
    %v1355 = vpop.f32.mrb[0].mxu0
    %v1356 = vadd.f32 %v1143, %v1355
    %v1357 = vpop.f32.mrb[0].mxu0
    %1358 = vdwg.mxu0
    %1359 = vmatprep.subr.mxu0 0.0
    %1360 = vmatpush1.msra.mxu0 %v1034
    %1361 = vmatprep.subr.mxu0 0.0
    %1362 = vmatpush1.msra.mxu0 %v1037
    %1363 = vmatprep.subr.mxu0 0.0
    %1364 = vmatpush1.msra.mxu0 %v1040
    %1365 = vmatprep.subr.mxu0 0.0
    %1366 = vmatpush1.msra.mxu0 %v1043
    %1367 = vmatprep.subr.mxu0 0.0
    %1368 = vmatpush1.msra.mxu0 %v1046
    %1369 = vmatprep.subr.mxu0 0.0
    %1370 = vmatpush1.msra.mxu0 %v1049
    %1371 = vmatprep.subr.mxu0 0.0
    %1372 = vmatpush1.msra.mxu0 %v1052
    %1373 = vmatprep.subr.mxu0 0.0
    %1374 = vmatpush1.msra.mxu0 %v1055
    %1375 = vmatprep.subr.mxu0 0.0
    %1376 = vmatpush1.msra.mxu0 %v1058
    %1377 = vmatprep.subr.mxu0 0.0
    %1378 = vmatpush1.msra.mxu0 %v1061
    %1379 = vmatprep.subr.mxu0 0.0
    %1380 = vmatpush1.msra.mxu0 %v1064
    %1381 = vmatprep.subr.mxu0 0.0
    %1382 = vmatpush1.msra.mxu0 %v1067
    %1383 = vmatprep.subr.mxu0 0.0
    %1384 = vmatpush1.msra.mxu0 %v1070
    %1385 = vmatprep.subr.mxu0 0.0
    %1386 = vmatpush1.msra.mxu0 %v1073
    %1387 = vmatprep.subr.mxu0 0.0
    %1388 = vmatpush1.msra.mxu0 %v1076
    %1389 = vmatprep.subr.mxu0 0.0
    %1390 = vmatpush1.msra.mxu0 %v1079
    %1391 = vmatprep.subr.mxu0 0.0
    %1392 = vmatpush1.msra.mxu0 %v1082
    %1393 = vmatprep.subr.mxu0 0.0
    %1394 = vmatpush1.msra.mxu0 %v1085
    %1395 = vmatprep.subr.mxu0 0.0
    %1396 = vmatpush1.msra.mxu0 %v1088
    %1397 = vmatprep.subr.mxu0 0.0
    %1398 = vmatpush1.msra.mxu0 %v1091
    %1399 = vmatprep.subr.mxu0 0.0
    %1400 = vmatpush1.msra.mxu0 %v1094
    %1401 = vmatprep.subr.mxu0 0.0
    %1402 = vmatpush1.msra.mxu0 %v1097
    %1403 = vmatprep.subr.mxu0 0.0
    %1404 = vmatpush1.msra.mxu0 %v1100
    %1405 = vmatprep.subr.mxu0 0.0
    %1406 = vmatpush1.msra.mxu0 %v1103
    %1407 = vmatprep.subr.mxu0 0.0
    %1408 = vmatpush1.msra.mxu0 %v1106
    %1409 = vmatprep.subr.mxu0 0.0
    %1410 = vmatpush1.msra.mxu0 %v1109
    %1411 = vmatprep.subr.mxu0 0.0
    %1412 = vmatpush1.msra.mxu0 %v1112
    %1413 = vmatprep.subr.mxu0 0.0
    %1414 = vmatpush1.msra.mxu0 %v1115
    %1415 = vmatprep.subr.mxu0 0.0
    %1416 = vmatpush1.msra.mxu0 %v1118
    %1417 = vmatprep.subr.mxu0 0.0
    %1418 = vmatpush1.msra.mxu0 %v1121
    %1419 = vmatprep.subr.mxu0 0.0
    %1420 = vmatpush1.msra.mxu0 %v1124
    %1421 = vmatprep.subr.mxu0 0.0
    %1422 = vmatpush1.msra.mxu0 %v1127
    %1423 = vmatprep.mubr.f32.mxu0 %v611
    %1424 = vmatmul.mubr.f32.gmra.mrb[0].mxu0 %v610
    %v1425 = vpop.f32.mrb[0].mxu0
    %v1426 = vadd.f32 %v1356, %v1425
    %v1427 = vpop.f32.mrb[0].mxu0
    %1428 = vdwg.mxu0
    %v1429 = vadd.f32 %v1285, %v1287
    %v1430 = vadd.f32 %v1429, %v1426
    %1431 = vadd.xlane.f32.xlu0 %v1430
    %v1432 = vpop.xlane.xlu0 %1431
    %v1433 = vrcp.pop 384.0
    %v1434 = vmul.f32 %v1432, %v1433
    %v1435 = vmul.f32 %v1285, %v1285
    %v1436 = vmul.f32 %v1287, %v1287
    %v1437 = vmul.f32 %v1426, %v1426
    %v1438 = vadd.f32 %v1435, %v1436
    %v1439 = vadd.f32 %v1438, %v1437
    %1440 = vadd.xlane.f32.xlu0 %v1439
    %v1441 = vpop.xlane.xlu0 %1440
    %v1442 = vmul.f32 %v1441, %v1433
    %v1443 = vmul.f32 %v1434, %v1434
    %v1444 = vsub.f32 %v1442, %v1443
    %v1445 = vsub.f32 %v1285, %v1434
    %v1446 = vsub.f32 %v1287, %v1434
    %v1447 = vsub.f32 %v1426, %v1434
    %v1448 = vadd.f32 %v1444, 1e-05
    %v1449 = vrsqrt.pop %v1448
    %v1450 = vmul.f32 %v1445, %v1449
    %v1451 = vmul.f32 %v1446, %v1449
    %v1452 = vmul.f32 %v1447, %v1449
    %v1454 = vlaneseq
    %v1455 = vshrl.u32 %v1454, 7
    %v1456 = vsub.s32 0, %v1455
    %v1457 = vrot.slane %v1129, %v1456
    %v1458 = vlaneseq
    %v1459 = vshrl.u32 %v1458, 7
    %v1460 = vsub.s32 1, %v1459
    %v1461 = vrot.slane %v1129, %v1460
    %v1462 = vlaneseq
    %v1463 = vshrl.u32 %v1462, 7
    %v1464 = vsub.s32 2, %v1463
    %v1465 = vrot.slane %v1129, %v1464
    %v1469 = vmul.f32 %v1450, %v1457
    %v1470 = vmul.f32 %v1451, %v1461
    %v1471 = vmul.f32 %v1452, %v1465
    %v1473 = vlaneseq
    %v1474 = vshrl.u32 %v1473, 7
    %v1475 = vsub.s32 0, %v1474
    %v1476 = vrot.slane %v1130, %v1475
    %v1477 = vlaneseq
    %v1478 = vshrl.u32 %v1477, 7
    %v1479 = vsub.s32 1, %v1478
    %v1480 = vrot.slane %v1130, %v1479
    %v1481 = vlaneseq
    %v1482 = vshrl.u32 %v1481, 7
    %v1483 = vsub.s32 2, %v1482
    %v1484 = vrot.slane %v1130, %v1483
    %v1488 = vadd.f32 %v1469, %v1476
    %v1489 = vadd.f32 %v1470, %v1480
    %v1490 = vadd.f32 %v1471, %v1484
    %vm1491 = vcmp.gt.f32.partialorder %v1488, 0.0
    %vm1492 = vcmp.gt.f32.partialorder %v1489, 0.0
    %vm1493 = vcmp.gt.f32.partialorder %v1490, 0.0
    %v1494 = vmul.f32 %v1488, 0.01
    %v1495 = vmul.f32 %v1489, 0.01
    %v1496 = vmul.f32 %v1490, 0.01
    %v1497 = vsel %vm1491, %v1488, %v1494
    %v1498 = vsel %vm1492, %v1489, %v1495
    %v1499 = vsel %vm1493, %v1490, %v1496
    %s1500 = scalar_lea.vmem [#allocation9], 1536
    %v1501 = vld [vmem:[%s1500] sm:$0xff]
    %v1502 = vld [vmem:[%s1500 + $0x8] sm:$0xff]
    %v1503 = vld [vmem:[%s1500 + $0x10] sm:$0xff]
    %v1504 = vld [vmem:[%s1500 + $0x18] sm:$0xff]
    %v1505 = vld [vmem:[%s1500 + $0x20] sm:$0xff]
    %v1506 = vld [vmem:[%s1500 + $0x28] sm:$0xff]
    %v1507 = vld [vmem:[%s1500 + $0x30] sm:$0xff]
    %v1508 = vld [vmem:[%s1500 + $0x38] sm:$0xff]
    %v1509 = vld [vmem:[%s1500 + $0x40] sm:$0xff]
    %v1510 = vld [vmem:[%s1500 + $0x48] sm:$0xff]
    %v1511 = vld [vmem:[%s1500 + $0x50] sm:$0xff]
    %v1512 = vld [vmem:[%s1500 + $0x58] sm:$0xff]
    %v1513 = vld [vmem:[%s1500 + $0x60] sm:$0xff]
    %v1514 = vld [vmem:[%s1500 + $0x68] sm:$0xff]
    %v1515 = vld [vmem:[%s1500 + $0x70] sm:$0xff]
    %v1516 = vld [vmem:[%s1500 + $0x78] sm:$0xff]
    %v1517 = vld [vmem:[%s1500 + $0x80] sm:$0xff]
    %v1518 = vld [vmem:[%s1500 + $0x88] sm:$0xff]
    %v1519 = vld [vmem:[%s1500 + $0x90] sm:$0xff]
    %v1520 = vld [vmem:[%s1500 + $0x98] sm:$0xff]
    %v1521 = vld [vmem:[%s1500 + $0xa0] sm:$0xff]
    %v1522 = vld [vmem:[%s1500 + $0xa8] sm:$0xff]
    %v1523 = vld [vmem:[%s1500 + $0xb0] sm:$0xff]
    %v1524 = vld [vmem:[%s1500 + $0xb8] sm:$0xff]
    %v1525 = vld [vmem:[%s1500 + $0xc0] sm:$0xff]
    %v1526 = vld [vmem:[%s1500 + $0xc8] sm:$0xff]
    %v1527 = vld [vmem:[%s1500 + $0xd0] sm:$0xff]
    %v1528 = vld [vmem:[%s1500 + $0xd8] sm:$0xff]
    %v1529 = vld [vmem:[%s1500 + $0xe0] sm:$0xff]
    %v1530 = vld [vmem:[%s1500 + $0xe8] sm:$0xff]
    %v1531 = vld [vmem:[%s1500 + $0xf0] sm:$0xff]
    %v1532 = vld [vmem:[%s1500 + $0xf8] sm:$0xff]
    %v1533 = vld [vmem:[%s1500 + $0x100] sm:$0xff]
    %v1534 = vld [vmem:[%s1500 + $0x108] sm:$0xff]
    %v1535 = vld [vmem:[%s1500 + $0x110] sm:$0xff]
    %v1536 = vld [vmem:[%s1500 + $0x118] sm:$0xff]
    %v1537 = vld [vmem:[%s1500 + $0x120] sm:$0xff]
    %v1538 = vld [vmem:[%s1500 + $0x128] sm:$0xff]
    %v1539 = vld [vmem:[%s1500 + $0x130] sm:$0xff]
    %v1540 = vld [vmem:[%s1500 + $0x138] sm:$0xff]
    %v1541 = vld [vmem:[%s1500 + $0x140] sm:$0xff]
    %v1542 = vld [vmem:[%s1500 + $0x148] sm:$0xff]
    %v1543 = vld [vmem:[%s1500 + $0x150] sm:$0xff]
    %v1544 = vld [vmem:[%s1500 + $0x158] sm:$0xff]
    %v1545 = vld [vmem:[%s1500 + $0x160] sm:$0xff]
    %v1546 = vld [vmem:[%s1500 + $0x168] sm:$0xff]
    %v1547 = vld [vmem:[%s1500 + $0x170] sm:$0xff]
    %v1548 = vld [vmem:[%s1500 + $0x178] sm:$0xff]
    %v1549 = vld [vmem:[%s1500 + $0x180] sm:$0xff]
    %v1550 = vld [vmem:[%s1500 + $0x188] sm:$0xff]
    %v1551 = vld [vmem:[%s1500 + $0x190] sm:$0xff]
    %v1552 = vld [vmem:[%s1500 + $0x198] sm:$0xff]
    %v1553 = vld [vmem:[%s1500 + $0x1a0] sm:$0xff]
    %v1554 = vld [vmem:[%s1500 + $0x1a8] sm:$0xff]
    %v1555 = vld [vmem:[%s1500 + $0x1b0] sm:$0xff]
    %v1556 = vld [vmem:[%s1500 + $0x1b8] sm:$0xff]
    %v1557 = vld [vmem:[%s1500 + $0x1c0] sm:$0xff]
    %v1558 = vld [vmem:[%s1500 + $0x1c8] sm:$0xff]
    %v1559 = vld [vmem:[%s1500 + $0x1d0] sm:$0xff]
    %v1560 = vld [vmem:[%s1500 + $0x1d8] sm:$0xff]
    %v1561 = vld [vmem:[%s1500 + $0x1e0] sm:$0xff]
    %v1562 = vld [vmem:[%s1500 + $0x1e8] sm:$0xff]
    %v1563 = vld [vmem:[%s1500 + $0x1f0] sm:$0xff]
    %v1564 = vld [vmem:[%s1500 + $0x1f8] sm:$0xff]
    %v1565 = vld [vmem:[%s1500 + $0x200] sm:$0xff]
    %v1566 = vld [vmem:[%s1500 + $0x208] sm:$0xff]
    %v1567 = vld [vmem:[%s1500 + $0x210] sm:$0xff]
    %v1568 = vld [vmem:[%s1500 + $0x218] sm:$0xff]
    %v1569 = vld [vmem:[%s1500 + $0x220] sm:$0xff]
    %v1570 = vld [vmem:[%s1500 + $0x228] sm:$0xff]
    %v1571 = vld [vmem:[%s1500 + $0x230] sm:$0xff]
    %v1572 = vld [vmem:[%s1500 + $0x238] sm:$0xff]
    %v1573 = vld [vmem:[%s1500 + $0x240] sm:$0xff]
    %v1574 = vld [vmem:[%s1500 + $0x248] sm:$0xff]
    %v1575 = vld [vmem:[%s1500 + $0x250] sm:$0xff]
    %v1576 = vld [vmem:[%s1500 + $0x258] sm:$0xff]
    %v1577 = vld [vmem:[%s1500 + $0x260] sm:$0xff]
    %v1578 = vld [vmem:[%s1500 + $0x268] sm:$0xff]
    %v1579 = vld [vmem:[%s1500 + $0x270] sm:$0xff]
    %v1580 = vld [vmem:[%s1500 + $0x278] sm:$0xff]
    %v1581 = vld [vmem:[%s1500 + $0x280] sm:$0xff]
    %v1582 = vld [vmem:[%s1500 + $0x288] sm:$0xff]
    %v1583 = vld [vmem:[%s1500 + $0x290] sm:$0xff]
    %v1584 = vld [vmem:[%s1500 + $0x298] sm:$0xff]
    %v1585 = vld [vmem:[%s1500 + $0x2a0] sm:$0xff]
    %v1586 = vld [vmem:[%s1500 + $0x2a8] sm:$0xff]
    %v1587 = vld [vmem:[%s1500 + $0x2b0] sm:$0xff]
    %v1588 = vld [vmem:[%s1500 + $0x2b8] sm:$0xff]
    %v1589 = vld [vmem:[%s1500 + $0x2c0] sm:$0xff]
    %v1590 = vld [vmem:[%s1500 + $0x2c8] sm:$0xff]
    %v1591 = vld [vmem:[%s1500 + $0x2d0] sm:$0xff]
    %v1592 = vld [vmem:[%s1500 + $0x2d8] sm:$0xff]
    %v1593 = vld [vmem:[%s1500 + $0x2e0] sm:$0xff]
    %v1594 = vld [vmem:[%s1500 + $0x2e8] sm:$0xff]
    %v1595 = vld [vmem:[%s1500 + $0x2f0] sm:$0xff]
    %v1596 = vld [vmem:[%s1500 + $0x2f8] sm:$0xff]
    %v1597 = vld [vmem:[%s1500 + $0x300] sm:$0xff]
    %v1598 = vld [vmem:[%s1500 + $0x308] sm:$0xff]
    %v1599 = vld [vmem:[%s1500 + $0x310] sm:$0xff]
    %v1600 = vld [vmem:[%s1500 + $0x318] sm:$0xff]
    %v1601 = vld [vmem:[%s1500 + $0x320] sm:$0xff]
    %v1602 = vld [vmem:[%s1500 + $0x328] sm:$0xff]
    %v1603 = vld [vmem:[%s1500 + $0x330] sm:$0xff]
    %v1604 = vld [vmem:[%s1500 + $0x338] sm:$0xff]
    %v1605 = vld [vmem:[%s1500 + $0x340] sm:$0xff]
    %v1606 = vld [vmem:[%s1500 + $0x348] sm:$0xff]
    %v1607 = vld [vmem:[%s1500 + $0x350] sm:$0xff]
    %v1608 = vld [vmem:[%s1500 + $0x358] sm:$0xff]
    %v1609 = vld [vmem:[%s1500 + $0x360] sm:$0xff]
    %v1610 = vld [vmem:[%s1500 + $0x368] sm:$0xff]
    %v1611 = vld [vmem:[%s1500 + $0x370] sm:$0xff]
    %v1612 = vld [vmem:[%s1500 + $0x378] sm:$0xff]
    %v1613 = vld [vmem:[%s1500 + $0x380] sm:$0xff]
    %v1614 = vld [vmem:[%s1500 + $0x388] sm:$0xff]
    %v1615 = vld [vmem:[%s1500 + $0x390] sm:$0xff]
    %v1616 = vld [vmem:[%s1500 + $0x398] sm:$0xff]
    %v1617 = vld [vmem:[%s1500 + $0x3a0] sm:$0xff]
    %v1618 = vld [vmem:[%s1500 + $0x3a8] sm:$0xff]
    %v1619 = vld [vmem:[%s1500 + $0x3b0] sm:$0xff]
    %v1620 = vld [vmem:[%s1500 + $0x3b8] sm:$0xff]
    %v1621 = vld [vmem:[%s1500 + $0x3c0] sm:$0xff]
    %v1622 = vld [vmem:[%s1500 + $0x3c8] sm:$0xff]
    %v1623 = vld [vmem:[%s1500 + $0x3d0] sm:$0xff]
    %v1624 = vld [vmem:[%s1500 + $0x3d8] sm:$0xff]
    %v1625 = vld [vmem:[%s1500 + $0x3e0] sm:$0xff]
    %v1626 = vld [vmem:[%s1500 + $0x3e8] sm:$0xff]
    %v1627 = vld [vmem:[%s1500 + $0x3f0] sm:$0xff]
    %v1628 = vld [vmem:[%s1500 + $0x3f8] sm:$0xff]
    %v1629 = vld [vmem:[%s1500 + $0x400] sm:$0xff]
    %v1630 = vld [vmem:[%s1500 + $0x408] sm:$0xff]
    %v1631 = vld [vmem:[%s1500 + $0x410] sm:$0xff]
    %v1632 = vld [vmem:[%s1500 + $0x418] sm:$0xff]
    %v1633 = vld [vmem:[%s1500 + $0x420] sm:$0xff]
    %v1634 = vld [vmem:[%s1500 + $0x428] sm:$0xff]
    %v1635 = vld [vmem:[%s1500 + $0x430] sm:$0xff]
    %v1636 = vld [vmem:[%s1500 + $0x438] sm:$0xff]
    %v1637 = vld [vmem:[%s1500 + $0x440] sm:$0xff]
    %v1638 = vld [vmem:[%s1500 + $0x448] sm:$0xff]
    %v1639 = vld [vmem:[%s1500 + $0x450] sm:$0xff]
    %v1640 = vld [vmem:[%s1500 + $0x458] sm:$0xff]
    %v1641 = vld [vmem:[%s1500 + $0x460] sm:$0xff]
    %v1642 = vld [vmem:[%s1500 + $0x468] sm:$0xff]
    %v1643 = vld [vmem:[%s1500 + $0x470] sm:$0xff]
    %v1644 = vld [vmem:[%s1500 + $0x478] sm:$0xff]
    %v1645 = vld [vmem:[%s1500 + $0x480] sm:$0xff]
    %v1646 = vld [vmem:[%s1500 + $0x488] sm:$0xff]
    %v1647 = vld [vmem:[%s1500 + $0x490] sm:$0xff]
    %v1648 = vld [vmem:[%s1500 + $0x498] sm:$0xff]
    %v1649 = vld [vmem:[%s1500 + $0x4a0] sm:$0xff]
    %v1650 = vld [vmem:[%s1500 + $0x4a8] sm:$0xff]
    %v1651 = vld [vmem:[%s1500 + $0x4b0] sm:$0xff]
    %v1652 = vld [vmem:[%s1500 + $0x4b8] sm:$0xff]
    %v1653 = vld [vmem:[%s1500 + $0x4c0] sm:$0xff]
    %v1654 = vld [vmem:[%s1500 + $0x4c8] sm:$0xff]
    %v1655 = vld [vmem:[%s1500 + $0x4d0] sm:$0xff]
    %v1656 = vld [vmem:[%s1500 + $0x4d8] sm:$0xff]
    %v1657 = vld [vmem:[%s1500 + $0x4e0] sm:$0xff]
    %v1658 = vld [vmem:[%s1500 + $0x4e8] sm:$0xff]
    %v1659 = vld [vmem:[%s1500 + $0x4f0] sm:$0xff]
    %v1660 = vld [vmem:[%s1500 + $0x4f8] sm:$0xff]
    %v1661 = vld [vmem:[%s1500 + $0x500] sm:$0xff]
    %v1662 = vld [vmem:[%s1500 + $0x508] sm:$0xff]
    %v1663 = vld [vmem:[%s1500 + $0x510] sm:$0xff]
    %v1664 = vld [vmem:[%s1500 + $0x518] sm:$0xff]
    %v1665 = vld [vmem:[%s1500 + $0x520] sm:$0xff]
    %v1666 = vld [vmem:[%s1500 + $0x528] sm:$0xff]
    %v1667 = vld [vmem:[%s1500 + $0x530] sm:$0xff]
    %v1668 = vld [vmem:[%s1500 + $0x538] sm:$0xff]
    %v1669 = vld [vmem:[%s1500 + $0x540] sm:$0xff]
    %v1670 = vld [vmem:[%s1500 + $0x548] sm:$0xff]
    %v1671 = vld [vmem:[%s1500 + $0x550] sm:$0xff]
    %v1672 = vld [vmem:[%s1500 + $0x558] sm:$0xff]
    %v1673 = vld [vmem:[%s1500 + $0x560] sm:$0xff]
    %v1674 = vld [vmem:[%s1500 + $0x568] sm:$0xff]
    %v1675 = vld [vmem:[%s1500 + $0x570] sm:$0xff]
    %v1676 = vld [vmem:[%s1500 + $0x578] sm:$0xff]
    %v1677 = vld [vmem:[%s1500 + $0x580] sm:$0xff]
    %v1678 = vld [vmem:[%s1500 + $0x588] sm:$0xff]
    %v1679 = vld [vmem:[%s1500 + $0x590] sm:$0xff]
    %v1680 = vld [vmem:[%s1500 + $0x598] sm:$0xff]
    %v1681 = vld [vmem:[%s1500 + $0x5a0] sm:$0xff]
    %v1682 = vld [vmem:[%s1500 + $0x5a8] sm:$0xff]
    %v1683 = vld [vmem:[%s1500 + $0x5b0] sm:$0xff]
    %v1684 = vld [vmem:[%s1500 + $0x5b8] sm:$0xff]
    %v1685 = vld [vmem:[%s1500 + $0x5c0] sm:$0xff]
    %v1686 = vld [vmem:[%s1500 + $0x5c8] sm:$0xff]
    %v1687 = vld [vmem:[%s1500 + $0x5d0] sm:$0xff]
    %v1688 = vld [vmem:[%s1500 + $0x5d8] sm:$0xff]
    %v1689 = vld [vmem:[%s1500 + $0x5e0] sm:$0xff]
    %v1690 = vld [vmem:[%s1500 + $0x5e8] sm:$0xff]
    %v1691 = vld [vmem:[%s1500 + $0x5f0] sm:$0xff]
    %v1692 = vld [vmem:[%s1500 + $0x5f8] sm:$0xff]
    %s1693 = scalar_lea.vmem [#allocation10], 3
    %v1694 = vld [vmem:[%s1693] sm:$0x7]
    %s1695 = scalar_lea.vmem [#allocation12], 3
    %v1696 = vld [vmem:[%s1695] sm:$0x7]
    %s1697 = scalar_lea.vmem [#allocation13], 3
    %v1698 = vld [vmem:[%s1697] sm:$0x7]
    %v1700 = vlaneseq
    %v1701 = vshrl.u32 %v1700, 7
    %v1702 = vsub.s32 0, %v1701
    %v1703 = vrot.slane %v1694, %v1702
    %v1704 = vlaneseq
    %v1705 = vshrl.u32 %v1704, 7
    %v1706 = vsub.s32 1, %v1705
    %v1707 = vrot.slane %v1694, %v1706
    %v1708 = vlaneseq
    %v1709 = vshrl.u32 %v1708, 7
    %v1710 = vsub.s32 2, %v1709
    %v1711 = vrot.slane %v1694, %v1710
    %1715 = vmatprep.subr.mxu0 %v1502
    %1716 = vmatpush1.msra.mxu0 %v1501
    %1717 = vmatprep.subr.mxu0 %v1505
    %1718 = vmatpush1.msra.mxu0 %v1504
    %1719 = vmatprep.subr.mxu0 %v1508
    %1720 = vmatpush1.msra.mxu0 %v1507
    %1721 = vmatprep.subr.mxu0 %v1511
    %1722 = vmatpush1.msra.mxu0 %v1510
    %1723 = vmatprep.subr.mxu0 %v1514
    %1724 = vmatpush1.msra.mxu0 %v1513
    %1725 = vmatprep.subr.mxu0 %v1517
    %1726 = vmatpush1.msra.mxu0 %v1516
    %1727 = vmatprep.subr.mxu0 %v1520
    %1728 = vmatpush1.msra.mxu0 %v1519
    %1729 = vmatprep.subr.mxu0 %v1523
    %1730 = vmatpush1.msra.mxu0 %v1522
    %1731 = vmatprep.subr.mxu0 %v1526
    %1732 = vmatpush1.msra.mxu0 %v1525
    %1733 = vmatprep.subr.mxu0 %v1529
    %1734 = vmatpush1.msra.mxu0 %v1528
    %1735 = vmatprep.subr.mxu0 %v1532
    %1736 = vmatpush1.msra.mxu0 %v1531
    %1737 = vmatprep.subr.mxu0 %v1535
    %1738 = vmatpush1.msra.mxu0 %v1534
    %1739 = vmatprep.subr.mxu0 %v1538
    %1740 = vmatpush1.msra.mxu0 %v1537
    %1741 = vmatprep.subr.mxu0 %v1541
    %1742 = vmatpush1.msra.mxu0 %v1540
    %1743 = vmatprep.subr.mxu0 %v1544
    %1744 = vmatpush1.msra.mxu0 %v1543
    %1745 = vmatprep.subr.mxu0 %v1547
    %1746 = vmatpush1.msra.mxu0 %v1546
    %1747 = vmatprep.subr.mxu0 %v1550
    %1748 = vmatpush1.msra.mxu0 %v1549
    %1749 = vmatprep.subr.mxu0 %v1553
    %1750 = vmatpush1.msra.mxu0 %v1552
    %1751 = vmatprep.subr.mxu0 %v1556
    %1752 = vmatpush1.msra.mxu0 %v1555
    %1753 = vmatprep.subr.mxu0 %v1559
    %1754 = vmatpush1.msra.mxu0 %v1558
    %1755 = vmatprep.subr.mxu0 %v1562
    %1756 = vmatpush1.msra.mxu0 %v1561
    %1757 = vmatprep.subr.mxu0 %v1565
    %1758 = vmatpush1.msra.mxu0 %v1564
    %1759 = vmatprep.subr.mxu0 %v1568
    %1760 = vmatpush1.msra.mxu0 %v1567
    %1761 = vmatprep.subr.mxu0 %v1571
    %1762 = vmatpush1.msra.mxu0 %v1570
    %1763 = vmatprep.subr.mxu0 %v1574
    %1764 = vmatpush1.msra.mxu0 %v1573
    %1765 = vmatprep.subr.mxu0 %v1577
    %1766 = vmatpush1.msra.mxu0 %v1576
    %1767 = vmatprep.subr.mxu0 %v1580
    %1768 = vmatpush1.msra.mxu0 %v1579
    %1769 = vmatprep.subr.mxu0 %v1583
    %1770 = vmatpush1.msra.mxu0 %v1582
    %1771 = vmatprep.subr.mxu0 %v1586
    %1772 = vmatpush1.msra.mxu0 %v1585
    %1773 = vmatprep.subr.mxu0 %v1589
    %1774 = vmatpush1.msra.mxu0 %v1588
    %1775 = vmatprep.subr.mxu0 %v1592
    %1776 = vmatpush1.msra.mxu0 %v1591
    %1777 = vmatprep.subr.mxu0 %v1595
    %1778 = vmatpush1.msra.mxu0 %v1594
    %1779 = vmatprep.mubr.f32.mxu0 %v933
    %1780 = vmatmul.mubr.f32.gmra.mrb[0].mxu0 %v932
    %v1781 = vpop.f32.mrb[0].mxu0
    %v1782 = vadd.f32 %v1703, %v1781
    %v1783 = vpop.f32.mrb[0].mxu0
    %v1784 = vadd.f32 %v1707, %v1783
    %1785 = vdwg.mxu0
    %1786 = vmatprep.subr.mxu0 %v1598
    %1787 = vmatpush1.msra.mxu0 %v1597
    %1788 = vmatprep.subr.mxu0 %v1601
    %1789 = vmatpush1.msra.mxu0 %v1600
    %1790 = vmatprep.subr.mxu0 %v1604
    %1791 = vmatpush1.msra.mxu0 %v1603
    %1792 = vmatprep.subr.mxu0 %v1607
    %1793 = vmatpush1.msra.mxu0 %v1606
    %1794 = vmatprep.subr.mxu0 %v1610
    %1795 = vmatpush1.msra.mxu0 %v1609
    %1796 = vmatprep.subr.mxu0 %v1613
    %1797 = vmatpush1.msra.mxu0 %v1612
    %1798 = vmatprep.subr.mxu0 %v1616
    %1799 = vmatpush1.msra.mxu0 %v1615
    %1800 = vmatprep.subr.mxu0 %v1619
    %1801 = vmatpush1.msra.mxu0 %v1618
    %1802 = vmatprep.subr.mxu0 %v1622
    %1803 = vmatpush1.msra.mxu0 %v1621
    %1804 = vmatprep.subr.mxu0 %v1625
    %1805 = vmatpush1.msra.mxu0 %v1624
    %1806 = vmatprep.subr.mxu0 %v1628
    %1807 = vmatpush1.msra.mxu0 %v1627
    %1808 = vmatprep.subr.mxu0 %v1631
    %1809 = vmatpush1.msra.mxu0 %v1630
    %1810 = vmatprep.subr.mxu0 %v1634
    %1811 = vmatpush1.msra.mxu0 %v1633
    %1812 = vmatprep.subr.mxu0 %v1637
    %1813 = vmatpush1.msra.mxu0 %v1636
    %1814 = vmatprep.subr.mxu0 %v1640
    %1815 = vmatpush1.msra.mxu0 %v1639
    %1816 = vmatprep.subr.mxu0 %v1643
    %1817 = vmatpush1.msra.mxu0 %v1642
    %1818 = vmatprep.subr.mxu0 %v1646
    %1819 = vmatpush1.msra.mxu0 %v1645
    %1820 = vmatprep.subr.mxu0 %v1649
    %1821 = vmatpush1.msra.mxu0 %v1648
    %1822 = vmatprep.subr.mxu0 %v1652
    %1823 = vmatpush1.msra.mxu0 %v1651
    %1824 = vmatprep.subr.mxu0 %v1655
    %1825 = vmatpush1.msra.mxu0 %v1654
    %1826 = vmatprep.subr.mxu0 %v1658
    %1827 = vmatpush1.msra.mxu0 %v1657
    %1828 = vmatprep.subr.mxu0 %v1661
    %1829 = vmatpush1.msra.mxu0 %v1660
    %1830 = vmatprep.subr.mxu0 %v1664
    %1831 = vmatpush1.msra.mxu0 %v1663
    %1832 = vmatprep.subr.mxu0 %v1667
    %1833 = vmatpush1.msra.mxu0 %v1666
    %1834 = vmatprep.subr.mxu0 %v1670
    %1835 = vmatpush1.msra.mxu0 %v1669
    %1836 = vmatprep.subr.mxu0 %v1673
    %1837 = vmatpush1.msra.mxu0 %v1672
    %1838 = vmatprep.subr.mxu0 %v1676
    %1839 = vmatpush1.msra.mxu0 %v1675
    %1840 = vmatprep.subr.mxu0 %v1679
    %1841 = vmatpush1.msra.mxu0 %v1678
    %1842 = vmatprep.subr.mxu0 %v1682
    %1843 = vmatpush1.msra.mxu0 %v1681
    %1844 = vmatprep.subr.mxu0 %v1685
    %1845 = vmatpush1.msra.mxu0 %v1684
    %1846 = vmatprep.subr.mxu0 %v1688
    %1847 = vmatpush1.msra.mxu0 %v1687
    %1848 = vmatprep.subr.mxu0 %v1691
    %1849 = vmatpush1.msra.mxu0 %v1690
    %1850 = vmatprep.mubr.f32.mxu0 %v935
    %1851 = vmatmul.mubr.f32.gmra.mrb[0].mxu0 %v934
    %v1852 = vpop.f32.mrb[0].mxu0
    %v1853 = vadd.f32 %v1782, %v1852
    %v1854 = vpop.f32.mrb[0].mxu0
    %v1855 = vadd.f32 %v1784, %v1854
    %1856 = vdwg.mxu0
    %1857 = vmatprep.subr.mxu0 0.0
    %1858 = vmatpush1.msra.mxu0 %v1503
    %1859 = vmatprep.subr.mxu0 0.0
    %1860 = vmatpush1.msra.mxu0 %v1506
    %1861 = vmatprep.subr.mxu0 0.0
    %1862 = vmatpush1.msra.mxu0 %v1509
    %1863 = vmatprep.subr.mxu0 0.0
    %1864 = vmatpush1.msra.mxu0 %v1512
    %1865 = vmatprep.subr.mxu0 0.0
    %1866 = vmatpush1.msra.mxu0 %v1515
    %1867 = vmatprep.subr.mxu0 0.0
    %1868 = vmatpush1.msra.mxu0 %v1518
    %1869 = vmatprep.subr.mxu0 0.0
    %1870 = vmatpush1.msra.mxu0 %v1521
    %1871 = vmatprep.subr.mxu0 0.0
    %1872 = vmatpush1.msra.mxu0 %v1524
    %1873 = vmatprep.subr.mxu0 0.0
    %1874 = vmatpush1.msra.mxu0 %v1527
    %1875 = vmatprep.subr.mxu0 0.0
    %1876 = vmatpush1.msra.mxu0 %v1530
    %1877 = vmatprep.subr.mxu0 0.0
    %1878 = vmatpush1.msra.mxu0 %v1533
    %1879 = vmatprep.subr.mxu0 0.0
    %1880 = vmatpush1.msra.mxu0 %v1536
    %1881 = vmatprep.subr.mxu0 0.0
    %1882 = vmatpush1.msra.mxu0 %v1539
    %1883 = vmatprep.subr.mxu0 0.0
    %1884 = vmatpush1.msra.mxu0 %v1542
    %1885 = vmatprep.subr.mxu0 0.0
    %1886 = vmatpush1.msra.mxu0 %v1545
    %1887 = vmatprep.subr.mxu0 0.0
    %1888 = vmatpush1.msra.mxu0 %v1548
    %1889 = vmatprep.subr.mxu0 0.0
    %1890 = vmatpush1.msra.mxu0 %v1551
    %1891 = vmatprep.subr.mxu0 0.0
    %1892 = vmatpush1.msra.mxu0 %v1554
    %1893 = vmatprep.subr.mxu0 0.0
    %1894 = vmatpush1.msra.mxu0 %v1557
    %1895 = vmatprep.subr.mxu0 0.0
    %1896 = vmatpush1.msra.mxu0 %v1560
    %1897 = vmatprep.subr.mxu0 0.0
    %1898 = vmatpush1.msra.mxu0 %v1563
    %1899 = vmatprep.subr.mxu0 0.0
    %1900 = vmatpush1.msra.mxu0 %v1566
    %1901 = vmatprep.subr.mxu0 0.0
    %1902 = vmatpush1.msra.mxu0 %v1569
    %1903 = vmatprep.subr.mxu0 0.0
    %1904 = vmatpush1.msra.mxu0 %v1572
    %1905 = vmatprep.subr.mxu0 0.0
    %1906 = vmatpush1.msra.mxu0 %v1575
    %1907 = vmatprep.subr.mxu0 0.0
    %1908 = vmatpush1.msra.mxu0 %v1578
    %1909 = vmatprep.subr.mxu0 0.0
    %1910 = vmatpush1.msra.mxu0 %v1581
    %1911 = vmatprep.subr.mxu0 0.0
    %1912 = vmatpush1.msra.mxu0 %v1584
    %1913 = vmatprep.subr.mxu0 0.0
    %1914 = vmatpush1.msra.mxu0 %v1587
    %1915 = vmatprep.subr.mxu0 0.0
    %1916 = vmatpush1.msra.mxu0 %v1590
    %1917 = vmatprep.subr.mxu0 0.0
    %1918 = vmatpush1.msra.mxu0 %v1593
    %1919 = vmatprep.subr.mxu0 0.0
    %1920 = vmatpush1.msra.mxu0 %v1596
    %1921 = vmatprep.mubr.f32.mxu0 %v933
    %1922 = vmatmul.mubr.f32.gmra.mrb[0].mxu0 %v932
    %v1923 = vpop.f32.mrb[0].mxu0
    %v1924 = vadd.f32 %v1711, %v1923
    %v1925 = vpop.f32.mrb[0].mxu0
    %1926 = vdwg.mxu0
    %1927 = vmatprep.subr.mxu0 0.0
    %1928 = vmatpush1.msra.mxu0 %v1599
    %1929 = vmatprep.subr.mxu0 0.0
    %1930 = vmatpush1.msra.mxu0 %v1602
    %1931 = vmatprep.subr.mxu0 0.0
    %1932 = vmatpush1.msra.mxu0 %v1605
    %1933 = vmatprep.subr.mxu0 0.0
    %1934 = vmatpush1.msra.mxu0 %v1608
    %1935 = vmatprep.subr.mxu0 0.0
    %1936 = vmatpush1.msra.mxu0 %v1611
    %1937 = vmatprep.subr.mxu0 0.0
    %1938 = vmatpush1.msra.mxu0 %v1614
    %1939 = vmatprep.subr.mxu0 0.0
    %1940 = vmatpush1.msra.mxu0 %v1617
    %1941 = vmatprep.subr.mxu0 0.0
    %1942 = vmatpush1.msra.mxu0 %v1620
    %1943 = vmatprep.subr.mxu0 0.0
    %1944 = vmatpush1.msra.mxu0 %v1623
    %1945 = vmatprep.subr.mxu0 0.0
    %1946 = vmatpush1.msra.mxu0 %v1626
    %1947 = vmatprep.subr.mxu0 0.0
    %1948 = vmatpush1.msra.mxu0 %v1629
    %1949 = vmatprep.subr.mxu0 0.0
    %1950 = vmatpush1.msra.mxu0 %v1632
    %1951 = vmatprep.subr.mxu0 0.0
    %1952 = vmatpush1.msra.mxu0 %v1635
    %1953 = vmatprep.subr.mxu0 0.0
    %1954 = vmatpush1.msra.mxu0 %v1638
    %1955 = vmatprep.subr.mxu0 0.0
    %1956 = vmatpush1.msra.mxu0 %v1641
    %1957 = vmatprep.subr.mxu0 0.0
    %1958 = vmatpush1.msra.mxu0 %v1644
    %1959 = vmatprep.subr.mxu0 0.0
    %1960 = vmatpush1.msra.mxu0 %v1647
    %1961 = vmatprep.subr.mxu0 0.0
    %1962 = vmatpush1.msra.mxu0 %v1650
    %1963 = vmatprep.subr.mxu0 0.0
    %1964 = vmatpush1.msra.mxu0 %v1653
    %1965 = vmatprep.subr.mxu0 0.0
    %1966 = vmatpush1.msra.mxu0 %v1656
    %1967 = vmatprep.subr.mxu0 0.0
    %1968 = vmatpush1.msra.mxu0 %v1659
    %1969 = vmatprep.subr.mxu0 0.0
    %1970 = vmatpush1.msra.mxu0 %v1662
    %1971 = vmatprep.subr.mxu0 0.0
    %1972 = vmatpush1.msra.mxu0 %v1665
    %1973 = vmatprep.subr.mxu0 0.0
    %1974 = vmatpush1.msra.mxu0 %v1668
    %1975 = vmatprep.subr.mxu0 0.0
    %1976 = vmatpush1.msra.mxu0 %v1671
    %1977 = vmatprep.subr.mxu0 0.0
    %1978 = vmatpush1.msra.mxu0 %v1674
    %1979 = vmatprep.subr.mxu0 0.0
    %1980 = vmatpush1.msra.mxu0 %v1677
    %1981 = vmatprep.subr.mxu0 0.0
    %1982 = vmatpush1.msra.mxu0 %v1680
    %1983 = vmatprep.subr.mxu0 0.0
    %1984 = vmatpush1.msra.mxu0 %v1683
    %1985 = vmatprep.subr.mxu0 0.0
    %1986 = vmatpush1.msra.mxu0 %v1686
    %1987 = vmatprep.subr.mxu0 0.0
    %1988 = vmatpush1.msra.mxu0 %v1689
    %1989 = vmatprep.subr.mxu0 0.0
    %1990 = vmatpush1.msra.mxu0 %v1692
    %1991 = vmatprep.mubr.f32.mxu0 %v935
    %1992 = vmatmul.mubr.f32.gmra.mrb[0].mxu0 %v934
    %v1993 = vpop.f32.mrb[0].mxu0
    %v1994 = vadd.f32 %v1924, %v1993
    %v1995 = vpop.f32.mrb[0].mxu0
    %1996 = vdwg.mxu0
    %v1997 = vadd.f32 %v1853, %v1855
    %v1998 = vadd.f32 %v1997, %v1994
    %1999 = vadd.xlane.f32.xlu0 %v1998
    %v2000 = vpop.xlane.xlu0 %1999
    %v2001 = vmul.f32 %v2000, %v1433
    %v2002 = vmul.f32 %v1853, %v1853
    %v2003 = vmul.f32 %v1855, %v1855
    %v2004 = vmul.f32 %v1994, %v1994
    %v2005 = vadd.f32 %v2002, %v2003
    %v2006 = vadd.f32 %v2005, %v2004
    %2007 = vadd.xlane.f32.xlu0 %v2006
    %v2008 = vpop.xlane.xlu0 %2007
    %v2009 = vmul.f32 %v2008, %v1433
    %v2010 = vmul.f32 %v2001, %v2001
    %v2011 = vsub.f32 %v2009, %v2010
    %v2012 = vsub.f32 %v1853, %v2001
    %v2013 = vsub.f32 %v1855, %v2001
    %v2014 = vsub.f32 %v1994, %v2001
    %v2015 = vadd.f32 %v2011, 1e-05
    %v2016 = vrsqrt.pop %v2015
    %v2017 = vmul.f32 %v2012, %v2016
    %v2018 = vmul.f32 %v2013, %v2016
    %v2019 = vmul.f32 %v2014, %v2016
    %v2021 = vlaneseq
    %v2022 = vshrl.u32 %v2021, 7
    %v2023 = vsub.s32 0, %v2022
    %v2024 = vrot.slane %v1696, %v2023
    %v2025 = vlaneseq
    %v2026 = vshrl.u32 %v2025, 7
    %v2027 = vsub.s32 1, %v2026
    %v2028 = vrot.slane %v1696, %v2027
    %v2029 = vlaneseq
    %v2030 = vshrl.u32 %v2029, 7
    %v2031 = vsub.s32 2, %v2030
    %v2032 = vrot.slane %v1696, %v2031
    %v2036 = vmul.f32 %v2017, %v2024
    %v2037 = vmul.f32 %v2018, %v2028
    %v2038 = vmul.f32 %v2019, %v2032
    %v2040 = vlaneseq
    %v2041 = vshrl.u32 %v2040, 7
    %v2042 = vsub.s32 0, %v2041
    %v2043 = vrot.slane %v1698, %v2042
    %v2044 = vlaneseq
    %v2045 = vshrl.u32 %v2044, 7
    %v2046 = vsub.s32 1, %v2045
    %v2047 = vrot.slane %v1698, %v2046
    %v2048 = vlaneseq
    %v2049 = vshrl.u32 %v2048, 7
    %v2050 = vsub.s32 2, %v2049
    %v2051 = vrot.slane %v1698, %v2050
    %v2055 = vadd.f32 %v2036, %v2043
    %v2056 = vadd.f32 %v2037, %v2047
    %v2057 = vadd.f32 %v2038, %v2051
    %vm2058 = vcmp.gt.f32.partialorder %v2055, 0.0
    %vm2059 = vcmp.gt.f32.partialorder %v2056, 0.0
    %vm2060 = vcmp.gt.f32.partialorder %v2057, 0.0
    %v2061 = vmul.f32 %v2055, 0.01
    %v2062 = vmul.f32 %v2056, 0.01
    %v2063 = vmul.f32 %v2057, 0.01
    %v2064 = vsel %vm2058, %v2055, %v2061
    %v2065 = vsel %vm2059, %v2056, %v2062
    %v2066 = vsel %vm2060, %v2057, %v2063
    %v2067 = vld [vmem:[#allocation15] sm:$0xff]
    %v2068 = vld [vmem:[#allocation15 + $0x8] sm:$0xff]
    %v2069 = vld [vmem:[#allocation15 + $0x10] sm:$0xff]
    %v2070 = vld [vmem:[#allocation15 + $0x18] sm:$0xff]
    %v2071 = vld [vmem:[#allocation15 + $0x20] sm:$0xff]
    %v2072 = vld [vmem:[#allocation15 + $0x28] sm:$0xff]
    %v2073 = vld [vmem:[#allocation15 + $0x30] sm:$0xff]
    %v2074 = vld [vmem:[#allocation15 + $0x38] sm:$0xff]
    %v2075 = vld [vmem:[#allocation15 + $0x40] sm:$0xff]
    %v2076 = vld [vmem:[#allocation15 + $0x48] sm:$0xff]
    %v2077 = vld [vmem:[#allocation15 + $0x50] sm:$0xff]
    %v2078 = vld [vmem:[#allocation15 + $0x58] sm:$0xff]
    %v2079 = vld [vmem:[#allocation15 + $0x60] sm:$0xff]
    %v2080 = vld [vmem:[#allocation15 + $0x68] sm:$0xff]
    %v2081 = vld [vmem:[#allocation15 + $0x70] sm:$0xff]
    %v2082 = vld [vmem:[#allocation15 + $0x78] sm:$0xff]
    %v2083 = vld [vmem:[#allocation15 + $0x80] sm:$0xff]
    %v2084 = vld [vmem:[#allocation15 + $0x88] sm:$0xff]
    %v2085 = vld [vmem:[#allocation15 + $0x90] sm:$0xff]
    %v2086 = vld [vmem:[#allocation15 + $0x98] sm:$0xff]
    %v2087 = vld [vmem:[#allocation15 + $0xa0] sm:$0xff]
    %v2088 = vld [vmem:[#allocation15 + $0xa8] sm:$0xff]
    %v2089 = vld [vmem:[#allocation15 + $0xb0] sm:$0xff]
    %v2090 = vld [vmem:[#allocation15 + $0xb8] sm:$0xff]
    %v2091 = vld [vmem:[#allocation15 + $0xc0] sm:$0xff]
    %v2092 = vld [vmem:[#allocation15 + $0xc8] sm:$0xff]
    %v2093 = vld [vmem:[#allocation15 + $0xd0] sm:$0xff]
    %v2094 = vld [vmem:[#allocation15 + $0xd8] sm:$0xff]
    %v2095 = vld [vmem:[#allocation15 + $0xe0] sm:$0xff]
    %v2096 = vld [vmem:[#allocation15 + $0xe8] sm:$0xff]
    %v2097 = vld [vmem:[#allocation15 + $0xf0] sm:$0xff]
    %v2098 = vld [vmem:[#allocation15 + $0xf8] sm:$0xff]
    %v2099 = vld [vmem:[#allocation15 + $0x100] sm:$0xff]
    %v2100 = vld [vmem:[#allocation15 + $0x108] sm:$0xff]
    %v2101 = vld [vmem:[#allocation15 + $0x110] sm:$0xff]
    %v2102 = vld [vmem:[#allocation15 + $0x118] sm:$0xff]
    %v2103 = vld [vmem:[#allocation15 + $0x120] sm:$0xff]
    %v2104 = vld [vmem:[#allocation15 + $0x128] sm:$0xff]
    %v2105 = vld [vmem:[#allocation15 + $0x130] sm:$0xff]
    %v2106 = vld [vmem:[#allocation15 + $0x138] sm:$0xff]
    %v2107 = vld [vmem:[#allocation15 + $0x140] sm:$0xff]
    %v2108 = vld [vmem:[#allocation15 + $0x148] sm:$0xff]
    %v2109 = vld [vmem:[#allocation15 + $0x150] sm:$0xff]
    %v2110 = vld [vmem:[#allocation15 + $0x158] sm:$0xff]
    %v2111 = vld [vmem:[#allocation15 + $0x160] sm:$0xff]
    %v2112 = vld [vmem:[#allocation15 + $0x168] sm:$0xff]
    %v2113 = vld [vmem:[#allocation15 + $0x170] sm:$0xff]
    %v2114 = vld [vmem:[#allocation15 + $0x178] sm:$0xff]
    %v2115 = vld [vmem:[#allocation15 + $0x180] sm:$0xff]
    %v2116 = vld [vmem:[#allocation15 + $0x188] sm:$0xff]
    %v2117 = vld [vmem:[#allocation15 + $0x190] sm:$0xff]
    %v2118 = vld [vmem:[#allocation15 + $0x198] sm:$0xff]
    %v2119 = vld [vmem:[#allocation15 + $0x1a0] sm:$0xff]
    %v2120 = vld [vmem:[#allocation15 + $0x1a8] sm:$0xff]
    %v2121 = vld [vmem:[#allocation15 + $0x1b0] sm:$0xff]
    %v2122 = vld [vmem:[#allocation15 + $0x1b8] sm:$0xff]
    %v2123 = vld [vmem:[#allocation15 + $0x1c0] sm:$0xff]
    %v2124 = vld [vmem:[#allocation15 + $0x1c8] sm:$0xff]
    %v2125 = vld [vmem:[#allocation15 + $0x1d0] sm:$0xff]
    %v2126 = vld [vmem:[#allocation15 + $0x1d8] sm:$0xff]
    %v2127 = vld [vmem:[#allocation15 + $0x1e0] sm:$0xff]
    %v2128 = vld [vmem:[#allocation15 + $0x1e8] sm:$0xff]
    %v2129 = vld [vmem:[#allocation15 + $0x1f0] sm:$0xff]
    %v2130 = vld [vmem:[#allocation15 + $0x1f8] sm:$0xff]
    %v2131 = vld [vmem:[#allocation15 + $0x200] sm:$0xff]
    %v2132 = vld [vmem:[#allocation15 + $0x208] sm:$0xff]
    %v2133 = vld [vmem:[#allocation15 + $0x210] sm:$0xff]
    %v2134 = vld [vmem:[#allocation15 + $0x218] sm:$0xff]
    %v2135 = vld [vmem:[#allocation15 + $0x220] sm:$0xff]
    %v2136 = vld [vmem:[#allocation15 + $0x228] sm:$0xff]
    %v2137 = vld [vmem:[#allocation15 + $0x230] sm:$0xff]
    %v2138 = vld [vmem:[#allocation15 + $0x238] sm:$0xff]
    %v2139 = vld [vmem:[#allocation15 + $0x240] sm:$0xff]
    %v2140 = vld [vmem:[#allocation15 + $0x248] sm:$0xff]
    %v2141 = vld [vmem:[#allocation15 + $0x250] sm:$0xff]
    %v2142 = vld [vmem:[#allocation15 + $0x258] sm:$0xff]
    %v2143 = vld [vmem:[#allocation15 + $0x260] sm:$0xff]
    %v2144 = vld [vmem:[#allocation15 + $0x268] sm:$0xff]
    %v2145 = vld [vmem:[#allocation15 + $0x270] sm:$0xff]
    %v2146 = vld [vmem:[#allocation15 + $0x278] sm:$0xff]
    %v2147 = vld [vmem:[#allocation15 + $0x280] sm:$0xff]
    %v2148 = vld [vmem:[#allocation15 + $0x288] sm:$0xff]
    %v2149 = vld [vmem:[#allocation15 + $0x290] sm:$0xff]
    %v2150 = vld [vmem:[#allocation15 + $0x298] sm:$0xff]
    %v2151 = vld [vmem:[#allocation15 + $0x2a0] sm:$0xff]
    %v2152 = vld [vmem:[#allocation15 + $0x2a8] sm:$0xff]
    %v2153 = vld [vmem:[#allocation15 + $0x2b0] sm:$0xff]
    %v2154 = vld [vmem:[#allocation15 + $0x2b8] sm:$0xff]
    %v2155 = vld [vmem:[#allocation15 + $0x2c0] sm:$0xff]
    %v2156 = vld [vmem:[#allocation15 + $0x2c8] sm:$0xff]
    %v2157 = vld [vmem:[#allocation15 + $0x2d0] sm:$0xff]
    %v2158 = vld [vmem:[#allocation15 + $0x2d8] sm:$0xff]
    %v2159 = vld [vmem:[#allocation15 + $0x2e0] sm:$0xff]
    %v2160 = vld [vmem:[#allocation15 + $0x2e8] sm:$0xff]
    %v2161 = vld [vmem:[#allocation15 + $0x2f0] sm:$0xff]
    %v2162 = vld [vmem:[#allocation15 + $0x2f8] sm:$0xff]
    %v2163 = vld [vmem:[#allocation16] sm:$0x3]
    %v2164 = vld [vmem:[#allocation18] sm:$0x3]
    %v2165 = vld [vmem:[#allocation19] sm:$0x3]
    %v2167 = vlaneseq
    %v2168 = vshrl.u32 %v2167, 7
    %v2169 = vsub.s32 0, %v2168
    %v2170 = vrot.slane %v2163, %v2169
    %v2171 = vlaneseq
    %v2172 = vshrl.u32 %v2171, 7
    %v2173 = vsub.s32 1, %v2172
    %v2174 = vrot.slane %v2163, %v2173
    %2177 = vmatprep.subr.mxu0 %v2068
    %2178 = vmatpush1.msra.mxu0 %v2067
    %2179 = vmatprep.subr.mxu0 %v2070
    %2180 = vmatpush1.msra.mxu0 %v2069
    %2181 = vmatprep.subr.mxu0 %v2072
    %2182 = vmatpush1.msra.mxu0 %v2071
    %2183 = vmatprep.subr.mxu0 %v2074
    %2184 = vmatpush1.msra.mxu0 %v2073
    %2185 = vmatprep.subr.mxu0 %v2076
    %2186 = vmatpush1.msra.mxu0 %v2075
    %2187 = vmatprep.subr.mxu0 %v2078
    %2188 = vmatpush1.msra.mxu0 %v2077
    %2189 = vmatprep.subr.mxu0 %v2080
    %2190 = vmatpush1.msra.mxu0 %v2079
    %2191 = vmatprep.subr.mxu0 %v2082
    %2192 = vmatpush1.msra.mxu0 %v2081
    %2193 = vmatprep.subr.mxu0 %v2084
    %2194 = vmatpush1.msra.mxu0 %v2083
    %2195 = vmatprep.subr.mxu0 %v2086
    %2196 = vmatpush1.msra.mxu0 %v2085
    %2197 = vmatprep.subr.mxu0 %v2088
    %2198 = vmatpush1.msra.mxu0 %v2087
    %2199 = vmatprep.subr.mxu0 %v2090
    %2200 = vmatpush1.msra.mxu0 %v2089
    %2201 = vmatprep.subr.mxu0 %v2092
    %2202 = vmatpush1.msra.mxu0 %v2091
    %2203 = vmatprep.subr.mxu0 %v2094
    %2204 = vmatpush1.msra.mxu0 %v2093
    %2205 = vmatprep.subr.mxu0 %v2096
    %2206 = vmatpush1.msra.mxu0 %v2095
    %2207 = vmatprep.subr.mxu0 %v2098
    %2208 = vmatpush1.msra.mxu0 %v2097
    %2209 = vmatprep.subr.mxu0 %v2100
    %2210 = vmatpush1.msra.mxu0 %v2099
    %2211 = vmatprep.subr.mxu0 %v2102
    %2212 = vmatpush1.msra.mxu0 %v2101
    %2213 = vmatprep.subr.mxu0 %v2104
    %2214 = vmatpush1.msra.mxu0 %v2103
    %2215 = vmatprep.subr.mxu0 %v2106
    %2216 = vmatpush1.msra.mxu0 %v2105
    %2217 = vmatprep.subr.mxu0 %v2108
    %2218 = vmatpush1.msra.mxu0 %v2107
    %2219 = vmatprep.subr.mxu0 %v2110
    %2220 = vmatpush1.msra.mxu0 %v2109
    %2221 = vmatprep.subr.mxu0 %v2112
    %2222 = vmatpush1.msra.mxu0 %v2111
    %2223 = vmatprep.subr.mxu0 %v2114
    %2224 = vmatpush1.msra.mxu0 %v2113
    %2225 = vmatprep.subr.mxu0 %v2116
    %2226 = vmatpush1.msra.mxu0 %v2115
    %2227 = vmatprep.subr.mxu0 %v2118
    %2228 = vmatpush1.msra.mxu0 %v2117
    %2229 = vmatprep.subr.mxu0 %v2120
    %2230 = vmatpush1.msra.mxu0 %v2119
    %2231 = vmatprep.subr.mxu0 %v2122
    %2232 = vmatpush1.msra.mxu0 %v2121
    %2233 = vmatprep.subr.mxu0 %v2124
    %2234 = vmatpush1.msra.mxu0 %v2123
    %2235 = vmatprep.subr.mxu0 %v2126
    %2236 = vmatpush1.msra.mxu0 %v2125
    %2237 = vmatprep.subr.mxu0 %v2128
    %2238 = vmatpush1.msra.mxu0 %v2127
    %2239 = vmatprep.subr.mxu0 %v2130
    %2240 = vmatpush1.msra.mxu0 %v2129
    %2241 = vmatprep.mubr.f32.mxu0 %v1498
    %2242 = vmatmul.mubr.f32.gmra.mrb[0].mxu0 %v1497
    %v2243 = vpop.f32.mrb[0].mxu0
    %v2244 = vadd.f32 %v2170, %v2243
    %v2245 = vpop.f32.mrb[0].mxu0
    %v2246 = vadd.f32 %v2174, %v2245
    %2247 = vdwg.mxu0
    %2248 = vmatprep.subr.mxu0 %v2132
    %2249 = vmatpush1.msra.mxu0 %v2131
    %2250 = vmatprep.subr.mxu0 %v2134
    %2251 = vmatpush1.msra.mxu0 %v2133
    %2252 = vmatprep.subr.mxu0 %v2136
    %2253 = vmatpush1.msra.mxu0 %v2135
    %2254 = vmatprep.subr.mxu0 %v2138
    %2255 = vmatpush1.msra.mxu0 %v2137
    %2256 = vmatprep.subr.mxu0 %v2140
    %2257 = vmatpush1.msra.mxu0 %v2139
    %2258 = vmatprep.subr.mxu0 %v2142
    %2259 = vmatpush1.msra.mxu0 %v2141
    %2260 = vmatprep.subr.mxu0 %v2144
    %2261 = vmatpush1.msra.mxu0 %v2143
    %2262 = vmatprep.subr.mxu0 %v2146
    %2263 = vmatpush1.msra.mxu0 %v2145
    %2264 = vmatprep.subr.mxu0 %v2148
    %2265 = vmatpush1.msra.mxu0 %v2147
    %2266 = vmatprep.subr.mxu0 %v2150
    %2267 = vmatpush1.msra.mxu0 %v2149
    %2268 = vmatprep.subr.mxu0 %v2152
    %2269 = vmatpush1.msra.mxu0 %v2151
    %2270 = vmatprep.subr.mxu0 %v2154
    %2271 = vmatpush1.msra.mxu0 %v2153
    %2272 = vmatprep.subr.mxu0 %v2156
    %2273 = vmatpush1.msra.mxu0 %v2155
    %2274 = vmatprep.subr.mxu0 %v2158
    %2275 = vmatpush1.msra.mxu0 %v2157
    %2276 = vmatprep.subr.mxu0 %v2160
    %2277 = vmatpush1.msra.mxu0 %v2159
    %2278 = vmatprep.subr.mxu0 %v2162
    %2279 = vmatpush1.msra.mxu0 %v2161
    %2280 = vmatprep.subr.mxu0 0.0
    %2281 = vmatpush1.msra.mxu0 0.0
    %2282 = vmatprep.subr.mxu0 0.0
    %2283 = vmatpush1.msra.mxu0 0.0
    %2284 = vmatprep.subr.mxu0 0.0
    %2285 = vmatpush1.msra.mxu0 0.0
    %2286 = vmatprep.subr.mxu0 0.0
    %2287 = vmatpush1.msra.mxu0 0.0
    %2288 = vmatprep.subr.mxu0 0.0
    %2289 = vmatpush1.msra.mxu0 0.0
    %2290 = vmatprep.subr.mxu0 0.0
    %2291 = vmatpush1.msra.mxu0 0.0
    %2292 = vmatprep.subr.mxu0 0.0
    %2293 = vmatpush1.msra.mxu0 0.0
    %2294 = vmatprep.subr.mxu0 0.0
    %2295 = vmatpush1.msra.mxu0 0.0
    %2296 = vmatprep.subr.mxu0 0.0
    %2297 = vmatpush1.msra.mxu0 0.0
    %2298 = vmatprep.subr.mxu0 0.0
    %2299 = vmatpush1.msra.mxu0 0.0
    %2300 = vmatprep.subr.mxu0 0.0
    %2301 = vmatpush1.msra.mxu0 0.0
    %2302 = vmatprep.subr.mxu0 0.0
    %2303 = vmatpush1.msra.mxu0 0.0
    %2304 = vmatprep.subr.mxu0 0.0
    %2305 = vmatpush1.msra.mxu0 0.0
    %2306 = vmatprep.subr.mxu0 0.0
    %2307 = vmatpush1.msra.mxu0 0.0
    %2308 = vmatprep.subr.mxu0 0.0
    %2309 = vmatpush1.msra.mxu0 0.0
    %2310 = vmatprep.subr.mxu0 0.0
    %2311 = vmatpush1.msra.mxu0 0.0
    %2312 = vmatprep.mubr.f32.mxu0 0.0
    %2313 = vmatmul.mubr.f32.gmra.mrb[0].mxu0 %v1499
    %v2314 = vpop.f32.mrb[0].mxu0
    %v2315 = vadd.f32 %v2244, %v2314
    %v2316 = vpop.f32.mrb[0].mxu0
    %v2317 = vadd.f32 %v2246, %v2316
    %2318 = vdwg.mxu0
    %v2319 = vadd.f32 %v2315, %v2317
    %2320 = vadd.xlane.f32.xlu0 %v2319
    %v2321 = vpop.xlane.xlu0 %2320
    %v2322 = vrcp.pop 256.0
    %v2323 = vmul.f32 %v2321, %v2322
    %v2324 = vmul.f32 %v2315, %v2315
    %v2325 = vmul.f32 %v2317, %v2317
    %v2326 = vadd.f32 %v2324, %v2325
    %2327 = vadd.xlane.f32.xlu0 %v2326
    %v2328 = vpop.xlane.xlu0 %2327
    %v2329 = vmul.f32 %v2328, %v2322
    %v2330 = vmul.f32 %v2323, %v2323
    %v2331 = vsub.f32 %v2329, %v2330
    %v2332 = vsub.f32 %v2315, %v2323
    %v2333 = vsub.f32 %v2317, %v2323
    %v2334 = vadd.f32 %v2331, 1e-05
    %v2335 = vrsqrt.pop %v2334
    %v2336 = vmul.f32 %v2332, %v2335
    %v2337 = vmul.f32 %v2333, %v2335
    %v2339 = vlaneseq
    %v2340 = vshrl.u32 %v2339, 7
    %v2341 = vsub.s32 0, %v2340
    %v2342 = vrot.slane %v2164, %v2341
    %v2343 = vlaneseq
    %v2344 = vshrl.u32 %v2343, 7
    %v2345 = vsub.s32 1, %v2344
    %v2346 = vrot.slane %v2164, %v2345
    %v2349 = vmul.f32 %v2336, %v2342
    %v2350 = vmul.f32 %v2337, %v2346
    %v2352 = vlaneseq
    %v2353 = vshrl.u32 %v2352, 7
    %v2354 = vsub.s32 0, %v2353
    %v2355 = vrot.slane %v2165, %v2354
    %v2356 = vlaneseq
    %v2357 = vshrl.u32 %v2356, 7
    %v2358 = vsub.s32 1, %v2357
    %v2359 = vrot.slane %v2165, %v2358
    %v2362 = vadd.f32 %v2349, %v2355
    %v2363 = vadd.f32 %v2350, %v2359
    %vm2364 = vcmp.gt.f32.partialorder %v2362, 0.0
    %vm2365 = vcmp.gt.f32.partialorder %v2363, 0.0
    %v2366 = vmul.f32 %v2362, 0.01
    %v2367 = vmul.f32 %v2363, 0.01
    %v2368 = vsel %vm2364, %v2362, %v2366
    %v2369 = vsel %vm2365, %v2363, %v2367
    %s2370 = scalar_lea.vmem [#allocation15], 768
    %v2371 = vld [vmem:[%s2370] sm:$0xff]
    %v2372 = vld [vmem:[%s2370 + $0x8] sm:$0xff]
    %v2373 = vld [vmem:[%s2370 + $0x10] sm:$0xff]
    %v2374 = vld [vmem:[%s2370 + $0x18] sm:$0xff]
    %v2375 = vld [vmem:[%s2370 + $0x20] sm:$0xff]
    %v2376 = vld [vmem:[%s2370 + $0x28] sm:$0xff]
    %v2377 = vld [vmem:[%s2370 + $0x30] sm:$0xff]
    %v2378 = vld [vmem:[%s2370 + $0x38] sm:$0xff]
    %v2379 = vld [vmem:[%s2370 + $0x40] sm:$0xff]
    %v2380 = vld [vmem:[%s2370 + $0x48] sm:$0xff]
    %v2381 = vld [vmem:[%s2370 + $0x50] sm:$0xff]
    %v2382 = vld [vmem:[%s2370 + $0x58] sm:$0xff]
    %v2383 = vld [vmem:[%s2370 + $0x60] sm:$0xff]
    %v2384 = vld [vmem:[%s2370 + $0x68] sm:$0xff]
    %v2385 = vld [vmem:[%s2370 + $0x70] sm:$0xff]
    %v2386 = vld [vmem:[%s2370 + $0x78] sm:$0xff]
    %v2387 = vld [vmem:[%s2370 + $0x80] sm:$0xff]
    %v2388 = vld [vmem:[%s2370 + $0x88] sm:$0xff]
    %v2389 = vld [vmem:[%s2370 + $0x90] sm:$0xff]
    %v2390 = vld [vmem:[%s2370 + $0x98] sm:$0xff]
    %v2391 = vld [vmem:[%s2370 + $0xa0] sm:$0xff]
    %v2392 = vld [vmem:[%s2370 + $0xa8] sm:$0xff]
    %v2393 = vld [vmem:[%s2370 + $0xb0] sm:$0xff]
    %v2394 = vld [vmem:[%s2370 + $0xb8] sm:$0xff]
    %v2395 = vld [vmem:[%s2370 + $0xc0] sm:$0xff]
    %v2396 = vld [vmem:[%s2370 + $0xc8] sm:$0xff]
    %v2397 = vld [vmem:[%s2370 + $0xd0] sm:$0xff]
    %v2398 = vld [vmem:[%s2370 + $0xd8] sm:$0xff]
    %v2399 = vld [vmem:[%s2370 + $0xe0] sm:$0xff]
    %v2400 = vld [vmem:[%s2370 + $0xe8] sm:$0xff]
    %v2401 = vld [vmem:[%s2370 + $0xf0] sm:$0xff]
    %v2402 = vld [vmem:[%s2370 + $0xf8] sm:$0xff]
    %v2403 = vld [vmem:[%s2370 + $0x100] sm:$0xff]
    %v2404 = vld [vmem:[%s2370 + $0x108] sm:$0xff]
    %v2405 = vld [vmem:[%s2370 + $0x110] sm:$0xff]
    %v2406 = vld [vmem:[%s2370 + $0x118] sm:$0xff]
    %v2407 = vld [vmem:[%s2370 + $0x120] sm:$0xff]
    %v2408 = vld [vmem:[%s2370 + $0x128] sm:$0xff]
    %v2409 = vld [vmem:[%s2370 + $0x130] sm:$0xff]
    %v2410 = vld [vmem:[%s2370 + $0x138] sm:$0xff]
    %v2411 = vld [vmem:[%s2370 + $0x140] sm:$0xff]
    %v2412 = vld [vmem:[%s2370 + $0x148] sm:$0xff]
    %v2413 = vld [vmem:[%s2370 + $0x150] sm:$0xff]
    %v2414 = vld [vmem:[%s2370 + $0x158] sm:$0xff]
    %v2415 = vld [vmem:[%s2370 + $0x160] sm:$0xff]
    %v2416 = vld [vmem:[%s2370 + $0x168] sm:$0xff]
    %v2417 = vld [vmem:[%s2370 + $0x170] sm:$0xff]
    %v2418 = vld [vmem:[%s2370 + $0x178] sm:$0xff]
    %v2419 = vld [vmem:[%s2370 + $0x180] sm:$0xff]
    %v2420 = vld [vmem:[%s2370 + $0x188] sm:$0xff]
    %v2421 = vld [vmem:[%s2370 + $0x190] sm:$0xff]
    %v2422 = vld [vmem:[%s2370 + $0x198] sm:$0xff]
    %v2423 = vld [vmem:[%s2370 + $0x1a0] sm:$0xff]
    %v2424 = vld [vmem:[%s2370 + $0x1a8] sm:$0xff]
    %v2425 = vld [vmem:[%s2370 + $0x1b0] sm:$0xff]
    %v2426 = vld [vmem:[%s2370 + $0x1b8] sm:$0xff]
    %v2427 = vld [vmem:[%s2370 + $0x1c0] sm:$0xff]
    %v2428 = vld [vmem:[%s2370 + $0x1c8] sm:$0xff]
    %v2429 = vld [vmem:[%s2370 + $0x1d0] sm:$0xff]
    %v2430 = vld [vmem:[%s2370 + $0x1d8] sm:$0xff]
    %v2431 = vld [vmem:[%s2370 + $0x1e0] sm:$0xff]
    %v2432 = vld [vmem:[%s2370 + $0x1e8] sm:$0xff]
    %v2433 = vld [vmem:[%s2370 + $0x1f0] sm:$0xff]
    %v2434 = vld [vmem:[%s2370 + $0x1f8] sm:$0xff]
    %v2435 = vld [vmem:[%s2370 + $0x200] sm:$0xff]
    %v2436 = vld [vmem:[%s2370 + $0x208] sm:$0xff]
    %v2437 = vld [vmem:[%s2370 + $0x210] sm:$0xff]
    %v2438 = vld [vmem:[%s2370 + $0x218] sm:$0xff]
    %v2439 = vld [vmem:[%s2370 + $0x220] sm:$0xff]
    %v2440 = vld [vmem:[%s2370 + $0x228] sm:$0xff]
    %v2441 = vld [vmem:[%s2370 + $0x230] sm:$0xff]
    %v2442 = vld [vmem:[%s2370 + $0x238] sm:$0xff]
    %v2443 = vld [vmem:[%s2370 + $0x240] sm:$0xff]
    %v2444 = vld [vmem:[%s2370 + $0x248] sm:$0xff]
    %v2445 = vld [vmem:[%s2370 + $0x250] sm:$0xff]
    %v2446 = vld [vmem:[%s2370 + $0x258] sm:$0xff]
    %v2447 = vld [vmem:[%s2370 + $0x260] sm:$0xff]
    %v2448 = vld [vmem:[%s2370 + $0x268] sm:$0xff]
    %v2449 = vld [vmem:[%s2370 + $0x270] sm:$0xff]
    %v2450 = vld [vmem:[%s2370 + $0x278] sm:$0xff]
    %v2451 = vld [vmem:[%s2370 + $0x280] sm:$0xff]
    %v2452 = vld [vmem:[%s2370 + $0x288] sm:$0xff]
    %v2453 = vld [vmem:[%s2370 + $0x290] sm:$0xff]
    %v2454 = vld [vmem:[%s2370 + $0x298] sm:$0xff]
    %v2455 = vld [vmem:[%s2370 + $0x2a0] sm:$0xff]
    %v2456 = vld [vmem:[%s2370 + $0x2a8] sm:$0xff]
    %v2457 = vld [vmem:[%s2370 + $0x2b0] sm:$0xff]
    %v2458 = vld [vmem:[%s2370 + $0x2b8] sm:$0xff]
    %v2459 = vld [vmem:[%s2370 + $0x2c0] sm:$0xff]
    %v2460 = vld [vmem:[%s2370 + $0x2c8] sm:$0xff]
    %v2461 = vld [vmem:[%s2370 + $0x2d0] sm:$0xff]
    %v2462 = vld [vmem:[%s2370 + $0x2d8] sm:$0xff]
    %v2463 = vld [vmem:[%s2370 + $0x2e0] sm:$0xff]
    %v2464 = vld [vmem:[%s2370 + $0x2e8] sm:$0xff]
    %v2465 = vld [vmem:[%s2370 + $0x2f0] sm:$0xff]
    %v2466 = vld [vmem:[%s2370 + $0x2f8] sm:$0xff]
    %s2467 = scalar_lea.vmem [#allocation16], 2
    %v2468 = vld [vmem:[%s2467] sm:$0x3]
    %s2469 = scalar_lea.vmem [#allocation18], 2
    %v2470 = vld [vmem:[%s2469] sm:$0x3]
    %s2471 = scalar_lea.vmem [#allocation19], 2
    %v2472 = vld [vmem:[%s2471] sm:$0x3]
    %v2474 = vlaneseq
    %v2475 = vshrl.u32 %v2474, 7
    %v2476 = vsub.s32 0, %v2475
    %v2477 = vrot.slane %v2468, %v2476
    %v2478 = vlaneseq
    %v2479 = vshrl.u32 %v2478, 7
    %v2480 = vsub.s32 1, %v2479
    %v2481 = vrot.slane %v2468, %v2480
    %2484 = vmatprep.subr.mxu0 %v2372
    %2485 = vmatpush1.msra.mxu0 %v2371
    %2486 = vmatprep.subr.mxu0 %v2374
    %2487 = vmatpush1.msra.mxu0 %v2373
    %2488 = vmatprep.subr.mxu0 %v2376
    %2489 = vmatpush1.msra.mxu0 %v2375
    %2490 = vmatprep.subr.mxu0 %v2378
    %2491 = vmatpush1.msra.mxu0 %v2377
    %2492 = vmatprep.subr.mxu0 %v2380
    %2493 = vmatpush1.msra.mxu0 %v2379
    %2494 = vmatprep.subr.mxu0 %v2382
    %2495 = vmatpush1.msra.mxu0 %v2381
    %2496 = vmatprep.subr.mxu0 %v2384
    %2497 = vmatpush1.msra.mxu0 %v2383
    %2498 = vmatprep.subr.mxu0 %v2386
    %2499 = vmatpush1.msra.mxu0 %v2385
    %2500 = vmatprep.subr.mxu0 %v2388
    %2501 = vmatpush1.msra.mxu0 %v2387
    %2502 = vmatprep.subr.mxu0 %v2390
    %2503 = vmatpush1.msra.mxu0 %v2389
    %2504 = vmatprep.subr.mxu0 %v2392
    %2505 = vmatpush1.msra.mxu0 %v2391
    %2506 = vmatprep.subr.mxu0 %v2394
    %2507 = vmatpush1.msra.mxu0 %v2393
    %2508 = vmatprep.subr.mxu0 %v2396
    %2509 = vmatpush1.msra.mxu0 %v2395
    %2510 = vmatprep.subr.mxu0 %v2398
    %2511 = vmatpush1.msra.mxu0 %v2397
    %2512 = vmatprep.subr.mxu0 %v2400
    %2513 = vmatpush1.msra.mxu0 %v2399
    %2514 = vmatprep.subr.mxu0 %v2402
    %2515 = vmatpush1.msra.mxu0 %v2401
    %2516 = vmatprep.subr.mxu0 %v2404
    %2517 = vmatpush1.msra.mxu0 %v2403
    %2518 = vmatprep.subr.mxu0 %v2406
    %2519 = vmatpush1.msra.mxu0 %v2405
    %2520 = vmatprep.subr.mxu0 %v2408
    %2521 = vmatpush1.msra.mxu0 %v2407
    %2522 = vmatprep.subr.mxu0 %v2410
    %2523 = vmatpush1.msra.mxu0 %v2409
    %2524 = vmatprep.subr.mxu0 %v2412
    %2525 = vmatpush1.msra.mxu0 %v2411
    %2526 = vmatprep.subr.mxu0 %v2414
    %2527 = vmatpush1.msra.mxu0 %v2413
    %2528 = vmatprep.subr.mxu0 %v2416
    %2529 = vmatpush1.msra.mxu0 %v2415
    %2530 = vmatprep.subr.mxu0 %v2418
    %2531 = vmatpush1.msra.mxu0 %v2417
    %2532 = vmatprep.subr.mxu0 %v2420
    %2533 = vmatpush1.msra.mxu0 %v2419
    %2534 = vmatprep.subr.mxu0 %v2422
    %2535 = vmatpush1.msra.mxu0 %v2421
    %2536 = vmatprep.subr.mxu0 %v2424
    %2537 = vmatpush1.msra.mxu0 %v2423
    %2538 = vmatprep.subr.mxu0 %v2426
    %2539 = vmatpush1.msra.mxu0 %v2425
    %2540 = vmatprep.subr.mxu0 %v2428
    %2541 = vmatpush1.msra.mxu0 %v2427
    %2542 = vmatprep.subr.mxu0 %v2430
    %2543 = vmatpush1.msra.mxu0 %v2429
    %2544 = vmatprep.subr.mxu0 %v2432
    %2545 = vmatpush1.msra.mxu0 %v2431
    %2546 = vmatprep.subr.mxu0 %v2434
    %2547 = vmatpush1.msra.mxu0 %v2433
    %2548 = vmatprep.mubr.f32.mxu0 %v2065
    %2549 = vmatmul.mubr.f32.gmra.mrb[0].mxu0 %v2064
    %v2550 = vpop.f32.mrb[0].mxu0
    %v2551 = vadd.f32 %v2477, %v2550
    %v2552 = vpop.f32.mrb[0].mxu0
    %v2553 = vadd.f32 %v2481, %v2552
    %2554 = vdwg.mxu0
    %2555 = vmatprep.subr.mxu0 %v2436
    %2556 = vmatpush1.msra.mxu0 %v2435
    %2557 = vmatprep.subr.mxu0 %v2438
    %2558 = vmatpush1.msra.mxu0 %v2437
    %2559 = vmatprep.subr.mxu0 %v2440
    %2560 = vmatpush1.msra.mxu0 %v2439
    %2561 = vmatprep.subr.mxu0 %v2442
    %2562 = vmatpush1.msra.mxu0 %v2441
    %2563 = vmatprep.subr.mxu0 %v2444
    %2564 = vmatpush1.msra.mxu0 %v2443
    %2565 = vmatprep.subr.mxu0 %v2446
    %2566 = vmatpush1.msra.mxu0 %v2445
    %2567 = vmatprep.subr.mxu0 %v2448
    %2568 = vmatpush1.msra.mxu0 %v2447
    %2569 = vmatprep.subr.mxu0 %v2450
    %2570 = vmatpush1.msra.mxu0 %v2449
    %2571 = vmatprep.subr.mxu0 %v2452
    %2572 = vmatpush1.msra.mxu0 %v2451
    %2573 = vmatprep.subr.mxu0 %v2454
    %2574 = vmatpush1.msra.mxu0 %v2453
    %2575 = vmatprep.subr.mxu0 %v2456
    %2576 = vmatpush1.msra.mxu0 %v2455
    %2577 = vmatprep.subr.mxu0 %v2458
    %2578 = vmatpush1.msra.mxu0 %v2457
    %2579 = vmatprep.subr.mxu0 %v2460
    %2580 = vmatpush1.msra.mxu0 %v2459
    %2581 = vmatprep.subr.mxu0 %v2462
    %2582 = vmatpush1.msra.mxu0 %v2461
    %2583 = vmatprep.subr.mxu0 %v2464
    %2584 = vmatpush1.msra.mxu0 %v2463
    %2585 = vmatprep.subr.mxu0 %v2466
    %2586 = vmatpush1.msra.mxu0 %v2465
    %2587 = vmatprep.subr.mxu0 0.0
    %2588 = vmatpush1.msra.mxu0 0.0
    %2589 = vmatprep.subr.mxu0 0.0
    %2590 = vmatpush1.msra.mxu0 0.0
    %2591 = vmatprep.subr.mxu0 0.0
    %2592 = vmatpush1.msra.mxu0 0.0
    %2593 = vmatprep.subr.mxu0 0.0
    %2594 = vmatpush1.msra.mxu0 0.0
    %2595 = vmatprep.subr.mxu0 0.0
    %2596 = vmatpush1.msra.mxu0 0.0
    %2597 = vmatprep.subr.mxu0 0.0
    %2598 = vmatpush1.msra.mxu0 0.0
    %2599 = vmatprep.subr.mxu0 0.0
    %2600 = vmatpush1.msra.mxu0 0.0
    %2601 = vmatprep.subr.mxu0 0.0
    %2602 = vmatpush1.msra.mxu0 0.0
    %2603 = vmatprep.subr.mxu0 0.0
    %2604 = vmatpush1.msra.mxu0 0.0
    %2605 = vmatprep.subr.mxu0 0.0
    %2606 = vmatpush1.msra.mxu0 0.0
    %2607 = vmatprep.subr.mxu0 0.0
    %2608 = vmatpush1.msra.mxu0 0.0
    %2609 = vmatprep.subr.mxu0 0.0
    %2610 = vmatpush1.msra.mxu0 0.0
    %2611 = vmatprep.subr.mxu0 0.0
    %2612 = vmatpush1.msra.mxu0 0.0
    %2613 = vmatprep.subr.mxu0 0.0
    %2614 = vmatpush1.msra.mxu0 0.0
    %2615 = vmatprep.subr.mxu0 0.0
    %2616 = vmatpush1.msra.mxu0 0.0
    %2617 = vmatprep.subr.mxu0 0.0
    %2618 = vmatpush1.msra.mxu0 0.0
    %2619 = vmatprep.mubr.f32.mxu0 0.0
    %2620 = vmatmul.mubr.f32.gmra.mrb[0].mxu0 %v2066
    %v2621 = vpop.f32.mrb[0].mxu0
    %v2622 = vadd.f32 %v2551, %v2621
    %v2623 = vpop.f32.mrb[0].mxu0
    %v2624 = vadd.f32 %v2553, %v2623
    %2625 = vdwg.mxu0
    %v2626 = vadd.f32 %v2622, %v2624
    %2627 = vadd.xlane.f32.xlu0 %v2626
    %v2628 = vpop.xlane.xlu0 %2627
    %v2629 = vmul.f32 %v2628, %v2322
    %v2630 = vmul.f32 %v2622, %v2622
    %v2631 = vmul.f32 %v2624, %v2624
    %v2632 = vadd.f32 %v2630, %v2631
    %2633 = vadd.xlane.f32.xlu0 %v2632
    %v2634 = vpop.xlane.xlu0 %2633
    %v2635 = vmul.f32 %v2634, %v2322
    %v2636 = vmul.f32 %v2629, %v2629
    %v2637 = vsub.f32 %v2635, %v2636
    %v2638 = vsub.f32 %v2622, %v2629
    %v2639 = vsub.f32 %v2624, %v2629
    %v2640 = vadd.f32 %v2637, 1e-05
    %v2641 = vrsqrt.pop %v2640
    %v2642 = vmul.f32 %v2638, %v2641
    %v2643 = vmul.f32 %v2639, %v2641
    %v2645 = vlaneseq
    %v2646 = vshrl.u32 %v2645, 7
    %v2647 = vsub.s32 0, %v2646
    %v2648 = vrot.slane %v2470, %v2647
    %v2649 = vlaneseq
    %v2650 = vshrl.u32 %v2649, 7
    %v2651 = vsub.s32 1, %v2650
    %v2652 = vrot.slane %v2470, %v2651
    %v2655 = vmul.f32 %v2642, %v2648
    %v2656 = vmul.f32 %v2643, %v2652
    %v2658 = vlaneseq
    %v2659 = vshrl.u32 %v2658, 7
    %v2660 = vsub.s32 0, %v2659
    %v2661 = vrot.slane %v2472, %v2660
    %v2662 = vlaneseq
    %v2663 = vshrl.u32 %v2662, 7
    %v2664 = vsub.s32 1, %v2663
    %v2665 = vrot.slane %v2472, %v2664
    %v2668 = vadd.f32 %v2655, %v2661
    %v2669 = vadd.f32 %v2656, %v2665
    %vm2670 = vcmp.gt.f32.partialorder %v2668, 0.0
    %vm2671 = vcmp.gt.f32.partialorder %v2669, 0.0
    %v2672 = vmul.f32 %v2668, 0.01
    %v2673 = vmul.f32 %v2669, 0.01
    %v2674 = vsel %vm2670, %v2668, %v2672
    %v2675 = vsel %vm2671, %v2669, %v2673
    %v2676 = vld [vmem:[#allocation21] sm:$0xff]
    %v2677 = vld [vmem:[#allocation21 + $0x8] sm:$0xff]
    %v2678 = vld [vmem:[#allocation21 + $0x10] sm:$0xff]
    %v2679 = vld [vmem:[#allocation21 + $0x18] sm:$0xff]
    %v2680 = vld [vmem:[#allocation21 + $0x20] sm:$0xff]
    %v2681 = vld [vmem:[#allocation21 + $0x28] sm:$0xff]
    %v2682 = vld [vmem:[#allocation21 + $0x30] sm:$0xff]
    %v2683 = vld [vmem:[#allocation21 + $0x38] sm:$0xff]
    %v2684 = vld [vmem:[#allocation21 + $0x40] sm:$0xff]
    %v2685 = vld [vmem:[#allocation21 + $0x48] sm:$0xff]
    %v2686 = vld [vmem:[#allocation21 + $0x50] sm:$0xff]
    %v2687 = vld [vmem:[#allocation21 + $0x58] sm:$0xff]
    %v2688 = vld [vmem:[#allocation21 + $0x60] sm:$0xff]
    %v2689 = vld [vmem:[#allocation21 + $0x68] sm:$0xff]
    %v2690 = vld [vmem:[#allocation21 + $0x70] sm:$0xff]
    %v2691 = vld [vmem:[#allocation21 + $0x78] sm:$0xff]
    %v2692 = vld [vmem:[#allocation21 + $0x80] sm:$0xff]
    %v2693 = vld [vmem:[#allocation21 + $0x88] sm:$0xff]
    %v2694 = vld [vmem:[#allocation21 + $0x90] sm:$0xff]
    %v2695 = vld [vmem:[#allocation21 + $0x98] sm:$0xff]
    %v2696 = vld [vmem:[#allocation21 + $0xa0] sm:$0xff]
    %v2697 = vld [vmem:[#allocation21 + $0xa8] sm:$0xff]
    %v2698 = vld [vmem:[#allocation21 + $0xb0] sm:$0xff]
    %v2699 = vld [vmem:[#allocation21 + $0xb8] sm:$0xff]
    %v2700 = vld [vmem:[#allocation21 + $0xc0] sm:$0xff]
    %v2701 = vld [vmem:[#allocation21 + $0xc8] sm:$0xff]
    %v2702 = vld [vmem:[#allocation21 + $0xd0] sm:$0xff]
    %v2703 = vld [vmem:[#allocation21 + $0xd8] sm:$0xff]
    %v2704 = vld [vmem:[#allocation21 + $0xe0] sm:$0xff]
    %v2705 = vld [vmem:[#allocation21 + $0xe8] sm:$0xff]
    %v2706 = vld [vmem:[#allocation21 + $0xf0] sm:$0xff]
    %v2707 = vld [vmem:[#allocation21 + $0xf8] sm:$0xff]
    %v2708 = vld [vmem:[#allocation22] sm:$0x1]
    %v2709 = vld [vmem:[#allocation24] sm:$0x1]
    %v2710 = vld [vmem:[#allocation25] sm:$0x1]
    %v2712 = vlaneseq
    %v2713 = vshrl.u32 %v2712, 7
    %v2714 = vsub.s32 0, %v2713
    %v2715 = vrot.slane %v2708, %v2714
    %2717 = vmatprep.subr.mxu0 0.0
    %2718 = vmatpush1.msra.mxu0 %v2676
    %2719 = vmatprep.subr.mxu0 0.0
    %2720 = vmatpush1.msra.mxu0 %v2677
    %2721 = vmatprep.subr.mxu0 0.0
    %2722 = vmatpush1.msra.mxu0 %v2678
    %2723 = vmatprep.subr.mxu0 0.0
    %2724 = vmatpush1.msra.mxu0 %v2679
    %2725 = vmatprep.subr.mxu0 0.0
    %2726 = vmatpush1.msra.mxu0 %v2680
    %2727 = vmatprep.subr.mxu0 0.0
    %2728 = vmatpush1.msra.mxu0 %v2681
    %2729 = vmatprep.subr.mxu0 0.0
    %2730 = vmatpush1.msra.mxu0 %v2682
    %2731 = vmatprep.subr.mxu0 0.0
    %2732 = vmatpush1.msra.mxu0 %v2683
    %2733 = vmatprep.subr.mxu0 0.0
    %2734 = vmatpush1.msra.mxu0 %v2684
    %2735 = vmatprep.subr.mxu0 0.0
    %2736 = vmatpush1.msra.mxu0 %v2685
    %2737 = vmatprep.subr.mxu0 0.0
    %2738 = vmatpush1.msra.mxu0 %v2686
    %2739 = vmatprep.subr.mxu0 0.0
    %2740 = vmatpush1.msra.mxu0 %v2687
    %2741 = vmatprep.subr.mxu0 0.0
    %2742 = vmatpush1.msra.mxu0 %v2688
    %2743 = vmatprep.subr.mxu0 0.0
    %2744 = vmatpush1.msra.mxu0 %v2689
    %2745 = vmatprep.subr.mxu0 0.0
    %2746 = vmatpush1.msra.mxu0 %v2690
    %2747 = vmatprep.subr.mxu0 0.0
    %2748 = vmatpush1.msra.mxu0 %v2691
    %2749 = vmatprep.subr.mxu0 0.0
    %2750 = vmatpush1.msra.mxu0 %v2692
    %2751 = vmatprep.subr.mxu0 0.0
    %2752 = vmatpush1.msra.mxu0 %v2693
    %2753 = vmatprep.subr.mxu0 0.0
    %2754 = vmatpush1.msra.mxu0 %v2694
    %2755 = vmatprep.subr.mxu0 0.0
    %2756 = vmatpush1.msra.mxu0 %v2695
    %2757 = vmatprep.subr.mxu0 0.0
    %2758 = vmatpush1.msra.mxu0 %v2696
    %2759 = vmatprep.subr.mxu0 0.0
    %2760 = vmatpush1.msra.mxu0 %v2697
    %2761 = vmatprep.subr.mxu0 0.0
    %2762 = vmatpush1.msra.mxu0 %v2698
    %2763 = vmatprep.subr.mxu0 0.0
    %2764 = vmatpush1.msra.mxu0 %v2699
    %2765 = vmatprep.subr.mxu0 0.0
    %2766 = vmatpush1.msra.mxu0 %v2700
    %2767 = vmatprep.subr.mxu0 0.0
    %2768 = vmatpush1.msra.mxu0 %v2701
    %2769 = vmatprep.subr.mxu0 0.0
    %2770 = vmatpush1.msra.mxu0 %v2702
    %2771 = vmatprep.subr.mxu0 0.0
    %2772 = vmatpush1.msra.mxu0 %v2703
    %2773 = vmatprep.subr.mxu0 0.0
    %2774 = vmatpush1.msra.mxu0 %v2704
    %2775 = vmatprep.subr.mxu0 0.0
    %2776 = vmatpush1.msra.mxu0 %v2705
    %2777 = vmatprep.subr.mxu0 0.0
    %2778 = vmatpush1.msra.mxu0 %v2706
    %2779 = vmatprep.subr.mxu0 0.0
    %2780 = vmatpush1.msra.mxu0 %v2707
    %2781 = vmatprep.mubr.f32.mxu0 %v2369
    %2782 = vmatmul.mubr.f32.gmra.mrb[0].mxu0 %v2368
    %v2783 = vpop.f32.mrb[0].mxu0
    %v2784 = vadd.f32 %v2715, %v2783
    %v2785 = vpop.f32.mrb[0].mxu0
    %2786 = vdwg.mxu0
    %2787 = vadd.xlane.f32.xlu0 %v2784
    %v2788 = vpop.xlane.xlu0 %2787
    %v2789 = vrcp.pop 128.0
    %v2790 = vmul.f32 %v2788, %v2789
    %v2791 = vmul.f32 %v2784, %v2784
    %2792 = vadd.xlane.f32.xlu0 %v2791
    %v2793 = vpop.xlane.xlu0 %2792
    %v2794 = vmul.f32 %v2793, %v2789
    %v2795 = vmul.f32 %v2790, %v2790
    %v2796 = vsub.f32 %v2794, %v2795
    %v2797 = vsub.f32 %v2784, %v2790
    %v2798 = vadd.f32 %v2796, 1e-05
    %v2799 = vrsqrt.pop %v2798
    %v2800 = vmul.f32 %v2797, %v2799
    %v2802 = vlaneseq
    %v2803 = vshrl.u32 %v2802, 7
    %v2804 = vsub.s32 0, %v2803
    %v2805 = vrot.slane %v2709, %v2804
    %v2807 = vmul.f32 %v2800, %v2805
    %v2809 = vlaneseq
    %v2810 = vshrl.u32 %v2809, 7
    %v2811 = vsub.s32 0, %v2810
    %v2812 = vrot.slane %v2710, %v2811
    %v2814 = vadd.f32 %v2807, %v2812
    %vm2815 = vcmp.gt.f32.partialorder %v2814, 0.0
    %v2816 = vmul.f32 %v2814, 0.01
    %v2817 = vsel %vm2815, %v2814, %v2816
    %s2818 = scalar_lea.vmem [#allocation21], 256
    %v2819 = vld [vmem:[%s2818] sm:$0xff]
    %v2820 = vld [vmem:[%s2818 + $0x8] sm:$0xff]
    %v2821 = vld [vmem:[%s2818 + $0x10] sm:$0xff]
    %v2822 = vld [vmem:[%s2818 + $0x18] sm:$0xff]
    %v2823 = vld [vmem:[%s2818 + $0x20] sm:$0xff]
    %v2824 = vld [vmem:[%s2818 + $0x28] sm:$0xff]
    %v2825 = vld [vmem:[%s2818 + $0x30] sm:$0xff]
    %v2826 = vld [vmem:[%s2818 + $0x38] sm:$0xff]
    %v2827 = vld [vmem:[%s2818 + $0x40] sm:$0xff]
    %v2828 = vld [vmem:[%s2818 + $0x48] sm:$0xff]
    %v2829 = vld [vmem:[%s2818 + $0x50] sm:$0xff]
    %v2830 = vld [vmem:[%s2818 + $0x58] sm:$0xff]
    %v2831 = vld [vmem:[%s2818 + $0x60] sm:$0xff]
    %v2832 = vld [vmem:[%s2818 + $0x68] sm:$0xff]
    %v2833 = vld [vmem:[%s2818 + $0x70] sm:$0xff]
    %v2834 = vld [vmem:[%s2818 + $0x78] sm:$0xff]
    %v2835 = vld [vmem:[%s2818 + $0x80] sm:$0xff]
    %v2836 = vld [vmem:[%s2818 + $0x88] sm:$0xff]
    %v2837 = vld [vmem:[%s2818 + $0x90] sm:$0xff]
    %v2838 = vld [vmem:[%s2818 + $0x98] sm:$0xff]
    %v2839 = vld [vmem:[%s2818 + $0xa0] sm:$0xff]
    %v2840 = vld [vmem:[%s2818 + $0xa8] sm:$0xff]
    %v2841 = vld [vmem:[%s2818 + $0xb0] sm:$0xff]
    %v2842 = vld [vmem:[%s2818 + $0xb8] sm:$0xff]
    %v2843 = vld [vmem:[%s2818 + $0xc0] sm:$0xff]
    %v2844 = vld [vmem:[%s2818 + $0xc8] sm:$0xff]
    %v2845 = vld [vmem:[%s2818 + $0xd0] sm:$0xff]
    %v2846 = vld [vmem:[%s2818 + $0xd8] sm:$0xff]
    %v2847 = vld [vmem:[%s2818 + $0xe0] sm:$0xff]
    %v2848 = vld [vmem:[%s2818 + $0xe8] sm:$0xff]
    %v2849 = vld [vmem:[%s2818 + $0xf0] sm:$0xff]
    %v2850 = vld [vmem:[%s2818 + $0xf8] sm:$0xff]
    %s2851 = scalar_lea.vmem [#allocation22], 1
    %v2852 = vld [vmem:[%s2851] sm:$0x1]
    %s2853 = scalar_lea.vmem [#allocation24], 1
    %v2854 = vld [vmem:[%s2853] sm:$0x1]
    %s2855 = scalar_lea.vmem [#allocation25], 1
    %v2856 = vld [vmem:[%s2855] sm:$0x1]
    %v2858 = vlaneseq
    %v2859 = vshrl.u32 %v2858, 7
    %v2860 = vsub.s32 0, %v2859
    %v2861 = vrot.slane %v2852, %v2860
    %2863 = vmatprep.subr.mxu0 0.0
    %2864 = vmatpush1.msra.mxu0 %v2819
    %2865 = vmatprep.subr.mxu0 0.0
    %2866 = vmatpush1.msra.mxu0 %v2820
    %2867 = vmatprep.subr.mxu0 0.0
    %2868 = vmatpush1.msra.mxu0 %v2821
    %2869 = vmatprep.subr.mxu0 0.0
    %2870 = vmatpush1.msra.mxu0 %v2822
    %2871 = vmatprep.subr.mxu0 0.0
    %2872 = vmatpush1.msra.mxu0 %v2823
    %2873 = vmatprep.subr.mxu0 0.0
    %2874 = vmatpush1.msra.mxu0 %v2824
    %2875 = vmatprep.subr.mxu0 0.0
    %2876 = vmatpush1.msra.mxu0 %v2825
    %2877 = vmatprep.subr.mxu0 0.0
    %2878 = vmatpush1.msra.mxu0 %v2826
    %2879 = vmatprep.subr.mxu0 0.0
    %2880 = vmatpush1.msra.mxu0 %v2827
    %2881 = vmatprep.subr.mxu0 0.0
    %2882 = vmatpush1.msra.mxu0 %v2828
    %2883 = vmatprep.subr.mxu0 0.0
    %2884 = vmatpush1.msra.mxu0 %v2829
    %2885 = vmatprep.subr.mxu0 0.0
    %2886 = vmatpush1.msra.mxu0 %v2830
    %2887 = vmatprep.subr.mxu0 0.0
    %2888 = vmatpush1.msra.mxu0 %v2831
    %2889 = vmatprep.subr.mxu0 0.0
    %2890 = vmatpush1.msra.mxu0 %v2832
    %2891 = vmatprep.subr.mxu0 0.0
    %2892 = vmatpush1.msra.mxu0 %v2833
    %2893 = vmatprep.subr.mxu0 0.0
    %2894 = vmatpush1.msra.mxu0 %v2834
    %2895 = vmatprep.subr.mxu0 0.0
    %2896 = vmatpush1.msra.mxu0 %v2835
    %2897 = vmatprep.subr.mxu0 0.0
    %2898 = vmatpush1.msra.mxu0 %v2836
    %2899 = vmatprep.subr.mxu0 0.0
    %2900 = vmatpush1.msra.mxu0 %v2837
    %2901 = vmatprep.subr.mxu0 0.0
    %2902 = vmatpush1.msra.mxu0 %v2838
    %2903 = vmatprep.subr.mxu0 0.0
    %2904 = vmatpush1.msra.mxu0 %v2839
    %2905 = vmatprep.subr.mxu0 0.0
    %2906 = vmatpush1.msra.mxu0 %v2840
    %2907 = vmatprep.subr.mxu0 0.0
    %2908 = vmatpush1.msra.mxu0 %v2841
    %2909 = vmatprep.subr.mxu0 0.0
    %2910 = vmatpush1.msra.mxu0 %v2842
    %2911 = vmatprep.subr.mxu0 0.0
    %2912 = vmatpush1.msra.mxu0 %v2843
    %2913 = vmatprep.subr.mxu0 0.0
    %2914 = vmatpush1.msra.mxu0 %v2844
    %2915 = vmatprep.subr.mxu0 0.0
    %2916 = vmatpush1.msra.mxu0 %v2845
    %2917 = vmatprep.subr.mxu0 0.0
    %2918 = vmatpush1.msra.mxu0 %v2846
    %2919 = vmatprep.subr.mxu0 0.0
    %2920 = vmatpush1.msra.mxu0 %v2847
    %2921 = vmatprep.subr.mxu0 0.0
    %2922 = vmatpush1.msra.mxu0 %v2848
    %2923 = vmatprep.subr.mxu0 0.0
    %2924 = vmatpush1.msra.mxu0 %v2849
    %2925 = vmatprep.subr.mxu0 0.0
    %2926 = vmatpush1.msra.mxu0 %v2850
    %2927 = vmatprep.mubr.f32.mxu0 %v2675
    %2928 = vmatmul.mubr.f32.gmra.mrb[0].mxu0 %v2674
    %v2929 = vpop.f32.mrb[0].mxu0
    %v2930 = vadd.f32 %v2861, %v2929
    %v2931 = vpop.f32.mrb[0].mxu0
    %2932 = vdwg.mxu0
    %2933 = vadd.xlane.f32.xlu0 %v2930
    %v2934 = vpop.xlane.xlu0 %2933
    %v2935 = vmul.f32 %v2934, %v2789
    %v2936 = vmul.f32 %v2930, %v2930
    %2937 = vadd.xlane.f32.xlu0 %v2936
    %v2938 = vpop.xlane.xlu0 %2937
    %v2939 = vmul.f32 %v2938, %v2789
    %v2940 = vmul.f32 %v2935, %v2935
    %v2941 = vsub.f32 %v2939, %v2940
    %v2942 = vsub.f32 %v2930, %v2935
    %v2943 = vadd.f32 %v2941, 1e-05
    %v2944 = vrsqrt.pop %v2943
    %v2945 = vmul.f32 %v2942, %v2944
    %v2947 = vlaneseq
    %v2948 = vshrl.u32 %v2947, 7
    %v2949 = vsub.s32 0, %v2948
    %v2950 = vrot.slane %v2854, %v2949
    %v2952 = vmul.f32 %v2945, %v2950
    %v2954 = vlaneseq
    %v2955 = vshrl.u32 %v2954, 7
    %v2956 = vsub.s32 0, %v2955
    %v2957 = vrot.slane %v2856, %v2956
    %v2959 = vadd.f32 %v2952, %v2957
    %vm2960 = vcmp.gt.f32.partialorder %v2959, 0.0
    %v2961 = vmul.f32 %v2959, 0.01
    %v2962 = vsel %vm2960, %v2959, %v2961
    %v2963 = vld [vmem:[%s17] sm:$0xff]
    %v2964 = vld [vmem:[%s17 + $0x8] sm:$0xff]
    %v2965 = vld [vmem:[%s17 + $0x10] sm:$0xff]
    %v2966 = vld [vmem:[%s17 + $0x18] sm:$0xff]
    %v2967 = vld [vmem:[%s17 + $0x20] sm:$0xff]
    %v2968 = vld [vmem:[%s17 + $0x28] sm:$0xff]
    %v2969 = vld [vmem:[%s17 + $0x30] sm:$0xff]
    %v2970 = vld [vmem:[%s17 + $0x38] sm:$0xff]
    %v2971 = vld [vmem:[%s17 + $0x40] sm:$0xff]
    %v2972 = vld [vmem:[%s17 + $0x48] sm:$0xff]
    %v2973 = vld [vmem:[%s17 + $0x50] sm:$0xff]
    %v2974 = vld [vmem:[%s17 + $0x58] sm:$0xff]
    %v2975 = vld [vmem:[%s17 + $0x60] sm:$0xff]
    %v2976 = vld [vmem:[%s17 + $0x68] sm:$0xff]
    %v2977 = vld [vmem:[%s17 + $0x70] sm:$0xff]
    %v2978 = vld [vmem:[%s17 + $0x78] sm:$0xff]
    %s2979 = scalar_lea.vmem %s17, 128
    %v2980 = vld [vmem:[%s2979] sm:$0xff]
    %v2981 = vld [vmem:[%s2979 + $0x8] sm:$0xff]
    %v2982 = vld [vmem:[%s2979 + $0x10] sm:$0xff]
    %v2983 = vld [vmem:[%s2979 + $0x18] sm:$0xff]
    %v2984 = vld [vmem:[%s2979 + $0x20] sm:$0xff]
    %v2985 = vld [vmem:[%s2979 + $0x28] sm:$0xff]
    %v2986 = vld [vmem:[%s2979 + $0x30] sm:$0xff]
    %v2987 = vld [vmem:[%s2979 + $0x38] sm:$0xff]
    %v2988 = vld [vmem:[%s2979 + $0x40] sm:$0xff]
    %v2989 = vld [vmem:[%s2979 + $0x48] sm:$0xff]
    %v2990 = vld [vmem:[%s2979 + $0x50] sm:$0xff]
    %v2991 = vld [vmem:[%s2979 + $0x58] sm:$0xff]
    %v2992 = vld [vmem:[%s2979 + $0x60] sm:$0xff]
    %v2993 = vld [vmem:[%s2979 + $0x68] sm:$0xff]
    %v2994 = vld [vmem:[%s2979 + $0x70] sm:$0xff]
    %v2995 = vld [vmem:[%s2979 + $0x78] sm:$0xff]
    %2996 = vmatprep.subr.mxu0 0.0
    %2997 = vmatpush1.msra.mxu0 %v2980
    %2998 = vmatprep.subr.mxu0 0.0
    %2999 = vmatpush1.msra.mxu0 %v2981
    %3000 = vmatprep.subr.mxu0 0.0
    %3001 = vmatpush1.msra.mxu0 %v2982
    %3002 = vmatprep.subr.mxu0 0.0
    %3003 = vmatpush1.msra.mxu0 %v2983
    %3004 = vmatprep.subr.mxu0 0.0
    %3005 = vmatpush1.msra.mxu0 %v2984
    %3006 = vmatprep.subr.mxu0 0.0
    %3007 = vmatpush1.msra.mxu0 %v2985
    %3008 = vmatprep.subr.mxu0 0.0
    %3009 = vmatpush1.msra.mxu0 %v2986
    %3010 = vmatprep.subr.mxu0 0.0
    %3011 = vmatpush1.msra.mxu0 %v2987
    %3012 = vmatprep.subr.mxu0 0.0
    %3013 = vmatpush1.msra.mxu0 %v2988
    %3014 = vmatprep.subr.mxu0 0.0
    %3015 = vmatpush1.msra.mxu0 %v2989
    %3016 = vmatprep.subr.mxu0 0.0
    %3017 = vmatpush1.msra.mxu0 %v2990
    %3018 = vmatprep.subr.mxu0 0.0
    %3019 = vmatpush1.msra.mxu0 %v2991
    %3020 = vmatprep.subr.mxu0 0.0
    %3021 = vmatpush1.msra.mxu0 %v2992
    %3022 = vmatprep.subr.mxu0 0.0
    %3023 = vmatpush1.msra.mxu0 %v2993
    %3024 = vmatprep.subr.mxu0 0.0
    %3025 = vmatpush1.msra.mxu0 %v2994
    %3026 = vmatprep.subr.mxu0 0.0
    %3027 = vmatpush1.msra.mxu0 %v2995
    %3028 = vmatprep.subr.mxu0 0.0
    %3029 = vmatpush1.msra.mxu0 0.0
    %3030 = vmatprep.subr.mxu0 0.0
    %3031 = vmatpush1.msra.mxu0 0.0
    %3032 = vmatprep.subr.mxu0 0.0
    %3033 = vmatpush1.msra.mxu0 0.0
    %3034 = vmatprep.subr.mxu0 0.0
    %3035 = vmatpush1.msra.mxu0 0.0
    %3036 = vmatprep.subr.mxu0 0.0
    %3037 = vmatpush1.msra.mxu0 0.0
    %3038 = vmatprep.subr.mxu0 0.0
    %3039 = vmatpush1.msra.mxu0 0.0
    %3040 = vmatprep.subr.mxu0 0.0
    %3041 = vmatpush1.msra.mxu0 0.0
    %3042 = vmatprep.subr.mxu0 0.0
    %3043 = vmatpush1.msra.mxu0 0.0
    %3044 = vmatprep.subr.mxu0 0.0
    %3045 = vmatpush1.msra.mxu0 0.0
    %3046 = vmatprep.subr.mxu0 0.0
    %3047 = vmatpush1.msra.mxu0 0.0
    %3048 = vmatprep.subr.mxu0 0.0
    %3049 = vmatpush1.msra.mxu0 0.0
    %3050 = vmatprep.subr.mxu0 0.0
    %3051 = vmatpush1.msra.mxu0 0.0
    %3052 = vmatprep.subr.mxu0 0.0
    %3053 = vmatpush1.msra.mxu0 0.0
    %3054 = vmatprep.subr.mxu0 0.0
    %3055 = vmatpush1.msra.mxu0 0.0
    %3056 = vmatprep.subr.mxu0 0.0
    %3057 = vmatpush1.msra.mxu0 0.0
    %3058 = vmatprep.subr.mxu0 0.0
    %3059 = vmatpush1.msra.mxu0 0.0
    %3060 = vmatprep.mubr.f32.mxu0 0.0
    %3061 = vmatmul.mubr.f32.gmra.mrb[0].mxu0 %v2962
    %v3062 = vpop.f32.mrb[0].mxu0
    %v3063 = vadd.f32 0.0, %v3062
    %v3064 = vpop.f32.mrb[0].mxu0
    %3065 = vdwg.mxu0
    %3066 = vmatprep.subr.mxu0 0.0
    %3067 = vmatpush1.msra.mxu0 %v2963
    %3068 = vmatprep.subr.mxu0 0.0
    %3069 = vmatpush1.msra.mxu0 %v2964
    %3070 = vmatprep.subr.mxu0 0.0
    %3071 = vmatpush1.msra.mxu0 %v2965
    %3072 = vmatprep.subr.mxu0 0.0
    %3073 = vmatpush1.msra.mxu0 %v2966
    %3074 = vmatprep.subr.mxu0 0.0
    %3075 = vmatpush1.msra.mxu0 %v2967
    %3076 = vmatprep.subr.mxu0 0.0
    %3077 = vmatpush1.msra.mxu0 %v2968
    %3078 = vmatprep.subr.mxu0 0.0
    %3079 = vmatpush1.msra.mxu0 %v2969
    %3080 = vmatprep.subr.mxu0 0.0
    %3081 = vmatpush1.msra.mxu0 %v2970
    %3082 = vmatprep.subr.mxu0 0.0
    %3083 = vmatpush1.msra.mxu0 %v2971
    %3084 = vmatprep.subr.mxu0 0.0
    %3085 = vmatpush1.msra.mxu0 %v2972
    %3086 = vmatprep.subr.mxu0 0.0
    %3087 = vmatpush1.msra.mxu0 %v2973
    %3088 = vmatprep.subr.mxu0 0.0
    %3089 = vmatpush1.msra.mxu0 %v2974
    %3090 = vmatprep.subr.mxu0 0.0
    %3091 = vmatpush1.msra.mxu0 %v2975
    %3092 = vmatprep.subr.mxu0 0.0
    %3093 = vmatpush1.msra.mxu0 %v2976
    %3094 = vmatprep.subr.mxu0 0.0
    %3095 = vmatpush1.msra.mxu0 %v2977
    %3096 = vmatprep.subr.mxu0 0.0
    %3097 = vmatpush1.msra.mxu0 %v2978
    %3098 = vmatprep.subr.mxu0 0.0
    %3099 = vmatpush1.msra.mxu0 0.0
    %3100 = vmatprep.subr.mxu0 0.0
    %3101 = vmatpush1.msra.mxu0 0.0
    %3102 = vmatprep.subr.mxu0 0.0
    %3103 = vmatpush1.msra.mxu0 0.0
    %3104 = vmatprep.subr.mxu0 0.0
    %3105 = vmatpush1.msra.mxu0 0.0
    %3106 = vmatprep.subr.mxu0 0.0
    %3107 = vmatpush1.msra.mxu0 0.0
    %3108 = vmatprep.subr.mxu0 0.0
    %3109 = vmatpush1.msra.mxu0 0.0
    %3110 = vmatprep.subr.mxu0 0.0
    %3111 = vmatpush1.msra.mxu0 0.0
    %3112 = vmatprep.subr.mxu0 0.0
    %3113 = vmatpush1.msra.mxu0 0.0
    %3114 = vmatprep.subr.mxu0 0.0
    %3115 = vmatpush1.msra.mxu0 0.0
    %3116 = vmatprep.subr.mxu0 0.0
    %3117 = vmatpush1.msra.mxu0 0.0
    %3118 = vmatprep.subr.mxu0 0.0
    %3119 = vmatpush1.msra.mxu0 0.0
    %3120 = vmatprep.subr.mxu0 0.0
    %3121 = vmatpush1.msra.mxu0 0.0
    %3122 = vmatprep.subr.mxu0 0.0
    %3123 = vmatpush1.msra.mxu0 0.0
    %3124 = vmatprep.subr.mxu0 0.0
    %3125 = vmatpush1.msra.mxu0 0.0
    %3126 = vmatprep.subr.mxu0 0.0
    %3127 = vmatpush1.msra.mxu0 0.0
    %3128 = vmatprep.subr.mxu0 0.0
    %3129 = vmatpush1.msra.mxu0 0.0
    %3130 = vmatprep.mubr.f32.mxu0 0.0
    %3131 = vmatmul.mubr.f32.gmra.mrb[0].mxu0 %v2817
    %v3132 = vpop.f32.mrb[0].mxu0
    %v3133 = vadd.f32 %v3063, %v3132
    %v3134 = vpop.f32.mrb[0].mxu0
    %3135 = vdwg.mxu0
    %v3136 = vld [vmem:[#allocation27] sm:$0x1]
    %v3138 = vlaneseq
    %v3139 = vshrl.u32 %v3138, 7
    %v3140 = vsub.s32 0, %v3139
    %v3141 = vrot.slane %v3136, %v3140
    %v3143 = vadd.f32 %v3133, %v3141
    %vm3144 = vcmask 15360
    %3145 = vst.msk [vmem:[%s19] sm:$0xff] %vm3144, %v3143
    // Predicated region
    $region146: #{critic_forward.1} parent=1 // pred_check
      _
    $region147: #{critic_forward.1} parent=1 // pred_check_branch
      %3147 = sbr.rel (0) target = $region149
    $region148: #{critic_forward.1} parent=1 // pred_region
      _
    $region149: #{critic_forward.1} parent=1 // pred_fallthru
      _
    // Predicated region
    $region150: #{critic_forward.1} parent=1 // pred_check
      _
    $region151: #{critic_forward.1} parent=1 // pred_check_branch
      %3149 = sbr.rel (0) target = $region153
    $region152: #{critic_forward.1} parent=1 // pred_region
      _
    $region153: #{critic_forward.1} parent=1 // pred_fallthru
      _
    %3150 = vsyncpa [#allocation3], 1
    %3151 = vsyncpa [#allocation5], 1
    %3152 = vsyncpa [#allocation8], 1
    %3153 = vsyncpa [#allocation11], 1
    %3154 = vsyncpa [#allocation14], 1
    %3155 = vsyncpa [#allocation17], 1
    %3156 = vsyncpa [#allocation20], 1
    %3157 = vsyncpa [#allocation23], 1
    %3158 = vsyncpa [#allocation26], 1

</llo_original>
